<compile_context>
chip_gen: v6e
topology: v6e:2x2x1
jax: 0.10.0
libtpu: 0.0.40
codegen_flags: <defaults>
</compile_context>

<pallas_src>
import functools

import jax
import jax.numpy as jnp
import numpy as np
from jax.experimental import pallas as pl
from jax.experimental.pallas import tpu as pltpu


def _kernel_folded(xp_ref, g_ref, b_ref, o_ref, *, th, wp, c, ncols):
    """Parity classes folded into the GEMM N axis (small Cout).

    xp_ref: (1, Hp+2, Wp+2, C)  zero-padded source image, bf16 (full image per batch)
    g_ref : (9, C, 4*Cout)      per-window folded weights, bf16; idx = a*3 + b
    b_ref : (1, 4*Cout)         bias tiled over parity classes, f32
    o_ref : (1, TH*Wp, 4*Cout)  bf16 output block, channel axis = [parity(4) x Cout]
    """
    j = pl.program_id(1)
    n0 = j * th
    if th % 8 == 0:
        n0 = pl.multiple_of(n0, 8)

    acc = jnp.zeros((th * wp, ncols), jnp.float32)
    for a in range(3):
        band = xp_ref[0, pl.ds(n0 + a, th), :, :]              # (TH, Wp+2, C) bf16
        for b in range(3):
            # column shift is a small static sublane offset; Wp % 16 == 0 keeps the
            # (TH, Wp, C) -> (TH*Wp, C) collapse tile-preserving for bf16
            lhs = band[:, b:b + wp, :].reshape(th * wp, c)
            acc = acc + jnp.dot(lhs, g_ref[a * 3 + b],
                                preferred_element_type=jnp.float32)
    o_ref[0] = (acc + b_ref[...]).astype(o_ref.dtype)          # one lane-dense store


def _kernel_split(xp_ref, g_ref, b_ref, o_ref, *, th, wp, c, cout):
    """One GEMM accumulation chain per parity class (large Cout).

    g_ref : (16, C, Cout)        folded 2x2 weights; idx = pr*8 + pc*4 + dh*2 + dw
    o_ref : (1, 4, TH*Wp, Cout)  bf16; parity class = pr*2 + pc
    """
    j = pl.program_id(1)
    n0 = j * th
    if th % 8 == 0:
        n0 = pl.multiple_of(n0, 8)

    # Hoist only the 3 row bands; build column-shifted GEMM slabs just-in-time so the
    # live window set stays small.
    bands = [xp_ref[0, pl.ds(n0 + a, th), :, :] for a in range(3)]   # (TH, Wp+2, C)
    bias = b_ref[...]                                                # (1, Cout) f32
    for pr in range(2):
        for pc in range(2):
            acc = jnp.zeros((th * wp, cout), jnp.float32)
            for dh in range(2):
                for dw in range(2):
                    lhs = bands[pr + dh][:, pc + dw:pc + dw + wp, :].reshape(th * wp, c)
                    acc = acc + jnp.dot(lhs, g_ref[pr * 8 + pc * 4 + dh * 2 + dw],
                                        preferred_element_type=jnp.float32)
            o_ref[0, pr * 2 + pc] = (acc + bias).astype(o_ref.dtype)


def _fold_weights(weight_oihw):
    """(Cout, C, 3, 3) -> g[pr, pc, dh, dw, C, Cout] (f32)."""
    w = jnp.transpose(weight_oihw, (2, 3, 1, 0)).astype(jnp.float32)   # (kh, kw, C, Co)

    def _fold(wk):   # collapse a length-3 kernel axis onto (parity, 2-tap)
        return jnp.stack([jnp.stack([wk[0], wk[1] + wk[2]], 0),
                          jnp.stack([wk[0] + wk[1], wk[2]], 0)], 0)

    g = _fold(w)                                 # (pr, dh, kw, C, Co)
    g = _fold(jnp.moveaxis(g, 2, 0))             # (pc, dw, pr, dh, C, Co)
    return jnp.transpose(g, (2, 0, 3, 1, 4, 5))  # (pr, pc, dh, dw, C, Co)


def upsample_forward(x_nchw, weight_oihw, bias, out_dtype=None):
    """y = Conv2d(C, C, 3, padding=1)(nearest_upsample_2x(x)); NCHW in/out."""
    B, C, H, W = x_nchw.shape
    Cout = weight_oihw.shape[0]
    out_dtype = x_nchw.dtype if out_dtype is None else out_dtype

    fold = Cout <= 64              # parity classes fit into otherwise-idle MXU N lanes
    Wp = ((W + 15) // 16) * 16     # keeps the (TH, Wp, C)->(TH*Wp, C) collapse aligned

    # ---- device-derived VMEM budget -------------------------------------------------
    try:
        vmem_cap = int(pltpu.get_tpu_info().vmem_capacity_bytes)
    except Exception:
        vmem_cap = 64 * 1024 * 1024            # conservative: v7x per-TensorCore VMEM
    vmem_target = (vmem_cap * 85) // 100       # never request more than ~0.85x physical

    n_wts = (9 * C * 4 * Cout) if fold else (16 * C * Cout)

    def _blk_bytes(th):     # live per-row-block working set (bf16 slabs, f32 acc)
        lhs = (2 if fold else 4) * th * (Wp + 2) * C * 2
        acc = th * Wp * (4 * Cout if fold else Cout) * 4
        out = 2 * 4 * th * Wp * Cout * 2       # double-buffered bf16 output block
        return int(1.25 * (lhs + acc + out))

    def _fixed_bytes(hp):   # double-buffered full padded image + weights + bias
        return 2 * (hp + 2) * (Wp + 2) * C * 2 + 2 * n_wts * 2 + 4096

    # ---- pick row-block size (multiple of 8, decoupled from divisors of H) ----------
    if H <= 8:
        th = H
    else:
        th = 8
        t = ((H + 7) // 8) * 8
        while t >= 8:
            hp = pl.cdiv(H, t) * t
            if _fixed_bytes(hp) + _blk_bytes(t) <= vmem_target:
                th = t
                break
            t -= 8
    n_rb = pl.cdiv(H, th)
    if B * n_rb < 2 and th > 8:                # give v7x's two TensorCores work at B=1
        th = ((pl.cdiv(H, 2) + 7) // 8) * 8
        n_rb = pl.cdiv(H, th)
    Hp = n_rb * th

    vmem_limit = int(min(vmem_target,
                         max(32 * 1024 * 1024,
                             _fixed_bytes(Hp) + 2 * _blk_bytes(th))))

    # ---- fold weights / bias (f32 math, bf16 store) ----------------------------------
    g = _fold_weights(weight_oihw)             # (pr, pc, dh, dw, C, Cout)
    if fold:
        zero = jnp.zeros((C, Cout), jnp.float32)
        mats = []
        for a in range(3):
            for b in range(3):
                cols = []
                for pr in range(2):
                    for pc in range(2):
                        dh, dw = a - pr, b - pc
                        cols.append(g[pr, pc, dh, dw]
                                    if (0 <= dh <= 1 and 0 <= dw <= 1) else zero)
                mats.append(jnp.concatenate(cols, axis=-1))          # (C, 4*Cout)
        w_kern = jnp.stack(mats, 0).astype(jnp.bfloat16)             # (9, C, 4*Cout)
        b_kern = jnp.tile(bias.astype(jnp.float32).reshape(1, Cout), (1, 4))
        out_shape = jax.ShapeDtypeStruct((B, Hp * Wp, 4 * Cout), jnp.bfloat16)
        out_spec = pl.BlockSpec((1, th * Wp, 4 * Cout), lambda bb, j: (bb, j, 0))
        w_spec = pl.BlockSpec((9, C, 4 * Cout), lambda bb, j: (0, 0, 0))
        b_spec = pl.BlockSpec((1, 4 * Cout), lambda bb, j: (0, 0))
        kernel = functools.partial(_kernel_folded, th=th, wp=Wp, c=C, ncols=4 * Cout)
        flops = 2 * B * 9 * Hp * Wp * C * 4 * Cout
    else:
        w_kern = g.reshape(16, C, Cout).astype(jnp.bfloat16)
        b_kern = bias.astype(jnp.float32).reshape(1, Cout)
        out_shape = jax.ShapeDtypeStruct((B, 4, Hp * Wp, Cout), jnp.bfloat16)
        out_spec = pl.BlockSpec((1, 4, th * Wp, Cout), lambda bb, j: (bb, 0, j, 0))
        w_spec = pl.BlockSpec((16, C, Cout), lambda bb, j: (0, 0, 0))
        b_spec = pl.BlockSpec((1, Cout), lambda bb, j: (0, 0))
        kernel = functools.partial(_kernel_split, th=th, wp=Wp, c=C, cout=Cout)
        flops = 2 * B * 16 * Hp * Wp * C * Cout

    # ---- input: NCHW f32 -> zero-padded NHWC bf16 ------------------------------------
    xp = jnp.transpose(x_nchw, (0, 2, 3, 1)).astype(jnp.bfloat16)
    xp = jnp.pad(xp, ((0, 0), (1, 1 + Hp - H), (1, 1 + Wp - W), (0, 0)))

    cost = pl.CostEstimate(
        flops=int(flops), transcendentals=0,
        bytes_accessed=int(xp.size * 2 + w_kern.size * 2 + b_kern.size * 4
                           + B * 4 * Hp * Wp * Cout * 2))

    out = pl.pallas_call(
        kernel,
        out_shape=out_shape,
        grid_spec=pltpu.PrefetchScalarGridSpec(
            num_scalar_prefetch=0,
            grid=(B, n_rb),
            in_specs=[
                # Full padded image per batch; index is constant in j, so the pipeline
                # DMAs it once per batch and reuses it across row blocks.
                pl.BlockSpec((1, Hp + 2, Wp + 2, C), lambda bb, j: (bb, 0, 0, 0)),
                w_spec,
                b_spec,
            ],
            out_specs=out_spec,
        ),
        compiler_params=pltpu.CompilerParams(
            # Row blocks write disjoint output slabs -> both axes truly parallel
            # (lets v7x's two TensorCores split the grid).
            dimension_semantics=("parallel", "parallel"),
            vmem_limit_bytes=vmem_limit),
        cost_estimate=cost,
    )(xp, w_kern, b_kern)

    # ---- epilogue: interleave parity classes back to NCHW (single XLA transpose) -----
    if fold:
        y = out.reshape(B, Hp, Wp, 2, 2, Cout)           # (b, n, m, pr, pc, o)
        y = jnp.transpose(y, (0, 5, 1, 3, 2, 4))         # (b, o, n, pr, m, pc)
    else:
        y = out.reshape(B, 2, 2, Hp, Wp, Cout)           # (b, pr, pc, n, m, o)
        y = jnp.transpose(y, (0, 5, 3, 1, 4, 2))         # (b, o, n, pr, m, pc)
    y = y.reshape(B, Cout, 2 * Hp, 2 * Wp)[:, :, :2 * H, :2 * W]   # crop row/col pad
    return y.astype(out_dtype)


def _run_case(key, B, C, H, W):
    kx, kw, kb = jax.random.split(key, 3)
    x = jax.random.normal(kx, (B, C, H, W), dtype=jnp.float32)

    # deterministic parameter init (matches nn.Conv2d default init scheme)
    fan_in = C * 3 * 3
    bound = 1.0 / float(np.sqrt(fan_in))
    weight = jax.random.uniform(kw, (C, C, 3, 3), jnp.float32, -bound, bound)
    bias = jax.random.uniform(kb, (C,), jnp.float32, -bound, bound)

    y = jax.block_until_ready(jax.jit(upsample_forward)(x, weight, bias))
    assert y.shape == (B, C, 2 * H, 2 * W)

    # Reference: identical semantics via XLA conv, with the same bf16 rounding of the
    # streamed operands the kernel uses (accumulation in f32).
    xb = x.astype(jnp.bfloat16).astype(jnp.float32)
    wb = weight.astype(jnp.bfloat16).astype(jnp.float32)
    x_up = jnp.repeat(jnp.repeat(xb, 2, axis=2), 2, axis=3)
    ref = jax.lax.conv_general_dilated(
        x_up, wb, window_strides=(1, 1), padding=((1, 1), (1, 1)),
        dimension_numbers=("NCHW", "OIHW", "NCHW"),
    ) + bias[None, :, None, None]
    np.testing.assert_allclose(np.asarray(y, dtype=np.float32), np.asarray(ref),
                               atol=2e-2, rtol=2e-2)


if __name__ == "__main__":
    key = jax.random.PRNGKey(0)
    k1, k2 = jax.random.split(key)
    _run_case(k1, B=2, C=4, H=16, W=16)    # small-Cout path: parity folded into GEMM N
    _run_case(k2, B=1, C=128, H=8, W=8)    # large-Cout path: 16-GEMM / 4-store variant
    print("KERNEL_OK")
</pallas_src>

<mosaic_0001>
module attributes {stable_mosaic.version = 11 : i64} {
  func.func @_kernel_folded(%arg0: i32, %arg1: i32, %arg2: memref<1x18x18x4xbf16, #tpu.memory_space<vmem>>, %arg3: memref<9x4x16xbf16, #tpu.memory_space<vmem>>, %arg4: memref<1x16xf32, #tpu.memory_space<vmem>>, %arg5: memref<1x256x16xbf16, #tpu.memory_space<vmem>>) attributes {dimension_semantics = [#tpu.dimension_semantics<parallel>, #tpu.dimension_semantics<parallel>], iteration_bounds = array<i64: 2, 1>, scalar_prefetch = 0 : i64, scratch_operands = 0 : i64, tpu.core_type = #tpu.core_type<tc>, window_params = [{transform_indices = @transform_0, window_bounds = array<i64: 1, 18, 18, 4>}, {pipeline_mode = #tpu.pipeline_mode<synchronous>, transform_indices = @transform_1, window_bounds = array<i64: 9, 4, 16>}, {pipeline_mode = #tpu.pipeline_mode<synchronous>, transform_indices = @transform_2, window_bounds = array<i64: 1, 16>}, {transform_indices = @transform_3, window_bounds = array<i64: 1, 256, 16>}]} {
    %c16_i32 = arith.constant 16 : i32
    %0 = arith.muli %arg1, %c16_i32 : i32
    %1 = tpu.assume_multiple %0, 8 : i32
    %cst = arith.constant 0.000000e+00 : f32
    %2 = vector.broadcast %cst : f32 to vector<256x16xf32>
    %c0_i32 = arith.constant 0 : i32
    %3 = arith.addi %1, %c0_i32 : i32
    %c0 = arith.constant 0 : index
    %4 = arith.index_cast %3 : i32 to index
    %c0_0 = arith.constant 0 : index
    %c0_1 = arith.constant 0 : index
    %5 = vector.load %arg2[%c0, %4, %c0_0, %c0_1] : memref<1x18x18x4xbf16, #tpu.memory_space<vmem>>, vector<1x16x18x4xbf16>
    %6 = vector.shape_cast %5 : vector<1x16x18x4xbf16> to vector<16x18x4xbf16>
    %7 = vector.extract_strided_slice %6 {offsets = [0, 0, 0], sizes = [16, 16, 4], strides = [1, 1, 1]} : vector<16x18x4xbf16> to vector<16x16x4xbf16>
    %8 = vector.shape_cast %7 : vector<16x16x4xbf16> to vector<256x4xbf16>
    %c0_2 = arith.constant 0 : index
    %c0_3 = arith.constant 0 : index
    %c0_4 = arith.constant 0 : index
    %9 = vector.load %arg3[%c0_2, %c0_3, %c0_4] : memref<9x4x16xbf16, #tpu.memory_space<vmem>>, vector<1x4x16xbf16>
    %10 = vector.shape_cast %9 : vector<1x4x16xbf16> to vector<4x16xbf16>
    %cst_5 = arith.constant dense<0.000000e+00> : vector<256x16xf32>
    %11 = tpu.matmul %8, %10, %cst_5 {dimension_numbers = #tpu.dot_dimension_numbers<[1], [0], [0], [1], [0, 0, 1, 1], [], []>} : vector<256x4xbf16>, vector<4x16xbf16>, vector<256x16xf32> -> vector<256x16xf32>
    %12 = arith.addf %2, %11 : vector<256x16xf32>
    %13 = vector.extract_strided_slice %6 {offsets = [0, 1, 0], sizes = [16, 16, 4], strides = [1, 1, 1]} : vector<16x18x4xbf16> to vector<16x16x4xbf16>
    %14 = vector.shape_cast %13 : vector<16x16x4xbf16> to vector<256x4xbf16>
    %c1 = arith.constant 1 : index
    %c0_6 = arith.constant 0 : index
    %c0_7 = arith.constant 0 : index
    %15 = vector.load %arg3[%c1, %c0_6, %c0_7] : memref<9x4x16xbf16, #tpu.memory_space<vmem>>, vector<1x4x16xbf16>
    %16 = vector.shape_cast %15 : vector<1x4x16xbf16> to vector<4x16xbf16>
    %cst_8 = arith.constant dense<0.000000e+00> : vector<256x16xf32>
    %17 = tpu.matmul %14, %16, %cst_8 {dimension_numbers = #tpu.dot_dimension_numbers<[1], [0], [0], [1], [0, 0, 1, 1], [], []>} : vector<256x4xbf16>, vector<4x16xbf16>, vector<256x16xf32> -> vector<256x16xf32>
    %18 = arith.addf %12, %17 : vector<256x16xf32>
    %19 = vector.extract_strided_slice %6 {offsets = [0, 2, 0], sizes = [16, 16, 4], strides = [1, 1, 1]} : vector<16x18x4xbf16> to vector<16x16x4xbf16>
    %20 = vector.shape_cast %19 : vector<16x16x4xbf16> to vector<256x4xbf16>
    %c2 = arith.constant 2 : index
    %c0_9 = arith.constant 0 : index
    %c0_10 = arith.constant 0 : index
    %21 = vector.load %arg3[%c2, %c0_9, %c0_10] : memref<9x4x16xbf16, #tpu.memory_space<vmem>>, vector<1x4x16xbf16>
    %22 = vector.shape_cast %21 : vector<1x4x16xbf16> to vector<4x16xbf16>
    %cst_11 = arith.constant dense<0.000000e+00> : vector<256x16xf32>
    %23 = tpu.matmul %20, %22, %cst_11 {dimension_numbers = #tpu.dot_dimension_numbers<[1], [0], [0], [1], [0, 0, 1, 1], [], []>} : vector<256x4xbf16>, vector<4x16xbf16>, vector<256x16xf32> -> vector<256x16xf32>
    %24 = arith.addf %18, %23 : vector<256x16xf32>
    %c1_i32 = arith.constant 1 : i32
    %25 = arith.addi %1, %c1_i32 : i32
    %c0_12 = arith.constant 0 : index
    %26 = arith.index_cast %25 : i32 to index
    %c0_13 = arith.constant 0 : index
    %c0_14 = arith.constant 0 : index
    %27 = vector.load %arg2[%c0_12, %26, %c0_13, %c0_14] : memref<1x18x18x4xbf16, #tpu.memory_space<vmem>>, vector<1x16x18x4xbf16>
    %28 = vector.shape_cast %27 : vector<1x16x18x4xbf16> to vector<16x18x4xbf16>
    %29 = vector.extract_strided_slice %28 {offsets = [0, 0, 0], sizes = [16, 16, 4], strides = [1, 1, 1]} : vector<16x18x4xbf16> to vector<16x16x4xbf16>
    %30 = vector.shape_cast %29 : vector<16x16x4xbf16> to vector<256x4xbf16>
    %c3 = arith.constant 3 : index
    %c0_15 = arith.constant 0 : index
    %c0_16 = arith.constant 0 : index
    %31 = vector.load %arg3[%c3, %c0_15, %c0_16] : memref<9x4x16xbf16, #tpu.memory_space<vmem>>, vector<1x4x16xbf16>
    %32 = vector.shape_cast %31 : vector<1x4x16xbf16> to vector<4x16xbf16>
    %cst_17 = arith.constant dense<0.000000e+00> : vector<256x16xf32>
    %33 = tpu.matmul %30, %32, %cst_17 {dimension_numbers = #tpu.dot_dimension_numbers<[1], [0], [0], [1], [0, 0, 1, 1], [], []>} : vector<256x4xbf16>, vector<4x16xbf16>, vector<256x16xf32> -> vector<256x16xf32>
    %34 = arith.addf %24, %33 : vector<256x16xf32>
    %35 = vector.extract_strided_slice %28 {offsets = [0, 1, 0], sizes = [16, 16, 4], strides = [1, 1, 1]} : vector<16x18x4xbf16> to vector<16x16x4xbf16>
    %36 = vector.shape_cast %35 : vector<16x16x4xbf16> to vector<256x4xbf16>
    %c4 = arith.constant 4 : index
    %c0_18 = arith.constant 0 : index
    %c0_19 = arith.constant 0 : index
    %37 = vector.load %arg3[%c4, %c0_18, %c0_19] : memref<9x4x16xbf16, #tpu.memory_space<vmem>>, vector<1x4x16xbf16>
    %38 = vector.shape_cast %37 : vector<1x4x16xbf16> to vector<4x16xbf16>
    %cst_20 = arith.constant dense<0.000000e+00> : vector<256x16xf32>
    %39 = tpu.matmul %36, %38, %cst_20 {dimension_numbers = #tpu.dot_dimension_numbers<[1], [0], [0], [1], [0, 0, 1, 1], [], []>} : vector<256x4xbf16>, vector<4x16xbf16>, vector<256x16xf32> -> vector<256x16xf32>
    %40 = arith.addf %34, %39 : vector<256x16xf32>
    %41 = vector.extract_strided_slice %28 {offsets = [0, 2, 0], sizes = [16, 16, 4], strides = [1, 1, 1]} : vector<16x18x4xbf16> to vector<16x16x4xbf16>
    %42 = vector.shape_cast %41 : vector<16x16x4xbf16> to vector<256x4xbf16>
    %c5 = arith.constant 5 : index
    %c0_21 = arith.constant 0 : index
    %c0_22 = arith.constant 0 : index
    %43 = vector.load %arg3[%c5, %c0_21, %c0_22] : memref<9x4x16xbf16, #tpu.memory_space<vmem>>, vector<1x4x16xbf16>
    %44 = vector.shape_cast %43 : vector<1x4x16xbf16> to vector<4x16xbf16>
    %cst_23 = arith.constant dense<0.000000e+00> : vector<256x16xf32>
    %45 = tpu.matmul %42, %44, %cst_23 {dimension_numbers = #tpu.dot_dimension_numbers<[1], [0], [0], [1], [0, 0, 1, 1], [], []>} : vector<256x4xbf16>, vector<4x16xbf16>, vector<256x16xf32> -> vector<256x16xf32>
    %46 = arith.addf %40, %45 : vector<256x16xf32>
    %c2_i32 = arith.constant 2 : i32
    %47 = arith.addi %1, %c2_i32 : i32
    %c0_24 = arith.constant 0 : index
    %48 = arith.index_cast %47 : i32 to index
    %c0_25 = arith.constant 0 : index
    %c0_26 = arith.constant 0 : index
    %49 = vector.load %arg2[%c0_24, %48, %c0_25, %c0_26] : memref<1x18x18x4xbf16, #tpu.memory_space<vmem>>, vector<1x16x18x4xbf16>
    %50 = vector.shape_cast %49 : vector<1x16x18x4xbf16> to vector<16x18x4xbf16>
    %51 = vector.extract_strided_slice %50 {offsets = [0, 0, 0], sizes = [16, 16, 4], strides = [1, 1, 1]} : vector<16x18x4xbf16> to vector<16x16x4xbf16>
    %52 = vector.shape_cast %51 : vector<16x16x4xbf16> to vector<256x4xbf16>
    %c6 = arith.constant 6 : index
    %c0_27 = arith.constant 0 : index
    %c0_28 = arith.constant 0 : index
    %53 = vector.load %arg3[%c6, %c0_27, %c0_28] : memref<9x4x16xbf16, #tpu.memory_space<vmem>>, vector<1x4x16xbf16>
    %54 = vector.shape_cast %53 : vector<1x4x16xbf16> to vector<4x16xbf16>
    %cst_29 = arith.constant dense<0.000000e+00> : vector<256x16xf32>
    %55 = tpu.matmul %52, %54, %cst_29 {dimension_numbers = #tpu.dot_dimension_numbers<[1], [0], [0], [1], [0, 0, 1, 1], [], []>} : vector<256x4xbf16>, vector<4x16xbf16>, vector<256x16xf32> -> vector<256x16xf32>
    %56 = arith.addf %46, %55 : vector<256x16xf32>
    %57 = vector.extract_strided_slice %50 {offsets = [0, 1, 0], sizes = [16, 16, 4], strides = [1, 1, 1]} : vector<16x18x4xbf16> to vector<16x16x4xbf16>
    %58 = vector.shape_cast %57 : vector<16x16x4xbf16> to vector<256x4xbf16>
    %c7 = arith.constant 7 : index
    %c0_30 = arith.constant 0 : index
    %c0_31 = arith.constant 0 : index
    %59 = vector.load %arg3[%c7, %c0_30, %c0_31] : memref<9x4x16xbf16, #tpu.memory_space<vmem>>, vector<1x4x16xbf16>
    %60 = vector.shape_cast %59 : vector<1x4x16xbf16> to vector<4x16xbf16>
    %cst_32 = arith.constant dense<0.000000e+00> : vector<256x16xf32>
    %61 = tpu.matmul %58, %60, %cst_32 {dimension_numbers = #tpu.dot_dimension_numbers<[1], [0], [0], [1], [0, 0, 1, 1], [], []>} : vector<256x4xbf16>, vector<4x16xbf16>, vector<256x16xf32> -> vector<256x16xf32>
    %62 = arith.addf %56, %61 : vector<256x16xf32>
    %63 = vector.extract_strided_slice %50 {offsets = [0, 2, 0], sizes = [16, 16, 4], strides = [1, 1, 1]} : vector<16x18x4xbf16> to vector<16x16x4xbf16>
    %64 = vector.shape_cast %63 : vector<16x16x4xbf16> to vector<256x4xbf16>
    %c8 = arith.constant 8 : index
    %c0_33 = arith.constant 0 : index
    %c0_34 = arith.constant 0 : index
    %65 = vector.load %arg3[%c8, %c0_33, %c0_34] : memref<9x4x16xbf16, #tpu.memory_space<vmem>>, vector<1x4x16xbf16>
    %66 = vector.shape_cast %65 : vector<1x4x16xbf16> to vector<4x16xbf16>
    %cst_35 = arith.constant dense<0.000000e+00> : vector<256x16xf32>
    %67 = tpu.matmul %64, %66, %cst_35 {dimension_numbers = #tpu.dot_dimension_numbers<[1], [0], [0], [1], [0, 0, 1, 1], [], []>} : vector<256x4xbf16>, vector<4x16xbf16>, vector<256x16xf32> -> vector<256x16xf32>
    %68 = arith.addf %62, %67 : vector<256x16xf32>
    %c0_36 = arith.constant 0 : index
    %c0_37 = arith.constant 0 : index
    %69 = vector.load %arg4[%c0_36, %c0_37] : memref<1x16xf32, #tpu.memory_space<vmem>>, vector<1x16xf32>
    %70 = vector.broadcast %69 : vector<1x16xf32> to vector<256x16xf32>
    %71 = arith.addf %68, %70 : vector<256x16xf32>
    %72 = arith.truncf %71 : vector<256x16xf32> to vector<256x16xbf16>
    %c0_38 = arith.constant 0 : index
    %c0_39 = arith.constant 0 : index
    %c0_40 = arith.constant 0 : index
    %73 = vector.load %arg5[%c0_38, %c0_39, %c0_40] : memref<1x256x16xbf16, #tpu.memory_space<vmem>>, vector<1x256x16xbf16>
    %74 = vector.shape_cast %73 : vector<1x256x16xbf16> to vector<256x16xbf16>
    %75 = vector.shape_cast %72 : vector<256x16xbf16> to vector<1x256x16xbf16>
    tpu.vector_store %arg5[%c0_38, %c0_39, %c0_40], %75 {strides = array<i32>} : memref<1x256x16xbf16, #tpu.memory_space<vmem>>, vector<1x256x16xbf16>,
    return
  }
  func.func @transform_0(%arg0: i32, %arg1: i32) -> (i32, i32, i32, i32) {
    %c0_i32 = arith.constant 0 : i32
    %c0_i32_0 = arith.constant 0 : i32
    %c0_i32_1 = arith.constant 0 : i32
    %c0_i32_2 = arith.constant 0 : i32
    return %arg0, %c0_i32, %c0_i32_0, %c0_i32_1 : i32, i32, i32, i32
  }
  func.func @transform_1(%arg0: i32, %arg1: i32) -> (i32, i32, i32) {
    %c0_i32 = arith.constant 0 : i32
    %c0_i32_0 = arith.constant 0 : i32
    %c0_i32_1 = arith.constant 0 : i32
    %c0_i32_2 = arith.constant 0 : i32
    return %c0_i32, %c0_i32_0, %c0_i32_1 : i32, i32, i32
  }
  func.func @transform_2(%arg0: i32, %arg1: i32) -> (i32, i32) {
    %c0_i32 = arith.constant 0 : i32
    %c0_i32_0 = arith.constant 0 : i32
    %c0_i32_1 = arith.constant 0 : i32
    return %c0_i32, %c0_i32_0 : i32, i32
  }
  func.func @transform_3(%arg0: i32, %arg1: i32) -> (i32, i32, i32) {
    %c0_i32 = arith.constant 0 : i32
    %c0_i32_0 = arith.constant 0 : i32
    return %arg0, %arg1, %c0_i32 : i32, i32, i32
  }
}

</mosaic_0001>

<llo_original>
// kernel: upsample_forward.1
$region0: #{upsample_forward.1}
  #allocation0 [shape = 'u32[]', space=smem, size = 0x4, offset = 0x4, fixed_abs, tag = 'smem constant byte address 0x4 - core index']
  #allocation1 [shape = 'u32[144,128]{1,0:T(1,128)}', space=vmem, size = 0x12000, scoped, tag = 'internal scratch']
  %s0 = inlined_call_operand.vmem [shape: bf16[2,18,18,4], index: 0, kind: input, shape index: {}]
  %s1 = inlined_call_operand.vmem [shape: bf16[9,4,16], index: 1, kind: input, shape index: {}]
  %s2 = inlined_call_operand.vmem [shape: f32[1,16], index: 2, kind: input, shape index: {}]
  %s3 = inlined_call_operand.vmem [shape: bf16[2,256,16], index: 3, kind: output, shape index: {}]
  %s4 = sld [smem:[#allocation0]]
  $region45: #{upsample_forward.1} parent=0
    _
  %s6 = ssub.s32 1, %s4
  %s7 = scalar_select 0, %s6, %s4
  loop: start=0, step=1, limit=4
  $region2: #{upsample_forward.1} parent=0 // loop_pre_header
    _
  $region3: #{upsample_forward.1} parent=0 // loop_header
    %s9 = sphi 0, %s13
    %p10 = scmp.ge.s32.totalorder %s9, 4
    %s16 = sphi 0, %s28
    %s17 = sphi 0, %s24
    %s18 = sphi 0, %s16
    %s19 = sphi 0, %s17
    %s20 = sphi 0, %s18
    %s21 = sphi 0, %s19
    %s31 = sphi 0, %s33
    %s34 = sphi 0, %s31
    %s35 = sphi 0, %s34
    %s51 = sphi 0, %s35
    %s55 = sphi 0, %s55
    %s57 = sphi 0, %s55
    %s58 = sphi 0, %s57
    %s72 = sphi 0, %s58
    %s76 = sphi 0, %s76
    %s78 = sphi 0, %s76
    %s79 = sphi 0, %s78
    %s93 = sphi 0, %s79
    %s101 = sphi 0, %s103
    %s104 = sphi 0, %s101
    %s105 = sphi 0, %s104
    %s121 = sphi 0, %s105
  $region4: #{upsample_forward.1} parent=0 // loop_header_branch
    %12 = sbr.rel (%p10) target = $region8
  $region5: #{upsample_forward.1} parent=0 // loop_body
    %s14 = ssub.s32 %s9, 1
    %s15 = ssub.s32 %s9, 2
    %s22 = sadd.s32 1, %s17
    %p23 = scmp.ge.s32.totalorder %s22, 1
    %s24 = scalar_select %p23, 0, %s22
    %s25 = sadd.s32 1, %s16
    %s26 = scalar_select %p23, %s25, %s16
    %p27 = scmp.ge.s32.totalorder %s26, 2
    %s28 = scalar_select %p27, 0, %s26
    %s29 = ssub.s32 %s16, %s28
    %p30 = scmp.eq.s32.totalorder %s29, 0
    %s32 = sadd.s32 %s31, 1
    %s33 = scalar_select %p30, %s31, %s32
    %p36 = pneg %p30
    %p37 = scmp.eq.s32.totalorder %s9, 1
    %p38 = por %p36, %p37
    %p39 = scmp.ne.s32.totalorder %s31, %s34
    %p40 = scmp.eq.s32.totalorder %s9, 0
    %p41 = por %p39, %p40
    %p42 = scmp.ne.s32.totalorder %s31, %s34
    %p43 = scmp.eq.s32.totalorder %s14, 1
    %p44 = por %p42, %p43
    %p45 = scmp.ne.s32.totalorder %s34, %s35
    %p46 = scmp.eq.s32.totalorder %s14, 0
    %p47 = por %p45, %p46
    %p48 = scmp.ne.s32.totalorder %s34, %s35
    %p49 = scmp.eq.s32.totalorder %s15, 1
    %p50 = por %p48, %p49
    %p52 = scmp.ne.s32.totalorder %s35, %s51
    %p53 = scmp.eq.s32.totalorder %s15, 0
    %p54 = por %p52, %p53
    %s56 = sadd.s32 %s55, 1
    %p59 = scmp.eq.s32.totalorder %s9, 1
    %p60 = scmp.ne.s32.totalorder %s55, %s57
    %p61 = scmp.eq.s32.totalorder %s9, 0
    %p62 = por %p60, %p61
    %p63 = scmp.ne.s32.totalorder %s55, %s57
    %p64 = scmp.eq.s32.totalorder %s14, 1
    %p65 = por %p63, %p64
    %p66 = scmp.ne.s32.totalorder %s57, %s58
    %p67 = scmp.eq.s32.totalorder %s14, 0
    %p68 = por %p66, %p67
    %p69 = scmp.ne.s32.totalorder %s57, %s58
    %p70 = scmp.eq.s32.totalorder %s15, 1
    %p71 = por %p69, %p70
    %p73 = scmp.ne.s32.totalorder %s58, %s72
    %p74 = scmp.eq.s32.totalorder %s15, 0
    %p75 = por %p73, %p74
    %s77 = sadd.s32 %s76, 1
    %p80 = scmp.eq.s32.totalorder %s9, 1
    %p81 = scmp.ne.s32.totalorder %s76, %s78
    %p82 = scmp.eq.s32.totalorder %s9, 0
    %p83 = por %p81, %p82
    %p84 = scmp.ne.s32.totalorder %s76, %s78
    %p85 = scmp.eq.s32.totalorder %s14, 1
    %p86 = por %p84, %p85
    %p87 = scmp.ne.s32.totalorder %s78, %s79
    %p88 = scmp.eq.s32.totalorder %s14, 0
    %p89 = por %p87, %p88
    %p90 = scmp.ne.s32.totalorder %s78, %s79
    %p91 = scmp.eq.s32.totalorder %s15, 1
    %p92 = por %p90, %p91
    %p94 = scmp.ne.s32.totalorder %s79, %s93
    %p95 = scmp.eq.s32.totalorder %s15, 0
    %p96 = por %p94, %p95
    %s97 = ssub.s32 %s16, %s28
    %s98 = ssub.s32 %s17, %s24
    %s99 = sor.u32 %s97, %s98
    %p100 = scmp.eq.s32.totalorder %s99, 0
    %s102 = sadd.s32 %s101, 1
    %s103 = scalar_select %p100, %s101, %s102
    %p106 = pneg %p100
    %p107 = scmp.eq.s32.totalorder %s9, 1
    %p108 = por %p106, %p107
    %p109 = scmp.ne.s32.totalorder %s101, %s104
    %p110 = scmp.eq.s32.totalorder %s9, 0
    %p111 = por %p109, %p110
    %p112 = scmp.ne.s32.totalorder %s101, %s104
    %p113 = scmp.eq.s32.totalorder %s14, 1
    %p114 = por %p112, %p113
    %p115 = scmp.ne.s32.totalorder %s104, %s105
    %p116 = scmp.eq.s32.totalorder %s14, 0
    %p117 = por %p115, %p116
    %p118 = scmp.ne.s32.totalorder %s104, %s105
    %p119 = scmp.eq.s32.totalorder %s15, 1
    %p120 = por %p118, %p119
    %p122 = scmp.ne.s32.totalorder %s105, %s121
    %p123 = scmp.eq.s32.totalorder %s15, 0
    %p124 = por %p122, %p123
    %p125 = scmp.le.s32.totalorder 1, %s9
    %p126 = scmp.lt.s32.totalorder %s9, 3
    %p127 = pnand %p125, %p126
    %p128 = pneg %p127
    // Predicated region
    $region9: #{upsample_forward.1} parent=5 // pred_check
      _
    $region10: #{upsample_forward.1} parent=5 // pred_check_branch
      %130 = sbr.rel (%p127) target = $region12
    $region11: #{upsample_forward.1} parent=5 // pred_region
      %s131 = ssub.s32 %s9, 1
      // Predicated region
      $region13: #{upsample_forward.1} parent=11 // pred_check
        %p132 = pneg %p68
      $region14: #{upsample_forward.1} parent=11 // pred_check_branch
        %134 = sbr.rel (%p132) target = $region16
      $region15: #{upsample_forward.1} parent=11 // pred_region
        _
      $region16: #{upsample_forward.1} parent=11 // pred_fallthru
        _
      // Predicated region
      $region17: #{upsample_forward.1} parent=11 // pred_check
        %p135 = pneg %p89
      $region18: #{upsample_forward.1} parent=11 // pred_check_branch
        %137 = sbr.rel (%p135) target = $region20
      $region19: #{upsample_forward.1} parent=11 // pred_region
        _
      $region20: #{upsample_forward.1} parent=11 // pred_fallthru
        _
    $region12: #{upsample_forward.1} parent=5 // pred_fallthru
      _
    %p138 = scmp.lt.s32.totalorder %s9, 2
    // Predicated region
    $region21: #{upsample_forward.1} parent=5 // pred_check
      %p139 = pneg %p138
    $region22: #{upsample_forward.1} parent=5 // pred_check_branch
      %141 = sbr.rel (%p139) target = $region24
    $region23: #{upsample_forward.1} parent=5 // pred_region
      // Predicated region
      $region25: #{upsample_forward.1} parent=23 // pred_check
        %p142 = pneg %p41
      $region26: #{upsample_forward.1} parent=23 // pred_check_branch
        %144 = sbr.rel (%p142) target = $region28
      $region27: #{upsample_forward.1} parent=23 // pred_region
        %p145 = scmp.lt.s32.totalorder %s16, 1
        %s146 = scalar_select %p145, %s16, 1
        %s147 = smul.addr %s146, 54
        %s148 = smul.addr %s147, 4
        %s149 = scalar_lea.vmem %s0, %s148
      $region28: #{upsample_forward.1} parent=23 // pred_fallthru
        _
    $region24: #{upsample_forward.1} parent=5 // pred_fallthru
      _
    %p150 = scmp.le.s32.totalorder 1, %s9
    %p151 = scmp.lt.s32.totalorder %s9, 3
    %p152 = pnand %p150, %p151
    %p153 = pneg %p152
    // Predicated region
    $region29: #{upsample_forward.1} parent=5 // pred_check
      _
    $region30: #{upsample_forward.1} parent=5 // pred_check_branch
      %155 = sbr.rel (%p152) target = $region32
    $region31: #{upsample_forward.1} parent=5 // pred_region
      %s156 = ssub.s32 %s9, 1
      %p157 = scmp.lt.s32.totalorder %s18, 1
      %s158 = scalar_select %p157, %s18, 1
      %s159 = smul.addr %s158, 54
      %s160 = smul.addr %s159, 4
      %s161 = scalar_lea.vmem %s0, %s160
      %p162 = pneg %p47
      %p163 = pneg %p44
      %p164 = pneg %p68
      %p165 = pneg %p65
      %p166 = pneg %p89
      %p167 = pneg %p86
      %p168 = pneg %p117
      %p169 = pneg %p114
      %s170 = smul.u32 32, %s19
      %p171 = scmp.lt.s32.totalorder %s18, 1
      %s172 = scalar_select %p171, %s18, 1
      %p173 = scmp.lt.s32.totalorder %s170, 31
      %s174 = scalar_select %p173, %s170, 31
      %s175 = smul.addr %s172, 32
      %s176 = sadd.s32 %s174, %s175
      %s177 = smul.addr %s176, 4
      %s178 = scalar_lea.vmem %s3, %s177
      %p179 = scmp.lt.s32.totalorder %s18, 1
      %s180 = scalar_select %p179, %s18, 1
      %s181 = smul.addr %s180, 54
      %s182 = smul.addr %s181, 4
      %s183 = scalar_lea.vmem %s0, %s182
      %s184 = smul.u32 32, %s19
      %p185 = scmp.lt.s32.totalorder %s18, 1
      %s186 = scalar_select %p185, %s18, 1
      %p187 = scmp.lt.s32.totalorder %s184, 31
      %s188 = scalar_select %p187, %s184, 31
      %s189 = smul.addr %s186, 32
      %s190 = sadd.s32 %s188, %s189
      %s191 = smul.addr %s190, 4
      %s192 = scalar_lea.vmem %s3, %s191
      %s193 = smul.u32 32, %s19
      %s195 = smul.u32 %s19, 16
      %s196 = smul.u32 %s195, 3
      %s197 = smul.addr %s196, 4
      %s198 = scalar_lea.vmem %s183, %s197
      %v199 = vld [vmem:[%s198] sm:$0xf]
      %v200 = vld [vmem:[%s198 + $0x4] sm:$0xf]
      %v201 = vld [vmem:[%s198 + $0x8] sm:$0x1]
      %v202 = vld [vmem:[%s198 + $0xc] sm:$0xf]
      %v203 = vld [vmem:[%s198 + $0x10] sm:$0xf]
      %v204 = vld [vmem:[%s198 + $0x14] sm:$0x1]
      %v205 = vld [vmem:[%s198 + $0x18] sm:$0xf]
      %v206 = vld [vmem:[%s198 + $0x1c] sm:$0xf]
      %v207 = vld [vmem:[%s198 + $0x20] sm:$0x1]
      %v208 = vld [vmem:[%s198 + $0x24] sm:$0xf]
      %v209 = vld [vmem:[%s198 + $0x28] sm:$0xf]
      %v210 = vld [vmem:[%s198 + $0x2c] sm:$0x1]
      %v211 = vld [vmem:[%s198 + $0x30] sm:$0xf]
      %v212 = vld [vmem:[%s198 + $0x34] sm:$0xf]
      %v213 = vld [vmem:[%s198 + $0x38] sm:$0x1]
      %v214 = vld [vmem:[%s198 + $0x3c] sm:$0xf]
      %v215 = vld [vmem:[%s198 + $0x40] sm:$0xf]
      %v216 = vld [vmem:[%s198 + $0x44] sm:$0x1]
      %v217 = vld [vmem:[%s198 + $0x48] sm:$0xf]
      %v218 = vld [vmem:[%s198 + $0x4c] sm:$0xf]
      %v219 = vld [vmem:[%s198 + $0x50] sm:$0x1]
      %v220 = vld [vmem:[%s198 + $0x54] sm:$0xf]
      %v221 = vld [vmem:[%s198 + $0x58] sm:$0xf]
      %v222 = vld [vmem:[%s198 + $0x5c] sm:$0x1]
      %v223 = vld [vmem:[%s198 + $0x60] sm:$0xf]
      %v224 = vld [vmem:[%s198 + $0x64] sm:$0xf]
      %v225 = vld [vmem:[%s198 + $0x68] sm:$0x1]
      %v226 = vld [vmem:[%s198 + $0x6c] sm:$0xf]
      %v227 = vld [vmem:[%s198 + $0x70] sm:$0xf]
      %v228 = vld [vmem:[%s198 + $0x74] sm:$0x1]
      %v229 = vld [vmem:[%s198 + $0x78] sm:$0xf]
      %v230 = vld [vmem:[%s198 + $0x7c] sm:$0xf]
      %v231 = vld [vmem:[%s198 + $0x80] sm:$0x1]
      %v232 = vld [vmem:[%s198 + $0x84] sm:$0xf]
      %v233 = vld [vmem:[%s198 + $0x88] sm:$0xf]
      %v234 = vld [vmem:[%s198 + $0x8c] sm:$0x1]
      %v235 = vld [vmem:[%s198 + $0x90] sm:$0xf]
      %v236 = vld [vmem:[%s198 + $0x94] sm:$0xf]
      %v237 = vld [vmem:[%s198 + $0x98] sm:$0x1]
      %v238 = vld [vmem:[%s198 + $0x9c] sm:$0xf]
      %v239 = vld [vmem:[%s198 + $0xa0] sm:$0xf]
      %v240 = vld [vmem:[%s198 + $0xa4] sm:$0x1]
      %v241 = vld [vmem:[%s198 + $0xa8] sm:$0xf]
      %v242 = vld [vmem:[%s198 + $0xac] sm:$0xf]
      %v243 = vld [vmem:[%s198 + $0xb0] sm:$0x1]
      %v244 = vld [vmem:[%s198 + $0xb4] sm:$0xf]
      %v245 = vld [vmem:[%s198 + $0xb8] sm:$0xf]
      %v246 = vld [vmem:[%s198 + $0xbc] sm:$0x1]
      %v247 = vld [vmem:[%s1] sm:$0x3]
      %vm248 = vsmask.f32 3328
      %vm249 = vsmask.f32 7440
      %vm250 = vmor %vm248, %vm249
      %v252 = vshrl.u32 %v199, 16
      %v254 = vrot.slane %v252, 4
      %v255 = vshll.u32 %v199, 16
      %v257 = vrot.slane %v255, 5
      %v258 = vor.u32 %v254, %v257
      %v259 = vrot.slane %v258, 4
      %v261 = vshll.u32 %v200, 16
      %v263 = vrot.slane %v261, 5
      %v264 = vsel %vm250, %v259, %v263
      %v265 = vshrl.u32 %v200, 16
      %v267 = vrot.slane %v265, 4
      %v268 = vor.u32 %v267, %v263
      %v269 = vrot.slane %v268, 4
      %v271 = vshll.u32 %v201, 16
      %v273 = vrot.slane %v271, 5
      %v274 = vsel %vm250, %v269, %v273
      %v276 = vshrl.u32 %v202, 16
      %v278 = vrot.slane %v276, 4
      %v279 = vshll.u32 %v202, 16
      %v281 = vrot.slane %v279, 5
      %v282 = vor.u32 %v278, %v281
      %v283 = vrot.slane %v282, 4
      %v285 = vshll.u32 %v203, 16
      %v287 = vrot.slane %v285, 5
      %v288 = vsel %vm250, %v283, %v287
      %v289 = vshrl.u32 %v203, 16
      %v291 = vrot.slane %v289, 4
      %v292 = vor.u32 %v291, %v287
      %v293 = vrot.slane %v292, 4
      %v295 = vshll.u32 %v204, 16
      %v297 = vrot.slane %v295, 5
      %v298 = vsel %vm250, %v293, %v297
      %v300 = vshrl.u32 %v205, 16
      %v302 = vrot.slane %v300, 4
      %v303 = vshll.u32 %v205, 16
      %v305 = vrot.slane %v303, 5
      %v306 = vor.u32 %v302, %v305
      %v307 = vrot.slane %v306, 4
      %v309 = vshll.u32 %v206, 16
      %v311 = vrot.slane %v309, 5
      %v312 = vsel %vm250, %v307, %v311
      %v313 = vshrl.u32 %v206, 16
      %v315 = vrot.slane %v313, 4
      %v316 = vor.u32 %v315, %v311
      %v317 = vrot.slane %v316, 4
      %v319 = vshll.u32 %v207, 16
      %v321 = vrot.slane %v319, 5
      %v322 = vsel %vm250, %v317, %v321
      %v324 = vshrl.u32 %v208, 16
      %v326 = vrot.slane %v324, 4
      %v327 = vshll.u32 %v208, 16
      %v329 = vrot.slane %v327, 5
      %v330 = vor.u32 %v326, %v329
      %v331 = vrot.slane %v330, 4
      %v333 = vshll.u32 %v209, 16
      %v335 = vrot.slane %v333, 5
      %v336 = vsel %vm250, %v331, %v335
      %v337 = vshrl.u32 %v209, 16
      %v339 = vrot.slane %v337, 4
      %v340 = vor.u32 %v339, %v335
      %v341 = vrot.slane %v340, 4
      %v343 = vshll.u32 %v210, 16
      %v345 = vrot.slane %v343, 5
      %v346 = vsel %vm250, %v341, %v345
      %v348 = vshrl.u32 %v211, 16
      %v350 = vrot.slane %v348, 4
      %v351 = vshll.u32 %v211, 16
      %v353 = vrot.slane %v351, 5
      %v354 = vor.u32 %v350, %v353
      %v355 = vrot.slane %v354, 4
      %v357 = vshll.u32 %v212, 16
      %v359 = vrot.slane %v357, 5
      %v360 = vsel %vm250, %v355, %v359
      %v361 = vshrl.u32 %v212, 16
      %v363 = vrot.slane %v361, 4
      %v364 = vor.u32 %v363, %v359
      %v365 = vrot.slane %v364, 4
      %v367 = vshll.u32 %v213, 16
      %v369 = vrot.slane %v367, 5
      %v370 = vsel %vm250, %v365, %v369
      %v372 = vshrl.u32 %v214, 16
      %v374 = vrot.slane %v372, 4
      %v375 = vshll.u32 %v214, 16
      %v377 = vrot.slane %v375, 5
      %v378 = vor.u32 %v374, %v377
      %v379 = vrot.slane %v378, 4
      %v381 = vshll.u32 %v215, 16
      %v383 = vrot.slane %v381, 5
      %v384 = vsel %vm250, %v379, %v383
      %v385 = vshrl.u32 %v215, 16
      %v387 = vrot.slane %v385, 4
      %v388 = vor.u32 %v387, %v383
      %v389 = vrot.slane %v388, 4
      %v391 = vshll.u32 %v216, 16
      %v393 = vrot.slane %v391, 5
      %v394 = vsel %vm250, %v389, %v393
      %v396 = vshrl.u32 %v217, 16
      %v398 = vrot.slane %v396, 4
      %v399 = vshll.u32 %v217, 16
      %v401 = vrot.slane %v399, 5
      %v402 = vor.u32 %v398, %v401
      %v403 = vrot.slane %v402, 4
      %v405 = vshll.u32 %v218, 16
      %v407 = vrot.slane %v405, 5
      %v408 = vsel %vm250, %v403, %v407
      %v409 = vshrl.u32 %v218, 16
      %v411 = vrot.slane %v409, 4
      %v412 = vor.u32 %v411, %v407
      %v413 = vrot.slane %v412, 4
      %v415 = vshll.u32 %v219, 16
      %v417 = vrot.slane %v415, 5
      %v418 = vsel %vm250, %v413, %v417
      %v420 = vshrl.u32 %v220, 16
      %v422 = vrot.slane %v420, 4
      %v423 = vshll.u32 %v220, 16
      %v425 = vrot.slane %v423, 5
      %v426 = vor.u32 %v422, %v425
      %v427 = vrot.slane %v426, 4
      %v429 = vshll.u32 %v221, 16
      %v431 = vrot.slane %v429, 5
      %v432 = vsel %vm250, %v427, %v431
      %v433 = vshrl.u32 %v221, 16
      %v435 = vrot.slane %v433, 4
      %v436 = vor.u32 %v435, %v431
      %v437 = vrot.slane %v436, 4
      %v439 = vshll.u32 %v222, 16
      %v441 = vrot.slane %v439, 5
      %v442 = vsel %vm250, %v437, %v441
      %v444 = vshrl.u32 %v223, 16
      %v446 = vrot.slane %v444, 4
      %v447 = vshll.u32 %v223, 16
      %v449 = vrot.slane %v447, 5
      %v450 = vor.u32 %v446, %v449
      %v451 = vrot.slane %v450, 4
      %v453 = vshll.u32 %v224, 16
      %v455 = vrot.slane %v453, 5
      %v456 = vsel %vm250, %v451, %v455
      %v457 = vshrl.u32 %v224, 16
      %v459 = vrot.slane %v457, 4
      %v460 = vor.u32 %v459, %v455
      %v461 = vrot.slane %v460, 4
      %v463 = vshll.u32 %v225, 16
      %v465 = vrot.slane %v463, 5
      %v466 = vsel %vm250, %v461, %v465
      %v468 = vshrl.u32 %v226, 16
      %v470 = vrot.slane %v468, 4
      %v471 = vshll.u32 %v226, 16
      %v473 = vrot.slane %v471, 5
      %v474 = vor.u32 %v470, %v473
      %v475 = vrot.slane %v474, 4
      %v477 = vshll.u32 %v227, 16
      %v479 = vrot.slane %v477, 5
      %v480 = vsel %vm250, %v475, %v479
      %v481 = vshrl.u32 %v227, 16
      %v483 = vrot.slane %v481, 4
      %v484 = vor.u32 %v483, %v479
      %v485 = vrot.slane %v484, 4
      %v487 = vshll.u32 %v228, 16
      %v489 = vrot.slane %v487, 5
      %v490 = vsel %vm250, %v485, %v489
      %v492 = vshrl.u32 %v229, 16
      %v494 = vrot.slane %v492, 4
      %v495 = vshll.u32 %v229, 16
      %v497 = vrot.slane %v495, 5
      %v498 = vor.u32 %v494, %v497
      %v499 = vrot.slane %v498, 4
      %v501 = vshll.u32 %v230, 16
      %v503 = vrot.slane %v501, 5
      %v504 = vsel %vm250, %v499, %v503
      %v505 = vshrl.u32 %v230, 16
      %v507 = vrot.slane %v505, 4
      %v508 = vor.u32 %v507, %v503
      %v509 = vrot.slane %v508, 4
      %v511 = vshll.u32 %v231, 16
      %v513 = vrot.slane %v511, 5
      %v514 = vsel %vm250, %v509, %v513
      %v516 = vshrl.u32 %v232, 16
      %v518 = vrot.slane %v516, 4
      %v519 = vshll.u32 %v232, 16
      %v521 = vrot.slane %v519, 5
      %v522 = vor.u32 %v518, %v521
      %v523 = vrot.slane %v522, 4
      %v525 = vshll.u32 %v233, 16
      %v527 = vrot.slane %v525, 5
      %v528 = vsel %vm250, %v523, %v527
      %v529 = vshrl.u32 %v233, 16
      %v531 = vrot.slane %v529, 4
      %v532 = vor.u32 %v531, %v527
      %v533 = vrot.slane %v532, 4
      %v535 = vshll.u32 %v234, 16
      %v537 = vrot.slane %v535, 5
      %v538 = vsel %vm250, %v533, %v537
      %v540 = vshrl.u32 %v235, 16
      %v542 = vrot.slane %v540, 4
      %v543 = vshll.u32 %v235, 16
      %v545 = vrot.slane %v543, 5
      %v546 = vor.u32 %v542, %v545
      %v547 = vrot.slane %v546, 4
      %v549 = vshll.u32 %v236, 16
      %v551 = vrot.slane %v549, 5
      %v552 = vsel %vm250, %v547, %v551
      %v553 = vshrl.u32 %v236, 16
      %v555 = vrot.slane %v553, 4
      %v556 = vor.u32 %v555, %v551
      %v557 = vrot.slane %v556, 4
      %v559 = vshll.u32 %v237, 16
      %v561 = vrot.slane %v559, 5
      %v562 = vsel %vm250, %v557, %v561
      %v564 = vshrl.u32 %v238, 16
      %v566 = vrot.slane %v564, 4
      %v567 = vshll.u32 %v238, 16
      %v569 = vrot.slane %v567, 5
      %v570 = vor.u32 %v566, %v569
      %v571 = vrot.slane %v570, 4
      %v573 = vshll.u32 %v239, 16
      %v575 = vrot.slane %v573, 5
      %v576 = vsel %vm250, %v571, %v575
      %v577 = vshrl.u32 %v239, 16
      %v579 = vrot.slane %v577, 4
      %v580 = vor.u32 %v579, %v575
      %v581 = vrot.slane %v580, 4
      %v583 = vshll.u32 %v240, 16
      %v585 = vrot.slane %v583, 5
      %v586 = vsel %vm250, %v581, %v585
      %v588 = vshrl.u32 %v241, 16
      %v590 = vrot.slane %v588, 4
      %v591 = vshll.u32 %v241, 16
      %v593 = vrot.slane %v591, 5
      %v594 = vor.u32 %v590, %v593
      %v595 = vrot.slane %v594, 4
      %v597 = vshll.u32 %v242, 16
      %v599 = vrot.slane %v597, 5
      %v600 = vsel %vm250, %v595, %v599
      %v601 = vshrl.u32 %v242, 16
      %v603 = vrot.slane %v601, 4
      %v604 = vor.u32 %v603, %v599
      %v605 = vrot.slane %v604, 4
      %v607 = vshll.u32 %v243, 16
      %v609 = vrot.slane %v607, 5
      %v610 = vsel %vm250, %v605, %v609
      %v612 = vshrl.u32 %v244, 16
      %v614 = vrot.slane %v612, 4
      %v615 = vshll.u32 %v244, 16
      %v617 = vrot.slane %v615, 5
      %v618 = vor.u32 %v614, %v617
      %v619 = vrot.slane %v618, 4
      %v621 = vshll.u32 %v245, 16
      %v623 = vrot.slane %v621, 5
      %v624 = vsel %vm250, %v619, %v623
      %v625 = vshrl.u32 %v245, 16
      %v627 = vrot.slane %v625, 4
      %v628 = vor.u32 %v627, %v623
      %v629 = vrot.slane %v628, 4
      %v631 = vshll.u32 %v246, 16
      %v633 = vrot.slane %v631, 5
      %v634 = vsel %vm250, %v629, %v633
      %s635 = scalar_lea.vmem %s1, 2
      %v636 = vld [vmem:[%s635] sm:$0x3]
      %v637 = vunpack.c.l.b16 %v264
      %v638 = vunpack.c.l.b16 %v274
      %v639 = vunpack.c.l.b16 %v288
      %v640 = vunpack.c.l.b16 %v298
      %v641 = vunpack.c.l.b16 %v312
      %v642 = vunpack.c.l.b16 %v322
      %v643 = vunpack.c.l.b16 %v336
      %v644 = vunpack.c.l.b16 %v346
      %v645 = vunpack.c.l.b16 %v360
      %v646 = vunpack.c.l.b16 %v370
      %v647 = vunpack.c.l.b16 %v384
      %v648 = vunpack.c.l.b16 %v394
      %v649 = vunpack.c.l.b16 %v408
      %v650 = vunpack.c.l.b16 %v418
      %v651 = vunpack.c.l.b16 %v432
      %v652 = vunpack.c.l.b16 %v442
      %v653 = vunpack.c.l.b16 %v456
      %v654 = vunpack.c.l.b16 %v466
      %v655 = vunpack.c.l.b16 %v480
      %v656 = vunpack.c.l.b16 %v490
      %v657 = vunpack.c.l.b16 %v504
      %v658 = vunpack.c.l.b16 %v514
      %v659 = vunpack.c.l.b16 %v528
      %v660 = vunpack.c.l.b16 %v538
      %v661 = vunpack.c.l.b16 %v552
      %v662 = vunpack.c.l.b16 %v562
      %v663 = vunpack.c.l.b16 %v576
      %v664 = vunpack.c.l.b16 %v586
      %v665 = vunpack.c.l.b16 %v600
      %v666 = vunpack.c.l.b16 %v610
      %v667 = vunpack.c.l.b16 %v624
      %v668 = vunpack.c.l.b16 %v634
      %v669 = vpack.c.b16 %v638, %v637
      %v670 = vpack.c.b16 %v640, %v639
      %v671 = vpack.c.b16 %v642, %v641
      %v672 = vpack.c.b16 %v644, %v643
      %v673 = vpack.c.b16 %v646, %v645
      %v674 = vpack.c.b16 %v648, %v647
      %v675 = vpack.c.b16 %v650, %v649
      %v676 = vpack.c.b16 %v652, %v651
      %v677 = vpack.c.b16 %v654, %v653
      %v678 = vpack.c.b16 %v656, %v655
      %v679 = vpack.c.b16 %v658, %v657
      %v680 = vpack.c.b16 %v660, %v659
      %v681 = vpack.c.b16 %v662, %v661
      %v682 = vpack.c.b16 %v664, %v663
      %v683 = vpack.c.b16 %v666, %v665
      %v684 = vpack.c.b16 %v668, %v667
      %vm685 = vcmask 31744
      %v687 = vsel %vm685, %v669, 0
      %v690 = vsel %vm685, %v670, 0
      %v693 = vsel %vm685, %v671, 0
      %v696 = vsel %vm685, %v672, 0
      %v699 = vsel %vm685, %v673, 0
      %v702 = vsel %vm685, %v674, 0
      %v705 = vsel %vm685, %v675, 0
      %v708 = vsel %vm685, %v676, 0
      %v711 = vsel %vm685, %v677, 0
      %v714 = vsel %vm685, %v678, 0
      %v717 = vsel %vm685, %v679, 0
      %v720 = vsel %vm685, %v680, 0
      %v723 = vsel %vm685, %v681, 0
      %v726 = vsel %vm685, %v682, 0
      %v729 = vsel %vm685, %v683, 0
      %v732 = vsel %vm685, %v684, 0
      %vm734 = vcmask 1041408
      %v736 = vsel %vm734, %v636, 0
      %738 = vmatprep.subr.bf16.mxu0 0
      %739 = vmatpush1.bf16.msra.mxu0 0
      %740 = vmatprep.subr.bf16.mxu0 0
      %741 = vmatpush1.bf16.msra.mxu0 0
      %742 = vmatprep.subr.bf16.mxu0 0
      %743 = vmatpush1.bf16.msra.mxu0 0
      %744 = vmatprep.subr.bf16.mxu0 0
      %745 = vmatpush1.bf16.msra.mxu0 0
      %746 = vmatprep.subr.bf16.mxu0 0
      %747 = vmatpush1.bf16.msra.mxu0 0
      %748 = vmatprep.subr.bf16.mxu0 0
      %749 = vmatpush1.bf16.msra.mxu0 0
      %750 = vmatprep.subr.bf16.mxu0 0
      %751 = vmatpush1.bf16.msra.mxu0 0
      %752 = vmatprep.subr.bf16.mxu0 0
      %753 = vmatpush1.bf16.msra.mxu0 %v736
      %754 = vmatprep.subr.bf16.mxu0 0
      %755 = vmatpush2.bf16.msra.mxu0 0
      %756 = vmatprep.subr.bf16.mxu0 0
      %757 = vmatpush2.bf16.msra.mxu0 0
      %758 = vmatprep.subr.bf16.mxu0 0
      %759 = vmatpush2.bf16.msra.mxu0 0
      %760 = vmatprep.subr.bf16.mxu0 0
      %761 = vmatpush2.bf16.msra.mxu0 0
      %762 = vmatprep.subr.bf16.mxu0 0
      %763 = vmatpush2.bf16.msra.mxu0 0
      %764 = vmatprep.subr.bf16.mxu0 0
      %765 = vmatpush2.bf16.msra.mxu0 0
      %766 = vmatprep.subr.bf16.mxu0 0
      %767 = vmatpush2.bf16.msra.mxu0 0
      %768 = vmatprep.subr.bf16.mxu0 0
      %769 = vmatpush2.bf16.msra.mxu0 0
      %770 = vmatprep.mubr.bf16.mxu0 0
      %771 = vmatmul.mubr.bf16.gmra.mxu0 %v687
      %v772 = vpop.f32.mrf.mxu0
      %v773 = vadd.f32 0.0, %v772
      %v774 = vpop.f32.mrf.mxu0
      %v775 = vpop.f32.mrf.mxu0
      %v776 = vadd.f32 0.0, %v775
      %v777 = vpop.f32.mrf.mxu0
      %778 = vmatprep.mubr.bf16.mxu0 0
      %779 = vmatmul.mubr.bf16.gmra.mxu0 %v690
      %v780 = vpop.f32.mrf.mxu0
      %v781 = vadd.f32 0.0, %v780
      %v782 = vpop.f32.mrf.mxu0
      %v783 = vpop.f32.mrf.mxu0
      %v784 = vadd.f32 0.0, %v783
      %v785 = vpop.f32.mrf.mxu0
      %786 = vmatprep.mubr.bf16.mxu0 0
      %787 = vmatmul.mubr.bf16.gmra.mxu0 %v693
      %v788 = vpop.f32.mrf.mxu0
      %v789 = vadd.f32 0.0, %v788
      %v790 = vpop.f32.mrf.mxu0
      %v791 = vpop.f32.mrf.mxu0
      %v792 = vadd.f32 0.0, %v791
      %v793 = vpop.f32.mrf.mxu0
      %794 = vmatprep.mubr.bf16.mxu0 0
      %795 = vmatmul.mubr.bf16.gmra.mxu0 %v696
      %v796 = vpop.f32.mrf.mxu0
      %v797 = vadd.f32 0.0, %v796
      %v798 = vpop.f32.mrf.mxu0
      %v799 = vpop.f32.mrf.mxu0
      %v800 = vadd.f32 0.0, %v799
      %v801 = vpop.f32.mrf.mxu0
      %802 = vmatprep.mubr.bf16.mxu0 0
      %803 = vmatmul.mubr.bf16.gmra.mxu0 %v699
      %v804 = vpop.f32.mrf.mxu0
      %v805 = vadd.f32 0.0, %v804
      %v806 = vpop.f32.mrf.mxu0
      %v807 = vpop.f32.mrf.mxu0
      %v808 = vadd.f32 0.0, %v807
      %v809 = vpop.f32.mrf.mxu0
      %810 = vmatprep.mubr.bf16.mxu0 0
      %811 = vmatmul.mubr.bf16.gmra.mxu0 %v702
      %v812 = vpop.f32.mrf.mxu0
      %v813 = vadd.f32 0.0, %v812
      %v814 = vpop.f32.mrf.mxu0
      %v815 = vpop.f32.mrf.mxu0
      %v816 = vadd.f32 0.0, %v815
      %v817 = vpop.f32.mrf.mxu0
      %818 = vmatprep.mubr.bf16.mxu0 0
      %819 = vmatmul.mubr.bf16.gmra.mxu0 %v705
      %v820 = vpop.f32.mrf.mxu0
      %v821 = vadd.f32 0.0, %v820
      %v822 = vpop.f32.mrf.mxu0
      %v823 = vpop.f32.mrf.mxu0
      %v824 = vadd.f32 0.0, %v823
      %v825 = vpop.f32.mrf.mxu0
      %826 = vmatprep.mubr.bf16.mxu0 0
      %827 = vmatmul.mubr.bf16.gmra.mxu0 %v708
      %v828 = vpop.f32.mrf.mxu0
      %v829 = vadd.f32 0.0, %v828
      %v830 = vpop.f32.mrf.mxu0
      %v831 = vpop.f32.mrf.mxu0
      %v832 = vadd.f32 0.0, %v831
      %v833 = vpop.f32.mrf.mxu0
      %834 = vmatprep.mubr.bf16.mxu0 0
      %835 = vmatmul.mubr.bf16.gmra.mxu0 %v711
      %v836 = vpop.f32.mrf.mxu0
      %v837 = vadd.f32 0.0, %v836
      %v838 = vpop.f32.mrf.mxu0
      %v839 = vpop.f32.mrf.mxu0
      %v840 = vadd.f32 0.0, %v839
      %v841 = vpop.f32.mrf.mxu0
      %842 = vmatprep.mubr.bf16.mxu0 0
      %843 = vmatmul.mubr.bf16.gmra.mxu0 %v714
      %v844 = vpop.f32.mrf.mxu0
      %v845 = vadd.f32 0.0, %v844
      %v846 = vpop.f32.mrf.mxu0
      %v847 = vpop.f32.mrf.mxu0
      %v848 = vadd.f32 0.0, %v847
      %v849 = vpop.f32.mrf.mxu0
      %850 = vmatprep.mubr.bf16.mxu0 0
      %851 = vmatmul.mubr.bf16.gmra.mxu0 %v717
      %v852 = vpop.f32.mrf.mxu0
      %v853 = vadd.f32 0.0, %v852
      %v854 = vpop.f32.mrf.mxu0
      %v855 = vpop.f32.mrf.mxu0
      %v856 = vadd.f32 0.0, %v855
      %v857 = vpop.f32.mrf.mxu0
      %858 = vmatprep.mubr.bf16.mxu0 0
      %859 = vmatmul.mubr.bf16.gmra.mxu0 %v720
      %v860 = vpop.f32.mrf.mxu0
      %v861 = vadd.f32 0.0, %v860
      %v862 = vpop.f32.mrf.mxu0
      %v863 = vpop.f32.mrf.mxu0
      %v864 = vadd.f32 0.0, %v863
      %v865 = vpop.f32.mrf.mxu0
      %866 = vmatprep.mubr.bf16.mxu0 0
      %867 = vmatmul.mubr.bf16.gmra.mxu0 %v723
      %v868 = vpop.f32.mrf.mxu0
      %v869 = vadd.f32 0.0, %v868
      %v870 = vpop.f32.mrf.mxu0
      %v871 = vpop.f32.mrf.mxu0
      %v872 = vadd.f32 0.0, %v871
      %v873 = vpop.f32.mrf.mxu0
      %874 = vmatprep.mubr.bf16.mxu0 0
      %875 = vmatmul.mubr.bf16.gmra.mxu0 %v726
      %v876 = vpop.f32.mrf.mxu0
      %v877 = vadd.f32 0.0, %v876
      %v878 = vpop.f32.mrf.mxu0
      %v879 = vpop.f32.mrf.mxu0
      %v880 = vadd.f32 0.0, %v879
      %v881 = vpop.f32.mrf.mxu0
      %882 = vmatprep.mubr.bf16.mxu0 0
      %883 = vmatmul.mubr.bf16.gmra.mxu0 %v729
      %v884 = vpop.f32.mrf.mxu0
      %v885 = vadd.f32 0.0, %v884
      %v886 = vpop.f32.mrf.mxu0
      %v887 = vpop.f32.mrf.mxu0
      %v888 = vadd.f32 0.0, %v887
      %v889 = vpop.f32.mrf.mxu0
      %890 = vmatprep.mubr.bf16.mxu0 0
      %891 = vmatmul.mubr.bf16.gmra.mxu0 %v732
      %v892 = vpop.f32.mrf.mxu0
      %v893 = vadd.f32 0.0, %v892
      %v894 = vpop.f32.mrf.mxu0
      %v895 = vpop.f32.mrf.mxu0
      %v896 = vadd.f32 0.0, %v895
      %v897 = vpop.f32.mrf.mxu0
      %898 = vdwg.mxu0
      %v931 = vunpack.c.l.b16 %v199
      %v932 = vunpack.c.l.b16 %v200
      %v933 = vunpack.c.l.b16 %v202
      %v934 = vunpack.c.l.b16 %v203
      %v935 = vunpack.c.l.b16 %v205
      %v936 = vunpack.c.l.b16 %v206
      %v937 = vunpack.c.l.b16 %v208
      %v938 = vunpack.c.l.b16 %v209
      %v939 = vunpack.c.l.b16 %v211
      %v940 = vunpack.c.l.b16 %v212
      %v941 = vunpack.c.l.b16 %v214
      %v942 = vunpack.c.l.b16 %v215
      %v943 = vunpack.c.l.b16 %v217
      %v944 = vunpack.c.l.b16 %v218
      %v945 = vunpack.c.l.b16 %v220
      %v946 = vunpack.c.l.b16 %v221
      %v947 = vunpack.c.l.b16 %v223
      %v948 = vunpack.c.l.b16 %v224
      %v949 = vunpack.c.l.b16 %v226
      %v950 = vunpack.c.l.b16 %v227
      %v951 = vunpack.c.l.b16 %v229
      %v952 = vunpack.c.l.b16 %v230
      %v953 = vunpack.c.l.b16 %v232
      %v954 = vunpack.c.l.b16 %v233
      %v955 = vunpack.c.l.b16 %v235
      %v956 = vunpack.c.l.b16 %v236
      %v957 = vunpack.c.l.b16 %v238
      %v958 = vunpack.c.l.b16 %v239
      %v959 = vunpack.c.l.b16 %v241
      %v960 = vunpack.c.l.b16 %v242
      %v961 = vunpack.c.l.b16 %v244
      %v962 = vunpack.c.l.b16 %v245
      %v963 = vpack.c.b16 %v932, %v931
      %v964 = vpack.c.b16 %v934, %v933
      %v965 = vpack.c.b16 %v936, %v935
      %v966 = vpack.c.b16 %v938, %v937
      %v967 = vpack.c.b16 %v940, %v939
      %v968 = vpack.c.b16 %v942, %v941
      %v969 = vpack.c.b16 %v944, %v943
      %v970 = vpack.c.b16 %v946, %v945
      %v971 = vpack.c.b16 %v948, %v947
      %v972 = vpack.c.b16 %v950, %v949
      %v973 = vpack.c.b16 %v952, %v951
      %v974 = vpack.c.b16 %v954, %v953
      %v975 = vpack.c.b16 %v956, %v955
      %v976 = vpack.c.b16 %v958, %v957
      %v977 = vpack.c.b16 %v960, %v959
      %v978 = vpack.c.b16 %v962, %v961
      %v980 = vsel %vm685, %v963, 0
      %v983 = vsel %vm685, %v964, 0
      %v986 = vsel %vm685, %v965, 0
      %v989 = vsel %vm685, %v966, 0
      %v992 = vsel %vm685, %v967, 0
      %v995 = vsel %vm685, %v968, 0
      %v998 = vsel %vm685, %v969, 0
      %v1001 = vsel %vm685, %v970, 0
      %v1004 = vsel %vm685, %v971, 0
      %v1007 = vsel %vm685, %v972, 0
      %v1010 = vsel %vm685, %v973, 0
      %v1013 = vsel %vm685, %v974, 0
      %v1016 = vsel %vm685, %v975, 0
      %v1019 = vsel %vm685, %v976, 0
      %v1022 = vsel %vm685, %v977, 0
      %v1025 = vsel %vm685, %v978, 0
      %v1028 = vsel %vm734, %v247, 0
      %1030 = vmatprep.subr.bf16.mxu0 0
      %1031 = vmatpush1.bf16.msra.mxu0 0
      %1032 = vmatprep.subr.bf16.mxu0 0
      %1033 = vmatpush1.bf16.msra.mxu0 0
      %1034 = vmatprep.subr.bf16.mxu0 0
      %1035 = vmatpush1.bf16.msra.mxu0 0
      %1036 = vmatprep.subr.bf16.mxu0 0
      %1037 = vmatpush1.bf16.msra.mxu0 0
      %1038 = vmatprep.subr.bf16.mxu0 0
      %1039 = vmatpush1.bf16.msra.mxu0 0
      %1040 = vmatprep.subr.bf16.mxu0 0
      %1041 = vmatpush1.bf16.msra.mxu0 0
      %1042 = vmatprep.subr.bf16.mxu0 0
      %1043 = vmatpush1.bf16.msra.mxu0 0
      %1044 = vmatprep.subr.bf16.mxu0 0
      %1045 = vmatpush1.bf16.msra.mxu0 %v1028
      %1046 = vmatprep.subr.bf16.mxu0 0
      %1047 = vmatpush2.bf16.msra.mxu0 0
      %1048 = vmatprep.subr.bf16.mxu0 0
      %1049 = vmatpush2.bf16.msra.mxu0 0
      %1050 = vmatprep.subr.bf16.mxu0 0
      %1051 = vmatpush2.bf16.msra.mxu0 0
      %1052 = vmatprep.subr.bf16.mxu0 0
      %1053 = vmatpush2.bf16.msra.mxu0 0
      %1054 = vmatprep.subr.bf16.mxu0 0
      %1055 = vmatpush2.bf16.msra.mxu0 0
      %1056 = vmatprep.subr.bf16.mxu0 0
      %1057 = vmatpush2.bf16.msra.mxu0 0
      %1058 = vmatprep.subr.bf16.mxu0 0
      %1059 = vmatpush2.bf16.msra.mxu0 0
      %1060 = vmatprep.subr.bf16.mxu0 0
      %1061 = vmatpush2.bf16.msra.mxu0 0
      %1062 = vmatprep.mubr.bf16.mxu0 0
      %1063 = vmatmul.mubr.bf16.gmra.mxu0 %v980
      %v1064 = vpop.f32.mrf.mxu0
      %v1065 = vadd.f32 %v773, %v1064
      %v1066 = vpop.f32.mrf.mxu0
      %v1067 = vpop.f32.mrf.mxu0
      %v1068 = vadd.f32 %v776, %v1067
      %v1069 = vpop.f32.mrf.mxu0
      %1070 = vmatprep.mubr.bf16.mxu0 0
      %1071 = vmatmul.mubr.bf16.gmra.mxu0 %v983
      %v1072 = vpop.f32.mrf.mxu0
      %v1073 = vadd.f32 %v781, %v1072
      %v1074 = vpop.f32.mrf.mxu0
      %v1075 = vpop.f32.mrf.mxu0
      %v1076 = vadd.f32 %v784, %v1075
      %v1077 = vpop.f32.mrf.mxu0
      %1078 = vmatprep.mubr.bf16.mxu0 0
      %1079 = vmatmul.mubr.bf16.gmra.mxu0 %v986
      %v1080 = vpop.f32.mrf.mxu0
      %v1081 = vadd.f32 %v789, %v1080
      %v1082 = vpop.f32.mrf.mxu0
      %v1083 = vpop.f32.mrf.mxu0
      %v1084 = vadd.f32 %v792, %v1083
      %v1085 = vpop.f32.mrf.mxu0
      %1086 = vmatprep.mubr.bf16.mxu0 0
      %1087 = vmatmul.mubr.bf16.gmra.mxu0 %v989
      %v1088 = vpop.f32.mrf.mxu0
      %v1089 = vadd.f32 %v797, %v1088
      %v1090 = vpop.f32.mrf.mxu0
      %v1091 = vpop.f32.mrf.mxu0
      %v1092 = vadd.f32 %v800, %v1091
      %v1093 = vpop.f32.mrf.mxu0
      %1094 = vmatprep.mubr.bf16.mxu0 0
      %1095 = vmatmul.mubr.bf16.gmra.mxu0 %v992
      %v1096 = vpop.f32.mrf.mxu0
      %v1097 = vadd.f32 %v805, %v1096
      %v1098 = vpop.f32.mrf.mxu0
      %v1099 = vpop.f32.mrf.mxu0
      %v1100 = vadd.f32 %v808, %v1099
      %v1101 = vpop.f32.mrf.mxu0
      %1102 = vmatprep.mubr.bf16.mxu0 0
      %1103 = vmatmul.mubr.bf16.gmra.mxu0 %v995
      %v1104 = vpop.f32.mrf.mxu0
      %v1105 = vadd.f32 %v813, %v1104
      %v1106 = vpop.f32.mrf.mxu0
      %v1107 = vpop.f32.mrf.mxu0
      %v1108 = vadd.f32 %v816, %v1107
      %v1109 = vpop.f32.mrf.mxu0
      %1110 = vmatprep.mubr.bf16.mxu0 0
      %1111 = vmatmul.mubr.bf16.gmra.mxu0 %v998
      %v1112 = vpop.f32.mrf.mxu0
      %v1113 = vadd.f32 %v821, %v1112
      %v1114 = vpop.f32.mrf.mxu0
      %v1115 = vpop.f32.mrf.mxu0
      %v1116 = vadd.f32 %v824, %v1115
      %v1117 = vpop.f32.mrf.mxu0
      %1118 = vmatprep.mubr.bf16.mxu0 0
      %1119 = vmatmul.mubr.bf16.gmra.mxu0 %v1001
      %v1120 = vpop.f32.mrf.mxu0
      %v1121 = vadd.f32 %v829, %v1120
      %v1122 = vpop.f32.mrf.mxu0
      %v1123 = vpop.f32.mrf.mxu0
      %v1124 = vadd.f32 %v832, %v1123
      %v1125 = vpop.f32.mrf.mxu0
      %1126 = vmatprep.mubr.bf16.mxu0 0
      %1127 = vmatmul.mubr.bf16.gmra.mxu0 %v1004
      %v1128 = vpop.f32.mrf.mxu0
      %v1129 = vadd.f32 %v837, %v1128
      %v1130 = vpop.f32.mrf.mxu0
      %v1131 = vpop.f32.mrf.mxu0
      %v1132 = vadd.f32 %v840, %v1131
      %v1133 = vpop.f32.mrf.mxu0
      %1134 = vmatprep.mubr.bf16.mxu0 0
      %1135 = vmatmul.mubr.bf16.gmra.mxu0 %v1007
      %v1136 = vpop.f32.mrf.mxu0
      %v1137 = vadd.f32 %v845, %v1136
      %v1138 = vpop.f32.mrf.mxu0
      %v1139 = vpop.f32.mrf.mxu0
      %v1140 = vadd.f32 %v848, %v1139
      %v1141 = vpop.f32.mrf.mxu0
      %1142 = vmatprep.mubr.bf16.mxu0 0
      %1143 = vmatmul.mubr.bf16.gmra.mxu0 %v1010
      %v1144 = vpop.f32.mrf.mxu0
      %v1145 = vadd.f32 %v853, %v1144
      %v1146 = vpop.f32.mrf.mxu0
      %v1147 = vpop.f32.mrf.mxu0
      %v1148 = vadd.f32 %v856, %v1147
      %v1149 = vpop.f32.mrf.mxu0
      %1150 = vmatprep.mubr.bf16.mxu0 0
      %1151 = vmatmul.mubr.bf16.gmra.mxu0 %v1013
      %v1152 = vpop.f32.mrf.mxu0
      %v1153 = vadd.f32 %v861, %v1152
      %v1154 = vpop.f32.mrf.mxu0
      %v1155 = vpop.f32.mrf.mxu0
      %v1156 = vadd.f32 %v864, %v1155
      %v1157 = vpop.f32.mrf.mxu0
      %1158 = vmatprep.mubr.bf16.mxu0 0
      %1159 = vmatmul.mubr.bf16.gmra.mxu0 %v1016
      %v1160 = vpop.f32.mrf.mxu0
      %v1161 = vadd.f32 %v869, %v1160
      %v1162 = vpop.f32.mrf.mxu0
      %v1163 = vpop.f32.mrf.mxu0
      %v1164 = vadd.f32 %v872, %v1163
      %v1165 = vpop.f32.mrf.mxu0
      %1166 = vmatprep.mubr.bf16.mxu0 0
      %1167 = vmatmul.mubr.bf16.gmra.mxu0 %v1019
      %v1168 = vpop.f32.mrf.mxu0
      %v1169 = vadd.f32 %v877, %v1168
      %v1170 = vpop.f32.mrf.mxu0
      %v1171 = vpop.f32.mrf.mxu0
      %v1172 = vadd.f32 %v880, %v1171
      %v1173 = vpop.f32.mrf.mxu0
      %1174 = vmatprep.mubr.bf16.mxu0 0
      %1175 = vmatmul.mubr.bf16.gmra.mxu0 %v1022
      %v1176 = vpop.f32.mrf.mxu0
      %v1177 = vadd.f32 %v885, %v1176
      %v1178 = vpop.f32.mrf.mxu0
      %v1179 = vpop.f32.mrf.mxu0
      %v1180 = vadd.f32 %v888, %v1179
      %v1181 = vpop.f32.mrf.mxu0
      %1182 = vmatprep.mubr.bf16.mxu0 0
      %1183 = vmatmul.mubr.bf16.gmra.mxu0 %v1025
      %v1184 = vpop.f32.mrf.mxu0
      %v1185 = vadd.f32 %v893, %v1184
      %v1186 = vpop.f32.mrf.mxu0
      %v1187 = vpop.f32.mrf.mxu0
      %v1188 = vadd.f32 %v896, %v1187
      %v1189 = vpop.f32.mrf.mxu0
      %1190 = vdwg.mxu0
      %vm1207 = vcmask 1042432
      %vm1208 = vcmask 1046532
      %vm1209 = vmor %vm1207, %vm1208
      %v1210 = vrot.slane %v199, 5
      %v1211 = vrot.slane %v1210, 4
      %v1212 = vrot.slane %v200, 5
      %v1213 = vsel %vm1209, %v1211, %v1212
      %v1214 = vrot.slane %v1212, 4
      %v1215 = vrot.slane %v201, 5
      %v1216 = vsel %vm1209, %v1214, %v1215
      %v1217 = vrot.slane %v202, 5
      %v1218 = vrot.slane %v1217, 4
      %v1219 = vrot.slane %v203, 5
      %v1220 = vsel %vm1209, %v1218, %v1219
      %v1221 = vrot.slane %v1219, 4
      %v1222 = vrot.slane %v204, 5
      %v1223 = vsel %vm1209, %v1221, %v1222
      %v1224 = vrot.slane %v205, 5
      %v1225 = vrot.slane %v1224, 4
      %v1226 = vrot.slane %v206, 5
      %v1227 = vsel %vm1209, %v1225, %v1226
      %v1228 = vrot.slane %v1226, 4
      %v1229 = vrot.slane %v207, 5
      %v1230 = vsel %vm1209, %v1228, %v1229
      %v1231 = vrot.slane %v208, 5
      %v1232 = vrot.slane %v1231, 4
      %v1233 = vrot.slane %v209, 5
      %v1234 = vsel %vm1209, %v1232, %v1233
      %v1235 = vrot.slane %v1233, 4
      %v1236 = vrot.slane %v210, 5
      %v1237 = vsel %vm1209, %v1235, %v1236
      %v1238 = vrot.slane %v211, 5
      %v1239 = vrot.slane %v1238, 4
      %v1240 = vrot.slane %v212, 5
      %v1241 = vsel %vm1209, %v1239, %v1240
      %v1242 = vrot.slane %v1240, 4
      %v1243 = vrot.slane %v213, 5
      %v1244 = vsel %vm1209, %v1242, %v1243
      %v1245 = vrot.slane %v214, 5
      %v1246 = vrot.slane %v1245, 4
      %v1247 = vrot.slane %v215, 5
      %v1248 = vsel %vm1209, %v1246, %v1247
      %v1249 = vrot.slane %v1247, 4
      %v1250 = vrot.slane %v216, 5
      %v1251 = vsel %vm1209, %v1249, %v1250
      %v1252 = vrot.slane %v217, 5
      %v1253 = vrot.slane %v1252, 4
      %v1254 = vrot.slane %v218, 5
      %v1255 = vsel %vm1209, %v1253, %v1254
      %v1256 = vrot.slane %v1254, 4
      %v1257 = vrot.slane %v219, 5
      %v1258 = vsel %vm1209, %v1256, %v1257
      %v1259 = vrot.slane %v220, 5
      %v1260 = vrot.slane %v1259, 4
      %v1261 = vrot.slane %v221, 5
      %v1262 = vsel %vm1209, %v1260, %v1261
      %v1263 = vrot.slane %v1261, 4
      %v1264 = vrot.slane %v222, 5
      %v1265 = vsel %vm1209, %v1263, %v1264
      %v1266 = vrot.slane %v223, 5
      %v1267 = vrot.slane %v1266, 4
      %v1268 = vrot.slane %v224, 5
      %v1269 = vsel %vm1209, %v1267, %v1268
      %v1270 = vrot.slane %v1268, 4
      %v1271 = vrot.slane %v225, 5
      %v1272 = vsel %vm1209, %v1270, %v1271
      %v1273 = vrot.slane %v226, 5
      %v1274 = vrot.slane %v1273, 4
      %v1275 = vrot.slane %v227, 5
      %v1276 = vsel %vm1209, %v1274, %v1275
      %v1277 = vrot.slane %v1275, 4
      %v1278 = vrot.slane %v228, 5
      %v1279 = vsel %vm1209, %v1277, %v1278
      %v1280 = vrot.slane %v229, 5
      %v1281 = vrot.slane %v1280, 4
      %v1282 = vrot.slane %v230, 5
      %v1283 = vsel %vm1209, %v1281, %v1282
      %v1284 = vrot.slane %v1282, 4
      %v1285 = vrot.slane %v231, 5
      %v1286 = vsel %vm1209, %v1284, %v1285
      %v1287 = vrot.slane %v232, 5
      %v1288 = vrot.slane %v1287, 4
      %v1289 = vrot.slane %v233, 5
      %v1290 = vsel %vm1209, %v1288, %v1289
      %v1291 = vrot.slane %v1289, 4
      %v1292 = vrot.slane %v234, 5
      %v1293 = vsel %vm1209, %v1291, %v1292
      %v1294 = vrot.slane %v235, 5
      %v1295 = vrot.slane %v1294, 4
      %v1296 = vrot.slane %v236, 5
      %v1297 = vsel %vm1209, %v1295, %v1296
      %v1298 = vrot.slane %v1296, 4
      %v1299 = vrot.slane %v237, 5
      %v1300 = vsel %vm1209, %v1298, %v1299
      %v1301 = vrot.slane %v238, 5
      %v1302 = vrot.slane %v1301, 4
      %v1303 = vrot.slane %v239, 5
      %v1304 = vsel %vm1209, %v1302, %v1303
      %v1305 = vrot.slane %v1303, 4
      %v1306 = vrot.slane %v240, 5
      %v1307 = vsel %vm1209, %v1305, %v1306
      %v1308 = vrot.slane %v241, 5
      %v1309 = vrot.slane %v1308, 4
      %v1310 = vrot.slane %v242, 5
      %v1311 = vsel %vm1209, %v1309, %v1310
      %v1312 = vrot.slane %v1310, 4
      %v1313 = vrot.slane %v243, 5
      %v1314 = vsel %vm1209, %v1312, %v1313
      %v1315 = vrot.slane %v244, 5
      %v1316 = vrot.slane %v1315, 4
      %v1317 = vrot.slane %v245, 5
      %v1318 = vsel %vm1209, %v1316, %v1317
      %v1319 = vrot.slane %v1317, 4
      %v1320 = vrot.slane %v246, 5
      %v1321 = vsel %vm1209, %v1319, %v1320
      %s1322 = scalar_lea.vmem %s1, 4
      %v1323 = vld [vmem:[%s1322] sm:$0x3]
      %v1324 = vunpack.c.l.b16 %v1213
      %v1325 = vunpack.c.l.b16 %v1216
      %v1326 = vunpack.c.l.b16 %v1220
      %v1327 = vunpack.c.l.b16 %v1223
      %v1328 = vunpack.c.l.b16 %v1227
      %v1329 = vunpack.c.l.b16 %v1230
      %v1330 = vunpack.c.l.b16 %v1234
      %v1331 = vunpack.c.l.b16 %v1237
      %v1332 = vunpack.c.l.b16 %v1241
      %v1333 = vunpack.c.l.b16 %v1244
      %v1334 = vunpack.c.l.b16 %v1248
      %v1335 = vunpack.c.l.b16 %v1251
      %v1336 = vunpack.c.l.b16 %v1255
      %v1337 = vunpack.c.l.b16 %v1258
      %v1338 = vunpack.c.l.b16 %v1262
      %v1339 = vunpack.c.l.b16 %v1265
      %v1340 = vunpack.c.l.b16 %v1269
      %v1341 = vunpack.c.l.b16 %v1272
      %v1342 = vunpack.c.l.b16 %v1276
      %v1343 = vunpack.c.l.b16 %v1279
      %v1344 = vunpack.c.l.b16 %v1283
      %v1345 = vunpack.c.l.b16 %v1286
      %v1346 = vunpack.c.l.b16 %v1290
      %v1347 = vunpack.c.l.b16 %v1293
      %v1348 = vunpack.c.l.b16 %v1297
      %v1349 = vunpack.c.l.b16 %v1300
      %v1350 = vunpack.c.l.b16 %v1304
      %v1351 = vunpack.c.l.b16 %v1307
      %v1352 = vunpack.c.l.b16 %v1311
      %v1353 = vunpack.c.l.b16 %v1314
      %v1354 = vunpack.c.l.b16 %v1318
      %v1355 = vunpack.c.l.b16 %v1321
      %v1356 = vpack.c.b16 %v1325, %v1324
      %v1357 = vpack.c.b16 %v1327, %v1326
      %v1358 = vpack.c.b16 %v1329, %v1328
      %v1359 = vpack.c.b16 %v1331, %v1330
      %v1360 = vpack.c.b16 %v1333, %v1332
      %v1361 = vpack.c.b16 %v1335, %v1334
      %v1362 = vpack.c.b16 %v1337, %v1336
      %v1363 = vpack.c.b16 %v1339, %v1338
      %v1364 = vpack.c.b16 %v1341, %v1340
      %v1365 = vpack.c.b16 %v1343, %v1342
      %v1366 = vpack.c.b16 %v1345, %v1344
      %v1367 = vpack.c.b16 %v1347, %v1346
      %v1368 = vpack.c.b16 %v1349, %v1348
      %v1369 = vpack.c.b16 %v1351, %v1350
      %v1370 = vpack.c.b16 %v1353, %v1352
      %v1371 = vpack.c.b16 %v1355, %v1354
      %v1373 = vsel %vm685, %v1356, 0
      %v1376 = vsel %vm685, %v1357, 0
      %v1379 = vsel %vm685, %v1358, 0
      %v1382 = vsel %vm685, %v1359, 0
      %v1385 = vsel %vm685, %v1360, 0
      %v1388 = vsel %vm685, %v1361, 0
      %v1391 = vsel %vm685, %v1362, 0
      %v1394 = vsel %vm685, %v1363, 0
      %v1397 = vsel %vm685, %v1364, 0
      %v1400 = vsel %vm685, %v1365, 0
      %v1403 = vsel %vm685, %v1366, 0
      %v1406 = vsel %vm685, %v1367, 0
      %v1409 = vsel %vm685, %v1368, 0
      %v1412 = vsel %vm685, %v1369, 0
      %v1415 = vsel %vm685, %v1370, 0
      %v1418 = vsel %vm685, %v1371, 0
      %v1421 = vsel %vm734, %v1323, 0
      %1423 = vmatprep.subr.bf16.mxu0 0
      %1424 = vmatpush1.bf16.msra.mxu0 0
      %1425 = vmatprep.subr.bf16.mxu0 0
      %1426 = vmatpush1.bf16.msra.mxu0 0
      %1427 = vmatprep.subr.bf16.mxu0 0
      %1428 = vmatpush1.bf16.msra.mxu0 0
      %1429 = vmatprep.subr.bf16.mxu0 0
      %1430 = vmatpush1.bf16.msra.mxu0 0
      %1431 = vmatprep.subr.bf16.mxu0 0
      %1432 = vmatpush1.bf16.msra.mxu0 0
      %1433 = vmatprep.subr.bf16.mxu0 0
      %1434 = vmatpush1.bf16.msra.mxu0 0
      %1435 = vmatprep.subr.bf16.mxu0 0
      %1436 = vmatpush1.bf16.msra.mxu0 0
      %1437 = vmatprep.subr.bf16.mxu0 0
      %1438 = vmatpush1.bf16.msra.mxu0 %v1421
      %1439 = vmatprep.subr.bf16.mxu0 0
      %1440 = vmatpush2.bf16.msra.mxu0 0
      %1441 = vmatprep.subr.bf16.mxu0 0
      %1442 = vmatpush2.bf16.msra.mxu0 0
      %1443 = vmatprep.subr.bf16.mxu0 0
      %1444 = vmatpush2.bf16.msra.mxu0 0
      %1445 = vmatprep.subr.bf16.mxu0 0
      %1446 = vmatpush2.bf16.msra.mxu0 0
      %1447 = vmatprep.subr.bf16.mxu0 0
      %1448 = vmatpush2.bf16.msra.mxu0 0
      %1449 = vmatprep.subr.bf16.mxu0 0
      %1450 = vmatpush2.bf16.msra.mxu0 0
      %1451 = vmatprep.subr.bf16.mxu0 0
      %1452 = vmatpush2.bf16.msra.mxu0 0
      %1453 = vmatprep.subr.bf16.mxu0 0
      %1454 = vmatpush2.bf16.msra.mxu0 0
      %1455 = vmatprep.mubr.bf16.mxu0 0
      %1456 = vmatmul.mubr.bf16.gmra.mxu0 %v1373
      %v1457 = vpop.f32.mrf.mxu0
      %v1458 = vadd.f32 0.0, %v1457
      %v1459 = vpop.f32.mrf.mxu0
      %v1460 = vpop.f32.mrf.mxu0
      %v1461 = vadd.f32 0.0, %v1460
      %v1462 = vpop.f32.mrf.mxu0
      %1463 = vmatprep.mubr.bf16.mxu0 0
      %1464 = vmatmul.mubr.bf16.gmra.mxu0 %v1376
      %v1465 = vpop.f32.mrf.mxu0
      %v1466 = vadd.f32 0.0, %v1465
      %v1467 = vpop.f32.mrf.mxu0
      %v1468 = vpop.f32.mrf.mxu0
      %v1469 = vadd.f32 0.0, %v1468
      %v1470 = vpop.f32.mrf.mxu0
      %1471 = vmatprep.mubr.bf16.mxu0 0
      %1472 = vmatmul.mubr.bf16.gmra.mxu0 %v1379
      %v1473 = vpop.f32.mrf.mxu0
      %v1474 = vadd.f32 0.0, %v1473
      %v1475 = vpop.f32.mrf.mxu0
      %v1476 = vpop.f32.mrf.mxu0
      %v1477 = vadd.f32 0.0, %v1476
      %v1478 = vpop.f32.mrf.mxu0
      %1479 = vmatprep.mubr.bf16.mxu0 0
      %1480 = vmatmul.mubr.bf16.gmra.mxu0 %v1382
      %v1481 = vpop.f32.mrf.mxu0
      %v1482 = vadd.f32 0.0, %v1481
      %v1483 = vpop.f32.mrf.mxu0
      %v1484 = vpop.f32.mrf.mxu0
      %v1485 = vadd.f32 0.0, %v1484
      %v1486 = vpop.f32.mrf.mxu0
      %1487 = vmatprep.mubr.bf16.mxu0 0
      %1488 = vmatmul.mubr.bf16.gmra.mxu0 %v1385
      %v1489 = vpop.f32.mrf.mxu0
      %v1490 = vadd.f32 0.0, %v1489
      %v1491 = vpop.f32.mrf.mxu0
      %v1492 = vpop.f32.mrf.mxu0
      %v1493 = vadd.f32 0.0, %v1492
      %v1494 = vpop.f32.mrf.mxu0
      %1495 = vmatprep.mubr.bf16.mxu0 0
      %1496 = vmatmul.mubr.bf16.gmra.mxu0 %v1388
      %v1497 = vpop.f32.mrf.mxu0
      %v1498 = vadd.f32 0.0, %v1497
      %v1499 = vpop.f32.mrf.mxu0
      %v1500 = vpop.f32.mrf.mxu0
      %v1501 = vadd.f32 0.0, %v1500
      %v1502 = vpop.f32.mrf.mxu0
      %1503 = vmatprep.mubr.bf16.mxu0 0
      %1504 = vmatmul.mubr.bf16.gmra.mxu0 %v1391
      %v1505 = vpop.f32.mrf.mxu0
      %v1506 = vadd.f32 0.0, %v1505
      %v1507 = vpop.f32.mrf.mxu0
      %v1508 = vpop.f32.mrf.mxu0
      %v1509 = vadd.f32 0.0, %v1508
      %v1510 = vpop.f32.mrf.mxu0
      %1511 = vmatprep.mubr.bf16.mxu0 0
      %1512 = vmatmul.mubr.bf16.gmra.mxu0 %v1394
      %v1513 = vpop.f32.mrf.mxu0
      %v1514 = vadd.f32 0.0, %v1513
      %v1515 = vpop.f32.mrf.mxu0
      %v1516 = vpop.f32.mrf.mxu0
      %v1517 = vadd.f32 0.0, %v1516
      %v1518 = vpop.f32.mrf.mxu0
      %1519 = vmatprep.mubr.bf16.mxu0 0
      %1520 = vmatmul.mubr.bf16.gmra.mxu0 %v1397
      %v1521 = vpop.f32.mrf.mxu0
      %v1522 = vadd.f32 0.0, %v1521
      %v1523 = vpop.f32.mrf.mxu0
      %v1524 = vpop.f32.mrf.mxu0
      %v1525 = vadd.f32 0.0, %v1524
      %v1526 = vpop.f32.mrf.mxu0
      %1527 = vmatprep.mubr.bf16.mxu0 0
      %1528 = vmatmul.mubr.bf16.gmra.mxu0 %v1400
      %v1529 = vpop.f32.mrf.mxu0
      %v1530 = vadd.f32 0.0, %v1529
      %v1531 = vpop.f32.mrf.mxu0
      %v1532 = vpop.f32.mrf.mxu0
      %v1533 = vadd.f32 0.0, %v1532
      %v1534 = vpop.f32.mrf.mxu0
      %1535 = vmatprep.mubr.bf16.mxu0 0
      %1536 = vmatmul.mubr.bf16.gmra.mxu0 %v1403
      %v1537 = vpop.f32.mrf.mxu0
      %v1538 = vadd.f32 0.0, %v1537
      %v1539 = vpop.f32.mrf.mxu0
      %v1540 = vpop.f32.mrf.mxu0
      %v1541 = vadd.f32 0.0, %v1540
      %v1542 = vpop.f32.mrf.mxu0
      %1543 = vmatprep.mubr.bf16.mxu0 0
      %1544 = vmatmul.mubr.bf16.gmra.mxu0 %v1406
      %v1545 = vpop.f32.mrf.mxu0
      %v1546 = vadd.f32 0.0, %v1545
      %v1547 = vpop.f32.mrf.mxu0
      %v1548 = vpop.f32.mrf.mxu0
      %v1549 = vadd.f32 0.0, %v1548
      %v1550 = vpop.f32.mrf.mxu0
      %1551 = vmatprep.mubr.bf16.mxu0 0
      %1552 = vmatmul.mubr.bf16.gmra.mxu0 %v1409
      %v1553 = vpop.f32.mrf.mxu0
      %v1554 = vadd.f32 0.0, %v1553
      %v1555 = vpop.f32.mrf.mxu0
      %v1556 = vpop.f32.mrf.mxu0
      %v1557 = vadd.f32 0.0, %v1556
      %v1558 = vpop.f32.mrf.mxu0
      %1559 = vmatprep.mubr.bf16.mxu0 0
      %1560 = vmatmul.mubr.bf16.gmra.mxu0 %v1412
      %v1561 = vpop.f32.mrf.mxu0
      %v1562 = vadd.f32 0.0, %v1561
      %v1563 = vpop.f32.mrf.mxu0
      %v1564 = vpop.f32.mrf.mxu0
      %v1565 = vadd.f32 0.0, %v1564
      %v1566 = vpop.f32.mrf.mxu0
      %1567 = vmatprep.mubr.bf16.mxu0 0
      %1568 = vmatmul.mubr.bf16.gmra.mxu0 %v1415
      %v1569 = vpop.f32.mrf.mxu0
      %v1570 = vadd.f32 0.0, %v1569
      %v1571 = vpop.f32.mrf.mxu0
      %v1572 = vpop.f32.mrf.mxu0
      %v1573 = vadd.f32 0.0, %v1572
      %v1574 = vpop.f32.mrf.mxu0
      %1575 = vmatprep.mubr.bf16.mxu0 0
      %1576 = vmatmul.mubr.bf16.gmra.mxu0 %v1418
      %v1577 = vpop.f32.mrf.mxu0
      %v1578 = vadd.f32 0.0, %v1577
      %v1579 = vpop.f32.mrf.mxu0
      %v1580 = vpop.f32.mrf.mxu0
      %v1581 = vadd.f32 0.0, %v1580
      %v1582 = vpop.f32.mrf.mxu0
      %1583 = vdwg.mxu0
      %v1584 = vadd.f32 %v1065, %v1458
      %v1585 = vadd.f32 %v1068, %v1461
      %v1586 = vadd.f32 %v1073, %v1466
      %v1587 = vadd.f32 %v1076, %v1469
      %v1588 = vadd.f32 %v1081, %v1474
      %v1589 = vadd.f32 %v1084, %v1477
      %v1590 = vadd.f32 %v1089, %v1482
      %v1591 = vadd.f32 %v1092, %v1485
      %v1592 = vadd.f32 %v1097, %v1490
      %v1593 = vadd.f32 %v1100, %v1493
      %v1594 = vadd.f32 %v1105, %v1498
      %v1595 = vadd.f32 %v1108, %v1501
      %v1596 = vadd.f32 %v1113, %v1506
      %v1597 = vadd.f32 %v1116, %v1509
      %v1598 = vadd.f32 %v1121, %v1514
      %v1599 = vadd.f32 %v1124, %v1517
      %v1600 = vadd.f32 %v1129, %v1522
      %v1601 = vadd.f32 %v1132, %v1525
      %v1602 = vadd.f32 %v1137, %v1530
      %v1603 = vadd.f32 %v1140, %v1533
      %v1604 = vadd.f32 %v1145, %v1538
      %v1605 = vadd.f32 %v1148, %v1541
      %v1606 = vadd.f32 %v1153, %v1546
      %v1607 = vadd.f32 %v1156, %v1549
      %v1608 = vadd.f32 %v1161, %v1554
      %v1609 = vadd.f32 %v1164, %v1557
      %v1610 = vadd.f32 %v1169, %v1562
      %v1611 = vadd.f32 %v1172, %v1565
      %v1612 = vadd.f32 %v1177, %v1570
      %v1613 = vadd.f32 %v1180, %v1573
      %v1614 = vadd.f32 %v1185, %v1578
      %v1615 = vadd.f32 %v1188, %v1581
      %s1616 = sadd.s32 %s195, 1
      %s1617 = smul.u32 %s1616, 3
      %s1618 = smul.addr %s1617, 4
      %s1619 = scalar_lea.vmem %s183, %s1618
      %v1620 = vld [vmem:[%s1619] sm:$0xf]
      %v1621 = vld [vmem:[%s1619 + $0x4] sm:$0xf]
      %v1622 = vld [vmem:[%s1619 + $0x8] sm:$0x1]
      %v1623 = vld [vmem:[%s1619 + $0xc] sm:$0xf]
      %v1624 = vld [vmem:[%s1619 + $0x10] sm:$0xf]
      %v1625 = vld [vmem:[%s1619 + $0x14] sm:$0x1]
      %v1626 = vld [vmem:[%s1619 + $0x18] sm:$0xf]
      %v1627 = vld [vmem:[%s1619 + $0x1c] sm:$0xf]
      %v1628 = vld [vmem:[%s1619 + $0x20] sm:$0x1]
      %v1629 = vld [vmem:[%s1619 + $0x24] sm:$0xf]
      %v1630 = vld [vmem:[%s1619 + $0x28] sm:$0xf]
      %v1631 = vld [vmem:[%s1619 + $0x2c] sm:$0x1]
      %v1632 = vld [vmem:[%s1619 + $0x30] sm:$0xf]
      %v1633 = vld [vmem:[%s1619 + $0x34] sm:$0xf]
      %v1634 = vld [vmem:[%s1619 + $0x38] sm:$0x1]
      %v1635 = vld [vmem:[%s1619 + $0x3c] sm:$0xf]
      %v1636 = vld [vmem:[%s1619 + $0x40] sm:$0xf]
      %v1637 = vld [vmem:[%s1619 + $0x44] sm:$0x1]
      %v1638 = vld [vmem:[%s1619 + $0x48] sm:$0xf]
      %v1639 = vld [vmem:[%s1619 + $0x4c] sm:$0xf]
      %v1640 = vld [vmem:[%s1619 + $0x50] sm:$0x1]
      %v1641 = vld [vmem:[%s1619 + $0x54] sm:$0xf]
      %v1642 = vld [vmem:[%s1619 + $0x58] sm:$0xf]
      %v1643 = vld [vmem:[%s1619 + $0x5c] sm:$0x1]
      %v1644 = vld [vmem:[%s1619 + $0x60] sm:$0xf]
      %v1645 = vld [vmem:[%s1619 + $0x64] sm:$0xf]
      %v1646 = vld [vmem:[%s1619 + $0x68] sm:$0x1]
      %v1647 = vld [vmem:[%s1619 + $0x6c] sm:$0xf]
      %v1648 = vld [vmem:[%s1619 + $0x70] sm:$0xf]
      %v1649 = vld [vmem:[%s1619 + $0x74] sm:$0x1]
      %v1650 = vld [vmem:[%s1619 + $0x78] sm:$0xf]
      %v1651 = vld [vmem:[%s1619 + $0x7c] sm:$0xf]
      %v1652 = vld [vmem:[%s1619 + $0x80] sm:$0x1]
      %v1653 = vld [vmem:[%s1619 + $0x84] sm:$0xf]
      %v1654 = vld [vmem:[%s1619 + $0x88] sm:$0xf]
      %v1655 = vld [vmem:[%s1619 + $0x8c] sm:$0x1]
      %v1656 = vld [vmem:[%s1619 + $0x90] sm:$0xf]
      %v1657 = vld [vmem:[%s1619 + $0x94] sm:$0xf]
      %v1658 = vld [vmem:[%s1619 + $0x98] sm:$0x1]
      %v1659 = vld [vmem:[%s1619 + $0x9c] sm:$0xf]
      %v1660 = vld [vmem:[%s1619 + $0xa0] sm:$0xf]
      %v1661 = vld [vmem:[%s1619 + $0xa4] sm:$0x1]
      %v1662 = vld [vmem:[%s1619 + $0xa8] sm:$0xf]
      %v1663 = vld [vmem:[%s1619 + $0xac] sm:$0xf]
      %v1664 = vld [vmem:[%s1619 + $0xb0] sm:$0x1]
      %v1665 = vld [vmem:[%s1619 + $0xb4] sm:$0xf]
      %v1666 = vld [vmem:[%s1619 + $0xb8] sm:$0xf]
      %v1667 = vld [vmem:[%s1619 + $0xbc] sm:$0x1]
      %s1668 = scalar_lea.vmem %s1, 6
      %v1669 = vld [vmem:[%s1668] sm:$0x3]
      %v1702 = vunpack.c.l.b16 %v1620
      %v1703 = vunpack.c.l.b16 %v1621
      %v1704 = vunpack.c.l.b16 %v1623
      %v1705 = vunpack.c.l.b16 %v1624
      %v1706 = vunpack.c.l.b16 %v1626
      %v1707 = vunpack.c.l.b16 %v1627
      %v1708 = vunpack.c.l.b16 %v1629
      %v1709 = vunpack.c.l.b16 %v1630
      %v1710 = vunpack.c.l.b16 %v1632
      %v1711 = vunpack.c.l.b16 %v1633
      %v1712 = vunpack.c.l.b16 %v1635
      %v1713 = vunpack.c.l.b16 %v1636
      %v1714 = vunpack.c.l.b16 %v1638
      %v1715 = vunpack.c.l.b16 %v1639
      %v1716 = vunpack.c.l.b16 %v1641
      %v1717 = vunpack.c.l.b16 %v1642
      %v1718 = vunpack.c.l.b16 %v1644
      %v1719 = vunpack.c.l.b16 %v1645
      %v1720 = vunpack.c.l.b16 %v1647
      %v1721 = vunpack.c.l.b16 %v1648
      %v1722 = vunpack.c.l.b16 %v1650
      %v1723 = vunpack.c.l.b16 %v1651
      %v1724 = vunpack.c.l.b16 %v1653
      %v1725 = vunpack.c.l.b16 %v1654
      %v1726 = vunpack.c.l.b16 %v1656
      %v1727 = vunpack.c.l.b16 %v1657
      %v1728 = vunpack.c.l.b16 %v1659
      %v1729 = vunpack.c.l.b16 %v1660
      %v1730 = vunpack.c.l.b16 %v1662
      %v1731 = vunpack.c.l.b16 %v1663
      %v1732 = vunpack.c.l.b16 %v1665
      %v1733 = vunpack.c.l.b16 %v1666
      %v1734 = vpack.c.b16 %v1703, %v1702
      %v1735 = vpack.c.b16 %v1705, %v1704
      %v1736 = vpack.c.b16 %v1707, %v1706
      %v1737 = vpack.c.b16 %v1709, %v1708
      %v1738 = vpack.c.b16 %v1711, %v1710
      %v1739 = vpack.c.b16 %v1713, %v1712
      %v1740 = vpack.c.b16 %v1715, %v1714
      %v1741 = vpack.c.b16 %v1717, %v1716
      %v1742 = vpack.c.b16 %v1719, %v1718
      %v1743 = vpack.c.b16 %v1721, %v1720
      %v1744 = vpack.c.b16 %v1723, %v1722
      %v1745 = vpack.c.b16 %v1725, %v1724
      %v1746 = vpack.c.b16 %v1727, %v1726
      %v1747 = vpack.c.b16 %v1729, %v1728
      %v1748 = vpack.c.b16 %v1731, %v1730
      %v1749 = vpack.c.b16 %v1733, %v1732
      %v1751 = vsel %vm685, %v1734, 0
      %v1754 = vsel %vm685, %v1735, 0
      %v1757 = vsel %vm685, %v1736, 0
      %v1760 = vsel %vm685, %v1737, 0
      %v1763 = vsel %vm685, %v1738, 0
      %v1766 = vsel %vm685, %v1739, 0
      %v1769 = vsel %vm685, %v1740, 0
      %v1772 = vsel %vm685, %v1741, 0
      %v1775 = vsel %vm685, %v1742, 0
      %v1778 = vsel %vm685, %v1743, 0
      %v1781 = vsel %vm685, %v1744, 0
      %v1784 = vsel %vm685, %v1745, 0
      %v1787 = vsel %vm685, %v1746, 0
      %v1790 = vsel %vm685, %v1747, 0
      %v1793 = vsel %vm685, %v1748, 0
      %v1796 = vsel %vm685, %v1749, 0
      %v1799 = vsel %vm734, %v1669, 0
      %1801 = vmatprep.subr.bf16.mxu0 0
      %1802 = vmatpush1.bf16.msra.mxu0 0
      %1803 = vmatprep.subr.bf16.mxu0 0
      %1804 = vmatpush1.bf16.msra.mxu0 0
      %1805 = vmatprep.subr.bf16.mxu0 0
      %1806 = vmatpush1.bf16.msra.mxu0 0
      %1807 = vmatprep.subr.bf16.mxu0 0
      %1808 = vmatpush1.bf16.msra.mxu0 0
      %1809 = vmatprep.subr.bf16.mxu0 0
      %1810 = vmatpush1.bf16.msra.mxu0 0
      %1811 = vmatprep.subr.bf16.mxu0 0
      %1812 = vmatpush1.bf16.msra.mxu0 0
      %1813 = vmatprep.subr.bf16.mxu0 0
      %1814 = vmatpush1.bf16.msra.mxu0 0
      %1815 = vmatprep.subr.bf16.mxu0 0
      %1816 = vmatpush1.bf16.msra.mxu0 %v1799
      %1817 = vmatprep.subr.bf16.mxu0 0
      %1818 = vmatpush2.bf16.msra.mxu0 0
      %1819 = vmatprep.subr.bf16.mxu0 0
      %1820 = vmatpush2.bf16.msra.mxu0 0
      %1821 = vmatprep.subr.bf16.mxu0 0
      %1822 = vmatpush2.bf16.msra.mxu0 0
      %1823 = vmatprep.subr.bf16.mxu0 0
      %1824 = vmatpush2.bf16.msra.mxu0 0
      %1825 = vmatprep.subr.bf16.mxu0 0
      %1826 = vmatpush2.bf16.msra.mxu0 0
      %1827 = vmatprep.subr.bf16.mxu0 0
      %1828 = vmatpush2.bf16.msra.mxu0 0
      %1829 = vmatprep.subr.bf16.mxu0 0
      %1830 = vmatpush2.bf16.msra.mxu0 0
      %1831 = vmatprep.subr.bf16.mxu0 0
      %1832 = vmatpush2.bf16.msra.mxu0 0
      %1833 = vmatprep.mubr.bf16.mxu0 0
      %1834 = vmatmul.mubr.bf16.gmra.mxu0 %v1751
      %v1835 = vpop.f32.mrf.mxu0
      %v1836 = vadd.f32 0.0, %v1835
      %v1837 = vpop.f32.mrf.mxu0
      %v1838 = vpop.f32.mrf.mxu0
      %v1839 = vadd.f32 0.0, %v1838
      %v1840 = vpop.f32.mrf.mxu0
      %1841 = vmatprep.mubr.bf16.mxu0 0
      %1842 = vmatmul.mubr.bf16.gmra.mxu0 %v1754
      %v1843 = vpop.f32.mrf.mxu0
      %v1844 = vadd.f32 0.0, %v1843
      %v1845 = vpop.f32.mrf.mxu0
      %v1846 = vpop.f32.mrf.mxu0
      %v1847 = vadd.f32 0.0, %v1846
      %v1848 = vpop.f32.mrf.mxu0
      %1849 = vmatprep.mubr.bf16.mxu0 0
      %1850 = vmatmul.mubr.bf16.gmra.mxu0 %v1757
      %v1851 = vpop.f32.mrf.mxu0
      %v1852 = vadd.f32 0.0, %v1851
      %v1853 = vpop.f32.mrf.mxu0
      %v1854 = vpop.f32.mrf.mxu0
      %v1855 = vadd.f32 0.0, %v1854
      %v1856 = vpop.f32.mrf.mxu0
      %1857 = vmatprep.mubr.bf16.mxu0 0
      %1858 = vmatmul.mubr.bf16.gmra.mxu0 %v1760
      %v1859 = vpop.f32.mrf.mxu0
      %v1860 = vadd.f32 0.0, %v1859
      %v1861 = vpop.f32.mrf.mxu0
      %v1862 = vpop.f32.mrf.mxu0
      %v1863 = vadd.f32 0.0, %v1862
      %v1864 = vpop.f32.mrf.mxu0
      %1865 = vmatprep.mubr.bf16.mxu0 0
      %1866 = vmatmul.mubr.bf16.gmra.mxu0 %v1763
      %v1867 = vpop.f32.mrf.mxu0
      %v1868 = vadd.f32 0.0, %v1867
      %v1869 = vpop.f32.mrf.mxu0
      %v1870 = vpop.f32.mrf.mxu0
      %v1871 = vadd.f32 0.0, %v1870
      %v1872 = vpop.f32.mrf.mxu0
      %1873 = vmatprep.mubr.bf16.mxu0 0
      %1874 = vmatmul.mubr.bf16.gmra.mxu0 %v1766
      %v1875 = vpop.f32.mrf.mxu0
      %v1876 = vadd.f32 0.0, %v1875
      %v1877 = vpop.f32.mrf.mxu0
      %v1878 = vpop.f32.mrf.mxu0
      %v1879 = vadd.f32 0.0, %v1878
      %v1880 = vpop.f32.mrf.mxu0
      %1881 = vmatprep.mubr.bf16.mxu0 0
      %1882 = vmatmul.mubr.bf16.gmra.mxu0 %v1769
      %v1883 = vpop.f32.mrf.mxu0
      %v1884 = vadd.f32 0.0, %v1883
      %v1885 = vpop.f32.mrf.mxu0
      %v1886 = vpop.f32.mrf.mxu0
      %v1887 = vadd.f32 0.0, %v1886
      %v1888 = vpop.f32.mrf.mxu0
      %1889 = vmatprep.mubr.bf16.mxu0 0
      %1890 = vmatmul.mubr.bf16.gmra.mxu0 %v1772
      %v1891 = vpop.f32.mrf.mxu0
      %v1892 = vadd.f32 0.0, %v1891
      %v1893 = vpop.f32.mrf.mxu0
      %v1894 = vpop.f32.mrf.mxu0
      %v1895 = vadd.f32 0.0, %v1894
      %v1896 = vpop.f32.mrf.mxu0
      %1897 = vmatprep.mubr.bf16.mxu0 0
      %1898 = vmatmul.mubr.bf16.gmra.mxu0 %v1775
      %v1899 = vpop.f32.mrf.mxu0
      %v1900 = vadd.f32 0.0, %v1899
      %v1901 = vpop.f32.mrf.mxu0
      %v1902 = vpop.f32.mrf.mxu0
      %v1903 = vadd.f32 0.0, %v1902
      %v1904 = vpop.f32.mrf.mxu0
      %1905 = vmatprep.mubr.bf16.mxu0 0
      %1906 = vmatmul.mubr.bf16.gmra.mxu0 %v1778
      %v1907 = vpop.f32.mrf.mxu0
      %v1908 = vadd.f32 0.0, %v1907
      %v1909 = vpop.f32.mrf.mxu0
      %v1910 = vpop.f32.mrf.mxu0
      %v1911 = vadd.f32 0.0, %v1910
      %v1912 = vpop.f32.mrf.mxu0
      %1913 = vmatprep.mubr.bf16.mxu0 0
      %1914 = vmatmul.mubr.bf16.gmra.mxu0 %v1781
      %v1915 = vpop.f32.mrf.mxu0
      %v1916 = vadd.f32 0.0, %v1915
      %v1917 = vpop.f32.mrf.mxu0
      %v1918 = vpop.f32.mrf.mxu0
      %v1919 = vadd.f32 0.0, %v1918
      %v1920 = vpop.f32.mrf.mxu0
      %1921 = vmatprep.mubr.bf16.mxu0 0
      %1922 = vmatmul.mubr.bf16.gmra.mxu0 %v1784
      %v1923 = vpop.f32.mrf.mxu0
      %v1924 = vadd.f32 0.0, %v1923
      %v1925 = vpop.f32.mrf.mxu0
      %v1926 = vpop.f32.mrf.mxu0
      %v1927 = vadd.f32 0.0, %v1926
      %v1928 = vpop.f32.mrf.mxu0
      %1929 = vmatprep.mubr.bf16.mxu0 0
      %1930 = vmatmul.mubr.bf16.gmra.mxu0 %v1787
      %v1931 = vpop.f32.mrf.mxu0
      %v1932 = vadd.f32 0.0, %v1931
      %v1933 = vpop.f32.mrf.mxu0
      %v1934 = vpop.f32.mrf.mxu0
      %v1935 = vadd.f32 0.0, %v1934
      %v1936 = vpop.f32.mrf.mxu0
      %1937 = vmatprep.mubr.bf16.mxu0 0
      %1938 = vmatmul.mubr.bf16.gmra.mxu0 %v1790
      %v1939 = vpop.f32.mrf.mxu0
      %v1940 = vadd.f32 0.0, %v1939
      %v1941 = vpop.f32.mrf.mxu0
      %v1942 = vpop.f32.mrf.mxu0
      %v1943 = vadd.f32 0.0, %v1942
      %v1944 = vpop.f32.mrf.mxu0
      %1945 = vmatprep.mubr.bf16.mxu0 0
      %1946 = vmatmul.mubr.bf16.gmra.mxu0 %v1793
      %v1947 = vpop.f32.mrf.mxu0
      %v1948 = vadd.f32 0.0, %v1947
      %v1949 = vpop.f32.mrf.mxu0
      %v1950 = vpop.f32.mrf.mxu0
      %v1951 = vadd.f32 0.0, %v1950
      %v1952 = vpop.f32.mrf.mxu0
      %1953 = vmatprep.mubr.bf16.mxu0 0
      %1954 = vmatmul.mubr.bf16.gmra.mxu0 %v1796
      %v1955 = vpop.f32.mrf.mxu0
      %v1956 = vadd.f32 0.0, %v1955
      %v1957 = vpop.f32.mrf.mxu0
      %v1958 = vpop.f32.mrf.mxu0
      %v1959 = vadd.f32 0.0, %v1958
      %v1960 = vpop.f32.mrf.mxu0
      %1961 = vdwg.mxu0
      %v1962 = vadd.f32 %v1584, %v1836
      %v1963 = vadd.f32 %v1585, %v1839
      %v1964 = vadd.f32 %v1586, %v1844
      %v1965 = vadd.f32 %v1587, %v1847
      %v1966 = vadd.f32 %v1588, %v1852
      %v1967 = vadd.f32 %v1589, %v1855
      %v1968 = vadd.f32 %v1590, %v1860
      %v1969 = vadd.f32 %v1591, %v1863
      %v1970 = vadd.f32 %v1592, %v1868
      %v1971 = vadd.f32 %v1593, %v1871
      %v1972 = vadd.f32 %v1594, %v1876
      %v1973 = vadd.f32 %v1595, %v1879
      %v1974 = vadd.f32 %v1596, %v1884
      %v1975 = vadd.f32 %v1597, %v1887
      %v1976 = vadd.f32 %v1598, %v1892
      %v1977 = vadd.f32 %v1599, %v1895
      %v1978 = vadd.f32 %v1600, %v1900
      %v1979 = vadd.f32 %v1601, %v1903
      %v1980 = vadd.f32 %v1602, %v1908
      %v1981 = vadd.f32 %v1603, %v1911
      %v1982 = vadd.f32 %v1604, %v1916
      %v1983 = vadd.f32 %v1605, %v1919
      %v1984 = vadd.f32 %v1606, %v1924
      %v1985 = vadd.f32 %v1607, %v1927
      %v1986 = vadd.f32 %v1608, %v1932
      %v1987 = vadd.f32 %v1609, %v1935
      %v1988 = vadd.f32 %v1610, %v1940
      %v1989 = vadd.f32 %v1611, %v1943
      %v1990 = vadd.f32 %v1612, %v1948
      %v1991 = vadd.f32 %v1613, %v1951
      %v1992 = vadd.f32 %v1614, %v1956
      %v1993 = vadd.f32 %v1615, %v1959
      %v1995 = vshrl.u32 %v1620, 16
      %v1997 = vrot.slane %v1995, 4
      %v1998 = vshll.u32 %v1620, 16
      %v2000 = vrot.slane %v1998, 5
      %v2001 = vor.u32 %v1997, %v2000
      %v2002 = vrot.slane %v2001, 4
      %v2004 = vshll.u32 %v1621, 16
      %v2006 = vrot.slane %v2004, 5
      %v2007 = vsel %vm250, %v2002, %v2006
      %v2008 = vshrl.u32 %v1621, 16
      %v2010 = vrot.slane %v2008, 4
      %v2011 = vor.u32 %v2010, %v2006
      %v2012 = vrot.slane %v2011, 4
      %v2014 = vshll.u32 %v1622, 16
      %v2016 = vrot.slane %v2014, 5
      %v2017 = vsel %vm250, %v2012, %v2016
      %v2019 = vshrl.u32 %v1623, 16
      %v2021 = vrot.slane %v2019, 4
      %v2022 = vshll.u32 %v1623, 16
      %v2024 = vrot.slane %v2022, 5
      %v2025 = vor.u32 %v2021, %v2024
      %v2026 = vrot.slane %v2025, 4
      %v2028 = vshll.u32 %v1624, 16
      %v2030 = vrot.slane %v2028, 5
      %v2031 = vsel %vm250, %v2026, %v2030
      %v2032 = vshrl.u32 %v1624, 16
      %v2034 = vrot.slane %v2032, 4
      %v2035 = vor.u32 %v2034, %v2030
      %v2036 = vrot.slane %v2035, 4
      %v2038 = vshll.u32 %v1625, 16
      %v2040 = vrot.slane %v2038, 5
      %v2041 = vsel %vm250, %v2036, %v2040
      %v2043 = vshrl.u32 %v1626, 16
      %v2045 = vrot.slane %v2043, 4
      %v2046 = vshll.u32 %v1626, 16
      %v2048 = vrot.slane %v2046, 5
      %v2049 = vor.u32 %v2045, %v2048
      %v2050 = vrot.slane %v2049, 4
      %v2052 = vshll.u32 %v1627, 16
      %v2054 = vrot.slane %v2052, 5
      %v2055 = vsel %vm250, %v2050, %v2054
      %v2056 = vshrl.u32 %v1627, 16
      %v2058 = vrot.slane %v2056, 4
      %v2059 = vor.u32 %v2058, %v2054
      %v2060 = vrot.slane %v2059, 4
      %v2062 = vshll.u32 %v1628, 16
      %v2064 = vrot.slane %v2062, 5
      %v2065 = vsel %vm250, %v2060, %v2064
      %v2067 = vshrl.u32 %v1629, 16
      %v2069 = vrot.slane %v2067, 4
      %v2070 = vshll.u32 %v1629, 16
      %v2072 = vrot.slane %v2070, 5
      %v2073 = vor.u32 %v2069, %v2072
      %v2074 = vrot.slane %v2073, 4
      %v2076 = vshll.u32 %v1630, 16
      %v2078 = vrot.slane %v2076, 5
      %v2079 = vsel %vm250, %v2074, %v2078
      %v2080 = vshrl.u32 %v1630, 16
      %v2082 = vrot.slane %v2080, 4
      %v2083 = vor.u32 %v2082, %v2078
      %v2084 = vrot.slane %v2083, 4
      %v2086 = vshll.u32 %v1631, 16
      %v2088 = vrot.slane %v2086, 5
      %v2089 = vsel %vm250, %v2084, %v2088
      %v2091 = vshrl.u32 %v1632, 16
      %v2093 = vrot.slane %v2091, 4
      %v2094 = vshll.u32 %v1632, 16
      %v2096 = vrot.slane %v2094, 5
      %v2097 = vor.u32 %v2093, %v2096
      %v2098 = vrot.slane %v2097, 4
      %v2100 = vshll.u32 %v1633, 16
      %v2102 = vrot.slane %v2100, 5
      %v2103 = vsel %vm250, %v2098, %v2102
      %v2104 = vshrl.u32 %v1633, 16
      %v2106 = vrot.slane %v2104, 4
      %v2107 = vor.u32 %v2106, %v2102
      %v2108 = vrot.slane %v2107, 4
      %v2110 = vshll.u32 %v1634, 16
      %v2112 = vrot.slane %v2110, 5
      %v2113 = vsel %vm250, %v2108, %v2112
      %v2115 = vshrl.u32 %v1635, 16
      %v2117 = vrot.slane %v2115, 4
      %v2118 = vshll.u32 %v1635, 16
      %v2120 = vrot.slane %v2118, 5
      %v2121 = vor.u32 %v2117, %v2120
      %v2122 = vrot.slane %v2121, 4
      %v2124 = vshll.u32 %v1636, 16
      %v2126 = vrot.slane %v2124, 5
      %v2127 = vsel %vm250, %v2122, %v2126
      %v2128 = vshrl.u32 %v1636, 16
      %v2130 = vrot.slane %v2128, 4
      %v2131 = vor.u32 %v2130, %v2126
      %v2132 = vrot.slane %v2131, 4
      %v2134 = vshll.u32 %v1637, 16
      %v2136 = vrot.slane %v2134, 5
      %v2137 = vsel %vm250, %v2132, %v2136
      %v2139 = vshrl.u32 %v1638, 16
      %v2141 = vrot.slane %v2139, 4
      %v2142 = vshll.u32 %v1638, 16
      %v2144 = vrot.slane %v2142, 5
      %v2145 = vor.u32 %v2141, %v2144
      %v2146 = vrot.slane %v2145, 4
      %v2148 = vshll.u32 %v1639, 16
      %v2150 = vrot.slane %v2148, 5
      %v2151 = vsel %vm250, %v2146, %v2150
      %v2152 = vshrl.u32 %v1639, 16
      %v2154 = vrot.slane %v2152, 4
      %v2155 = vor.u32 %v2154, %v2150
      %v2156 = vrot.slane %v2155, 4
      %v2158 = vshll.u32 %v1640, 16
      %v2160 = vrot.slane %v2158, 5
      %v2161 = vsel %vm250, %v2156, %v2160
      %v2163 = vshrl.u32 %v1641, 16
      %v2165 = vrot.slane %v2163, 4
      %v2166 = vshll.u32 %v1641, 16
      %v2168 = vrot.slane %v2166, 5
      %v2169 = vor.u32 %v2165, %v2168
      %v2170 = vrot.slane %v2169, 4
      %v2172 = vshll.u32 %v1642, 16
      %v2174 = vrot.slane %v2172, 5
      %v2175 = vsel %vm250, %v2170, %v2174
      %v2176 = vshrl.u32 %v1642, 16
      %v2178 = vrot.slane %v2176, 4
      %v2179 = vor.u32 %v2178, %v2174
      %v2180 = vrot.slane %v2179, 4
      %v2182 = vshll.u32 %v1643, 16
      %v2184 = vrot.slane %v2182, 5
      %v2185 = vsel %vm250, %v2180, %v2184
      %v2187 = vshrl.u32 %v1644, 16
      %v2189 = vrot.slane %v2187, 4
      %v2190 = vshll.u32 %v1644, 16
      %v2192 = vrot.slane %v2190, 5
      %v2193 = vor.u32 %v2189, %v2192
      %v2194 = vrot.slane %v2193, 4
      %v2196 = vshll.u32 %v1645, 16
      %v2198 = vrot.slane %v2196, 5
      %v2199 = vsel %vm250, %v2194, %v2198
      %v2200 = vshrl.u32 %v1645, 16
      %v2202 = vrot.slane %v2200, 4
      %v2203 = vor.u32 %v2202, %v2198
      %v2204 = vrot.slane %v2203, 4
      %v2206 = vshll.u32 %v1646, 16
      %v2208 = vrot.slane %v2206, 5
      %v2209 = vsel %vm250, %v2204, %v2208
      %v2211 = vshrl.u32 %v1647, 16
      %v2213 = vrot.slane %v2211, 4
      %v2214 = vshll.u32 %v1647, 16
      %v2216 = vrot.slane %v2214, 5
      %v2217 = vor.u32 %v2213, %v2216
      %v2218 = vrot.slane %v2217, 4
      %v2220 = vshll.u32 %v1648, 16
      %v2222 = vrot.slane %v2220, 5
      %v2223 = vsel %vm250, %v2218, %v2222
      %v2224 = vshrl.u32 %v1648, 16
      %v2226 = vrot.slane %v2224, 4
      %v2227 = vor.u32 %v2226, %v2222
      %v2228 = vrot.slane %v2227, 4
      %v2230 = vshll.u32 %v1649, 16
      %v2232 = vrot.slane %v2230, 5
      %v2233 = vsel %vm250, %v2228, %v2232
      %v2235 = vshrl.u32 %v1650, 16
      %v2237 = vrot.slane %v2235, 4
      %v2238 = vshll.u32 %v1650, 16
      %v2240 = vrot.slane %v2238, 5
      %v2241 = vor.u32 %v2237, %v2240
      %v2242 = vrot.slane %v2241, 4
      %v2244 = vshll.u32 %v1651, 16
      %v2246 = vrot.slane %v2244, 5
      %v2247 = vsel %vm250, %v2242, %v2246
      %v2248 = vshrl.u32 %v1651, 16
      %v2250 = vrot.slane %v2248, 4
      %v2251 = vor.u32 %v2250, %v2246
      %v2252 = vrot.slane %v2251, 4
      %v2254 = vshll.u32 %v1652, 16
      %v2256 = vrot.slane %v2254, 5
      %v2257 = vsel %vm250, %v2252, %v2256
      %v2259 = vshrl.u32 %v1653, 16
      %v2261 = vrot.slane %v2259, 4
      %v2262 = vshll.u32 %v1653, 16
      %v2264 = vrot.slane %v2262, 5
      %v2265 = vor.u32 %v2261, %v2264
      %v2266 = vrot.slane %v2265, 4
      %v2268 = vshll.u32 %v1654, 16
      %v2270 = vrot.slane %v2268, 5
      %v2271 = vsel %vm250, %v2266, %v2270
      %v2272 = vshrl.u32 %v1654, 16
      %v2274 = vrot.slane %v2272, 4
      %v2275 = vor.u32 %v2274, %v2270
      %v2276 = vrot.slane %v2275, 4
      %v2278 = vshll.u32 %v1655, 16
      %v2280 = vrot.slane %v2278, 5
      %v2281 = vsel %vm250, %v2276, %v2280
      %v2283 = vshrl.u32 %v1656, 16
      %v2285 = vrot.slane %v2283, 4
      %v2286 = vshll.u32 %v1656, 16
      %v2288 = vrot.slane %v2286, 5
      %v2289 = vor.u32 %v2285, %v2288
      %v2290 = vrot.slane %v2289, 4
      %v2292 = vshll.u32 %v1657, 16
      %v2294 = vrot.slane %v2292, 5
      %v2295 = vsel %vm250, %v2290, %v2294
      %v2296 = vshrl.u32 %v1657, 16
      %v2298 = vrot.slane %v2296, 4
      %v2299 = vor.u32 %v2298, %v2294
      %v2300 = vrot.slane %v2299, 4
      %v2302 = vshll.u32 %v1658, 16
      %v2304 = vrot.slane %v2302, 5
      %v2305 = vsel %vm250, %v2300, %v2304
      %v2307 = vshrl.u32 %v1659, 16
      %v2309 = vrot.slane %v2307, 4
      %v2310 = vshll.u32 %v1659, 16
      %v2312 = vrot.slane %v2310, 5
      %v2313 = vor.u32 %v2309, %v2312
      %v2314 = vrot.slane %v2313, 4
      %v2316 = vshll.u32 %v1660, 16
      %v2318 = vrot.slane %v2316, 5
      %v2319 = vsel %vm250, %v2314, %v2318
      %v2320 = vshrl.u32 %v1660, 16
      %v2322 = vrot.slane %v2320, 4
      %v2323 = vor.u32 %v2322, %v2318
      %v2324 = vrot.slane %v2323, 4
      %v2326 = vshll.u32 %v1661, 16
      %v2328 = vrot.slane %v2326, 5
      %v2329 = vsel %vm250, %v2324, %v2328
      %v2331 = vshrl.u32 %v1662, 16
      %v2333 = vrot.slane %v2331, 4
      %v2334 = vshll.u32 %v1662, 16
      %v2336 = vrot.slane %v2334, 5
      %v2337 = vor.u32 %v2333, %v2336
      %v2338 = vrot.slane %v2337, 4
      %v2340 = vshll.u32 %v1663, 16
      %v2342 = vrot.slane %v2340, 5
      %v2343 = vsel %vm250, %v2338, %v2342
      %v2344 = vshrl.u32 %v1663, 16
      %v2346 = vrot.slane %v2344, 4
      %v2347 = vor.u32 %v2346, %v2342
      %v2348 = vrot.slane %v2347, 4
      %v2350 = vshll.u32 %v1664, 16
      %v2352 = vrot.slane %v2350, 5
      %v2353 = vsel %vm250, %v2348, %v2352
      %v2355 = vshrl.u32 %v1665, 16
      %v2357 = vrot.slane %v2355, 4
      %v2358 = vshll.u32 %v1665, 16
      %v2360 = vrot.slane %v2358, 5
      %v2361 = vor.u32 %v2357, %v2360
      %v2362 = vrot.slane %v2361, 4
      %v2364 = vshll.u32 %v1666, 16
      %v2366 = vrot.slane %v2364, 5
      %v2367 = vsel %vm250, %v2362, %v2366
      %v2368 = vshrl.u32 %v1666, 16
      %v2370 = vrot.slane %v2368, 4
      %v2371 = vor.u32 %v2370, %v2366
      %v2372 = vrot.slane %v2371, 4
      %v2374 = vshll.u32 %v1667, 16
      %v2376 = vrot.slane %v2374, 5
      %v2377 = vsel %vm250, %v2372, %v2376
      %s2378 = scalar_lea.vmem %s1, 8
      %v2379 = vld [vmem:[%s2378] sm:$0x3]
      %v2380 = vunpack.c.l.b16 %v2007
      %v2381 = vunpack.c.l.b16 %v2017
      %v2382 = vunpack.c.l.b16 %v2031
      %v2383 = vunpack.c.l.b16 %v2041
      %v2384 = vunpack.c.l.b16 %v2055
      %v2385 = vunpack.c.l.b16 %v2065
      %v2386 = vunpack.c.l.b16 %v2079
      %v2387 = vunpack.c.l.b16 %v2089
      %v2388 = vunpack.c.l.b16 %v2103
      %v2389 = vunpack.c.l.b16 %v2113
      %v2390 = vunpack.c.l.b16 %v2127
      %v2391 = vunpack.c.l.b16 %v2137
      %v2392 = vunpack.c.l.b16 %v2151
      %v2393 = vunpack.c.l.b16 %v2161
      %v2394 = vunpack.c.l.b16 %v2175
      %v2395 = vunpack.c.l.b16 %v2185
      %v2396 = vunpack.c.l.b16 %v2199
      %v2397 = vunpack.c.l.b16 %v2209
      %v2398 = vunpack.c.l.b16 %v2223
      %v2399 = vunpack.c.l.b16 %v2233
      %v2400 = vunpack.c.l.b16 %v2247
      %v2401 = vunpack.c.l.b16 %v2257
      %v2402 = vunpack.c.l.b16 %v2271
      %v2403 = vunpack.c.l.b16 %v2281
      %v2404 = vunpack.c.l.b16 %v2295
      %v2405 = vunpack.c.l.b16 %v2305
      %v2406 = vunpack.c.l.b16 %v2319
      %v2407 = vunpack.c.l.b16 %v2329
      %v2408 = vunpack.c.l.b16 %v2343
      %v2409 = vunpack.c.l.b16 %v2353
      %v2410 = vunpack.c.l.b16 %v2367
      %v2411 = vunpack.c.l.b16 %v2377
      %v2412 = vpack.c.b16 %v2381, %v2380
      %v2413 = vpack.c.b16 %v2383, %v2382
      %v2414 = vpack.c.b16 %v2385, %v2384
      %v2415 = vpack.c.b16 %v2387, %v2386
      %v2416 = vpack.c.b16 %v2389, %v2388
      %v2417 = vpack.c.b16 %v2391, %v2390
      %v2418 = vpack.c.b16 %v2393, %v2392
      %v2419 = vpack.c.b16 %v2395, %v2394
      %v2420 = vpack.c.b16 %v2397, %v2396
      %v2421 = vpack.c.b16 %v2399, %v2398
      %v2422 = vpack.c.b16 %v2401, %v2400
      %v2423 = vpack.c.b16 %v2403, %v2402
      %v2424 = vpack.c.b16 %v2405, %v2404
      %v2425 = vpack.c.b16 %v2407, %v2406
      %v2426 = vpack.c.b16 %v2409, %v2408
      %v2427 = vpack.c.b16 %v2411, %v2410
      %v2429 = vsel %vm685, %v2412, 0
      %v2432 = vsel %vm685, %v2413, 0
      %v2435 = vsel %vm685, %v2414, 0
      %v2438 = vsel %vm685, %v2415, 0
      %v2441 = vsel %vm685, %v2416, 0
      %v2444 = vsel %vm685, %v2417, 0
      %v2447 = vsel %vm685, %v2418, 0
      %v2450 = vsel %vm685, %v2419, 0
      %v2453 = vsel %vm685, %v2420, 0
      %v2456 = vsel %vm685, %v2421, 0
      %v2459 = vsel %vm685, %v2422, 0
      %v2462 = vsel %vm685, %v2423, 0
      %v2465 = vsel %vm685, %v2424, 0
      %v2468 = vsel %vm685, %v2425, 0
      %v2471 = vsel %vm685, %v2426, 0
      %v2474 = vsel %vm685, %v2427, 0
      %v2477 = vsel %vm734, %v2379, 0
      %2479 = vmatprep.subr.bf16.mxu0 0
      %2480 = vmatpush1.bf16.msra.mxu0 0
      %2481 = vmatprep.subr.bf16.mxu0 0
      %2482 = vmatpush1.bf16.msra.mxu0 0
      %2483 = vmatprep.subr.bf16.mxu0 0
      %2484 = vmatpush1.bf16.msra.mxu0 0
      %2485 = vmatprep.subr.bf16.mxu0 0
      %2486 = vmatpush1.bf16.msra.mxu0 0
      %2487 = vmatprep.subr.bf16.mxu0 0
      %2488 = vmatpush1.bf16.msra.mxu0 0
      %2489 = vmatprep.subr.bf16.mxu0 0
      %2490 = vmatpush1.bf16.msra.mxu0 0
      %2491 = vmatprep.subr.bf16.mxu0 0
      %2492 = vmatpush1.bf16.msra.mxu0 0
      %2493 = vmatprep.subr.bf16.mxu0 0
      %2494 = vmatpush1.bf16.msra.mxu0 %v2477
      %2495 = vmatprep.subr.bf16.mxu0 0
      %2496 = vmatpush2.bf16.msra.mxu0 0
      %2497 = vmatprep.subr.bf16.mxu0 0
      %2498 = vmatpush2.bf16.msra.mxu0 0
      %2499 = vmatprep.subr.bf16.mxu0 0
      %2500 = vmatpush2.bf16.msra.mxu0 0
      %2501 = vmatprep.subr.bf16.mxu0 0
      %2502 = vmatpush2.bf16.msra.mxu0 0
      %2503 = vmatprep.subr.bf16.mxu0 0
      %2504 = vmatpush2.bf16.msra.mxu0 0
      %2505 = vmatprep.subr.bf16.mxu0 0
      %2506 = vmatpush2.bf16.msra.mxu0 0
      %2507 = vmatprep.subr.bf16.mxu0 0
      %2508 = vmatpush2.bf16.msra.mxu0 0
      %2509 = vmatprep.subr.bf16.mxu0 0
      %2510 = vmatpush2.bf16.msra.mxu0 0
      %2511 = vmatprep.mubr.bf16.mxu0 0
      %2512 = vmatmul.mubr.bf16.gmra.mxu0 %v2429
      %v2513 = vpop.f32.mrf.mxu0
      %v2514 = vadd.f32 0.0, %v2513
      %v2515 = vpop.f32.mrf.mxu0
      %v2516 = vpop.f32.mrf.mxu0
      %v2517 = vadd.f32 0.0, %v2516
      %v2518 = vpop.f32.mrf.mxu0
      %2519 = vmatprep.mubr.bf16.mxu0 0
      %2520 = vmatmul.mubr.bf16.gmra.mxu0 %v2432
      %v2521 = vpop.f32.mrf.mxu0
      %v2522 = vadd.f32 0.0, %v2521
      %v2523 = vpop.f32.mrf.mxu0
      %v2524 = vpop.f32.mrf.mxu0
      %v2525 = vadd.f32 0.0, %v2524
      %v2526 = vpop.f32.mrf.mxu0
      %2527 = vmatprep.mubr.bf16.mxu0 0
      %2528 = vmatmul.mubr.bf16.gmra.mxu0 %v2435
      %v2529 = vpop.f32.mrf.mxu0
      %v2530 = vadd.f32 0.0, %v2529
      %v2531 = vpop.f32.mrf.mxu0
      %v2532 = vpop.f32.mrf.mxu0
      %v2533 = vadd.f32 0.0, %v2532
      %v2534 = vpop.f32.mrf.mxu0
      %2535 = vmatprep.mubr.bf16.mxu0 0
      %2536 = vmatmul.mubr.bf16.gmra.mxu0 %v2438
      %v2537 = vpop.f32.mrf.mxu0
      %v2538 = vadd.f32 0.0, %v2537
      %v2539 = vpop.f32.mrf.mxu0
      %v2540 = vpop.f32.mrf.mxu0
      %v2541 = vadd.f32 0.0, %v2540
      %v2542 = vpop.f32.mrf.mxu0
      %2543 = vmatprep.mubr.bf16.mxu0 0
      %2544 = vmatmul.mubr.bf16.gmra.mxu0 %v2441
      %v2545 = vpop.f32.mrf.mxu0
      %v2546 = vadd.f32 0.0, %v2545
      %v2547 = vpop.f32.mrf.mxu0
      %v2548 = vpop.f32.mrf.mxu0
      %v2549 = vadd.f32 0.0, %v2548
      %v2550 = vpop.f32.mrf.mxu0
      %2551 = vmatprep.mubr.bf16.mxu0 0
      %2552 = vmatmul.mubr.bf16.gmra.mxu0 %v2444
      %v2553 = vpop.f32.mrf.mxu0
      %v2554 = vadd.f32 0.0, %v2553
      %v2555 = vpop.f32.mrf.mxu0
      %v2556 = vpop.f32.mrf.mxu0
      %v2557 = vadd.f32 0.0, %v2556
      %v2558 = vpop.f32.mrf.mxu0
      %2559 = vmatprep.mubr.bf16.mxu0 0
      %2560 = vmatmul.mubr.bf16.gmra.mxu0 %v2447
      %v2561 = vpop.f32.mrf.mxu0
      %v2562 = vadd.f32 0.0, %v2561
      %v2563 = vpop.f32.mrf.mxu0
      %v2564 = vpop.f32.mrf.mxu0
      %v2565 = vadd.f32 0.0, %v2564
      %v2566 = vpop.f32.mrf.mxu0
      %2567 = vmatprep.mubr.bf16.mxu0 0
      %2568 = vmatmul.mubr.bf16.gmra.mxu0 %v2450
      %v2569 = vpop.f32.mrf.mxu0
      %v2570 = vadd.f32 0.0, %v2569
      %v2571 = vpop.f32.mrf.mxu0
      %v2572 = vpop.f32.mrf.mxu0
      %v2573 = vadd.f32 0.0, %v2572
      %v2574 = vpop.f32.mrf.mxu0
      %2575 = vmatprep.mubr.bf16.mxu0 0
      %2576 = vmatmul.mubr.bf16.gmra.mxu0 %v2453
      %v2577 = vpop.f32.mrf.mxu0
      %v2578 = vadd.f32 0.0, %v2577
      %v2579 = vpop.f32.mrf.mxu0
      %v2580 = vpop.f32.mrf.mxu0
      %v2581 = vadd.f32 0.0, %v2580
      %v2582 = vpop.f32.mrf.mxu0
      %2583 = vmatprep.mubr.bf16.mxu0 0
      %2584 = vmatmul.mubr.bf16.gmra.mxu0 %v2456
      %v2585 = vpop.f32.mrf.mxu0
      %v2586 = vadd.f32 0.0, %v2585
      %v2587 = vpop.f32.mrf.mxu0
      %v2588 = vpop.f32.mrf.mxu0
      %v2589 = vadd.f32 0.0, %v2588
      %v2590 = vpop.f32.mrf.mxu0
      %2591 = vmatprep.mubr.bf16.mxu0 0
      %2592 = vmatmul.mubr.bf16.gmra.mxu0 %v2459
      %v2593 = vpop.f32.mrf.mxu0
      %v2594 = vadd.f32 0.0, %v2593
      %v2595 = vpop.f32.mrf.mxu0
      %v2596 = vpop.f32.mrf.mxu0
      %v2597 = vadd.f32 0.0, %v2596
      %v2598 = vpop.f32.mrf.mxu0
      %2599 = vmatprep.mubr.bf16.mxu0 0
      %2600 = vmatmul.mubr.bf16.gmra.mxu0 %v2462
      %v2601 = vpop.f32.mrf.mxu0
      %v2602 = vadd.f32 0.0, %v2601
      %v2603 = vpop.f32.mrf.mxu0
      %v2604 = vpop.f32.mrf.mxu0
      %v2605 = vadd.f32 0.0, %v2604
      %v2606 = vpop.f32.mrf.mxu0
      %2607 = vmatprep.mubr.bf16.mxu0 0
      %2608 = vmatmul.mubr.bf16.gmra.mxu0 %v2465
      %v2609 = vpop.f32.mrf.mxu0
      %v2610 = vadd.f32 0.0, %v2609
      %v2611 = vpop.f32.mrf.mxu0
      %v2612 = vpop.f32.mrf.mxu0
      %v2613 = vadd.f32 0.0, %v2612
      %v2614 = vpop.f32.mrf.mxu0
      %2615 = vmatprep.mubr.bf16.mxu0 0
      %2616 = vmatmul.mubr.bf16.gmra.mxu0 %v2468
      %v2617 = vpop.f32.mrf.mxu0
      %v2618 = vadd.f32 0.0, %v2617
      %v2619 = vpop.f32.mrf.mxu0
      %v2620 = vpop.f32.mrf.mxu0
      %v2621 = vadd.f32 0.0, %v2620
      %v2622 = vpop.f32.mrf.mxu0
      %2623 = vmatprep.mubr.bf16.mxu0 0
      %2624 = vmatmul.mubr.bf16.gmra.mxu0 %v2471
      %v2625 = vpop.f32.mrf.mxu0
      %v2626 = vadd.f32 0.0, %v2625
      %v2627 = vpop.f32.mrf.mxu0
      %v2628 = vpop.f32.mrf.mxu0
      %v2629 = vadd.f32 0.0, %v2628
      %v2630 = vpop.f32.mrf.mxu0
      %2631 = vmatprep.mubr.bf16.mxu0 0
      %2632 = vmatmul.mubr.bf16.gmra.mxu0 %v2474
      %v2633 = vpop.f32.mrf.mxu0
      %v2634 = vadd.f32 0.0, %v2633
      %v2635 = vpop.f32.mrf.mxu0
      %v2636 = vpop.f32.mrf.mxu0
      %v2637 = vadd.f32 0.0, %v2636
      %v2638 = vpop.f32.mrf.mxu0
      %2639 = vdwg.mxu0
      %v2640 = vadd.f32 %v1962, %v2514
      %v2641 = vadd.f32 %v1963, %v2517
      %v2642 = vadd.f32 %v1964, %v2522
      %v2643 = vadd.f32 %v1965, %v2525
      %v2644 = vadd.f32 %v1966, %v2530
      %v2645 = vadd.f32 %v1967, %v2533
      %v2646 = vadd.f32 %v1968, %v2538
      %v2647 = vadd.f32 %v1969, %v2541
      %v2648 = vadd.f32 %v1970, %v2546
      %v2649 = vadd.f32 %v1971, %v2549
      %v2650 = vadd.f32 %v1972, %v2554
      %v2651 = vadd.f32 %v1973, %v2557
      %v2652 = vadd.f32 %v1974, %v2562
      %v2653 = vadd.f32 %v1975, %v2565
      %v2654 = vadd.f32 %v1976, %v2570
      %v2655 = vadd.f32 %v1977, %v2573
      %v2656 = vadd.f32 %v1978, %v2578
      %v2657 = vadd.f32 %v1979, %v2581
      %v2658 = vadd.f32 %v1980, %v2586
      %v2659 = vadd.f32 %v1981, %v2589
      %v2660 = vadd.f32 %v1982, %v2594
      %v2661 = vadd.f32 %v1983, %v2597
      %v2662 = vadd.f32 %v1984, %v2602
      %v2663 = vadd.f32 %v1985, %v2605
      %v2664 = vadd.f32 %v1986, %v2610
      %v2665 = vadd.f32 %v1987, %v2613
      %v2666 = vadd.f32 %v1988, %v2618
      %v2667 = vadd.f32 %v1989, %v2621
      %v2668 = vadd.f32 %v1990, %v2626
      %v2669 = vadd.f32 %v1991, %v2629
      %v2670 = vadd.f32 %v1992, %v2634
      %v2671 = vadd.f32 %v1993, %v2637
      %v2688 = vrot.slane %v1620, 5
      %v2689 = vrot.slane %v2688, 4
      %v2690 = vrot.slane %v1621, 5
      %v2691 = vsel %vm1209, %v2689, %v2690
      %v2692 = vrot.slane %v2690, 4
      %v2693 = vrot.slane %v1622, 5
      %v2694 = vsel %vm1209, %v2692, %v2693
      %v2695 = vrot.slane %v1623, 5
      %v2696 = vrot.slane %v2695, 4
      %v2697 = vrot.slane %v1624, 5
      %v2698 = vsel %vm1209, %v2696, %v2697
      %v2699 = vrot.slane %v2697, 4
      %v2700 = vrot.slane %v1625, 5
      %v2701 = vsel %vm1209, %v2699, %v2700
      %v2702 = vrot.slane %v1626, 5
      %v2703 = vrot.slane %v2702, 4
      %v2704 = vrot.slane %v1627, 5
      %v2705 = vsel %vm1209, %v2703, %v2704
      %v2706 = vrot.slane %v2704, 4
      %v2707 = vrot.slane %v1628, 5
      %v2708 = vsel %vm1209, %v2706, %v2707
      %v2709 = vrot.slane %v1629, 5
      %v2710 = vrot.slane %v2709, 4
      %v2711 = vrot.slane %v1630, 5
      %v2712 = vsel %vm1209, %v2710, %v2711
      %v2713 = vrot.slane %v2711, 4
      %v2714 = vrot.slane %v1631, 5
      %v2715 = vsel %vm1209, %v2713, %v2714
      %v2716 = vrot.slane %v1632, 5
      %v2717 = vrot.slane %v2716, 4
      %v2718 = vrot.slane %v1633, 5
      %v2719 = vsel %vm1209, %v2717, %v2718
      %v2720 = vrot.slane %v2718, 4
      %v2721 = vrot.slane %v1634, 5
      %v2722 = vsel %vm1209, %v2720, %v2721
      %v2723 = vrot.slane %v1635, 5
      %v2724 = vrot.slane %v2723, 4
      %v2725 = vrot.slane %v1636, 5
      %v2726 = vsel %vm1209, %v2724, %v2725
      %v2727 = vrot.slane %v2725, 4
      %v2728 = vrot.slane %v1637, 5
      %v2729 = vsel %vm1209, %v2727, %v2728
      %v2730 = vrot.slane %v1638, 5
      %v2731 = vrot.slane %v2730, 4
      %v2732 = vrot.slane %v1639, 5
      %v2733 = vsel %vm1209, %v2731, %v2732
      %v2734 = vrot.slane %v2732, 4
      %v2735 = vrot.slane %v1640, 5
      %v2736 = vsel %vm1209, %v2734, %v2735
      %v2737 = vrot.slane %v1641, 5
      %v2738 = vrot.slane %v2737, 4
      %v2739 = vrot.slane %v1642, 5
      %v2740 = vsel %vm1209, %v2738, %v2739
      %v2741 = vrot.slane %v2739, 4
      %v2742 = vrot.slane %v1643, 5
      %v2743 = vsel %vm1209, %v2741, %v2742
      %v2744 = vrot.slane %v1644, 5
      %v2745 = vrot.slane %v2744, 4
      %v2746 = vrot.slane %v1645, 5
      %v2747 = vsel %vm1209, %v2745, %v2746
      %v2748 = vrot.slane %v2746, 4
      %v2749 = vrot.slane %v1646, 5
      %v2750 = vsel %vm1209, %v2748, %v2749
      %v2751 = vrot.slane %v1647, 5
      %v2752 = vrot.slane %v2751, 4
      %v2753 = vrot.slane %v1648, 5
      %v2754 = vsel %vm1209, %v2752, %v2753
      %v2755 = vrot.slane %v2753, 4
      %v2756 = vrot.slane %v1649, 5
      %v2757 = vsel %vm1209, %v2755, %v2756
      %v2758 = vrot.slane %v1650, 5
      %v2759 = vrot.slane %v2758, 4
      %v2760 = vrot.slane %v1651, 5
      %v2761 = vsel %vm1209, %v2759, %v2760
      %v2762 = vrot.slane %v2760, 4
      %v2763 = vrot.slane %v1652, 5
      %v2764 = vsel %vm1209, %v2762, %v2763
      %v2765 = vrot.slane %v1653, 5
      %v2766 = vrot.slane %v2765, 4
      %v2767 = vrot.slane %v1654, 5
      %v2768 = vsel %vm1209, %v2766, %v2767
      %v2769 = vrot.slane %v2767, 4
      %v2770 = vrot.slane %v1655, 5
      %v2771 = vsel %vm1209, %v2769, %v2770
      %v2772 = vrot.slane %v1656, 5
      %v2773 = vrot.slane %v2772, 4
      %v2774 = vrot.slane %v1657, 5
      %v2775 = vsel %vm1209, %v2773, %v2774
      %v2776 = vrot.slane %v2774, 4
      %v2777 = vrot.slane %v1658, 5
      %v2778 = vsel %vm1209, %v2776, %v2777
      %v2779 = vrot.slane %v1659, 5
      %v2780 = vrot.slane %v2779, 4
      %v2781 = vrot.slane %v1660, 5
      %v2782 = vsel %vm1209, %v2780, %v2781
      %v2783 = vrot.slane %v2781, 4
      %v2784 = vrot.slane %v1661, 5
      %v2785 = vsel %vm1209, %v2783, %v2784
      %v2786 = vrot.slane %v1662, 5
      %v2787 = vrot.slane %v2786, 4
      %v2788 = vrot.slane %v1663, 5
      %v2789 = vsel %vm1209, %v2787, %v2788
      %v2790 = vrot.slane %v2788, 4
      %v2791 = vrot.slane %v1664, 5
      %v2792 = vsel %vm1209, %v2790, %v2791
      %v2793 = vrot.slane %v1665, 5
      %v2794 = vrot.slane %v2793, 4
      %v2795 = vrot.slane %v1666, 5
      %v2796 = vsel %vm1209, %v2794, %v2795
      %v2797 = vrot.slane %v2795, 4
      %v2798 = vrot.slane %v1667, 5
      %v2799 = vsel %vm1209, %v2797, %v2798
      %s2800 = scalar_lea.vmem %s1, 10
      %v2801 = vld [vmem:[%s2800] sm:$0x3]
      %v2802 = vunpack.c.l.b16 %v2691
      %v2803 = vunpack.c.l.b16 %v2694
      %v2804 = vunpack.c.l.b16 %v2698
      %v2805 = vunpack.c.l.b16 %v2701
      %v2806 = vunpack.c.l.b16 %v2705
      %v2807 = vunpack.c.l.b16 %v2708
      %v2808 = vunpack.c.l.b16 %v2712
      %v2809 = vunpack.c.l.b16 %v2715
      %v2810 = vunpack.c.l.b16 %v2719
      %v2811 = vunpack.c.l.b16 %v2722
      %v2812 = vunpack.c.l.b16 %v2726
      %v2813 = vunpack.c.l.b16 %v2729
      %v2814 = vunpack.c.l.b16 %v2733
      %v2815 = vunpack.c.l.b16 %v2736
      %v2816 = vunpack.c.l.b16 %v2740
      %v2817 = vunpack.c.l.b16 %v2743
      %v2818 = vunpack.c.l.b16 %v2747
      %v2819 = vunpack.c.l.b16 %v2750
      %v2820 = vunpack.c.l.b16 %v2754
      %v2821 = vunpack.c.l.b16 %v2757
      %v2822 = vunpack.c.l.b16 %v2761
      %v2823 = vunpack.c.l.b16 %v2764
      %v2824 = vunpack.c.l.b16 %v2768
      %v2825 = vunpack.c.l.b16 %v2771
      %v2826 = vunpack.c.l.b16 %v2775
      %v2827 = vunpack.c.l.b16 %v2778
      %v2828 = vunpack.c.l.b16 %v2782
      %v2829 = vunpack.c.l.b16 %v2785
      %v2830 = vunpack.c.l.b16 %v2789
      %v2831 = vunpack.c.l.b16 %v2792
      %v2832 = vunpack.c.l.b16 %v2796
      %v2833 = vunpack.c.l.b16 %v2799
      %v2834 = vpack.c.b16 %v2803, %v2802
      %v2835 = vpack.c.b16 %v2805, %v2804
      %v2836 = vpack.c.b16 %v2807, %v2806
      %v2837 = vpack.c.b16 %v2809, %v2808
      %v2838 = vpack.c.b16 %v2811, %v2810
      %v2839 = vpack.c.b16 %v2813, %v2812
      %v2840 = vpack.c.b16 %v2815, %v2814
      %v2841 = vpack.c.b16 %v2817, %v2816
      %v2842 = vpack.c.b16 %v2819, %v2818
      %v2843 = vpack.c.b16 %v2821, %v2820
      %v2844 = vpack.c.b16 %v2823, %v2822
      %v2845 = vpack.c.b16 %v2825, %v2824
      %v2846 = vpack.c.b16 %v2827, %v2826
      %v2847 = vpack.c.b16 %v2829, %v2828
      %v2848 = vpack.c.b16 %v2831, %v2830
      %v2849 = vpack.c.b16 %v2833, %v2832
      %v2851 = vsel %vm685, %v2834, 0
      %v2854 = vsel %vm685, %v2835, 0
      %v2857 = vsel %vm685, %v2836, 0
      %v2860 = vsel %vm685, %v2837, 0
      %v2863 = vsel %vm685, %v2838, 0
      %v2866 = vsel %vm685, %v2839, 0
      %v2869 = vsel %vm685, %v2840, 0
      %v2872 = vsel %vm685, %v2841, 0
      %v2875 = vsel %vm685, %v2842, 0
      %v2878 = vsel %vm685, %v2843, 0
      %v2881 = vsel %vm685, %v2844, 0
      %v2884 = vsel %vm685, %v2845, 0
      %v2887 = vsel %vm685, %v2846, 0
      %v2890 = vsel %vm685, %v2847, 0
      %v2893 = vsel %vm685, %v2848, 0
      %v2896 = vsel %vm685, %v2849, 0
      %v2899 = vsel %vm734, %v2801, 0
      %2901 = vmatprep.subr.bf16.mxu0 0
      %2902 = vmatpush1.bf16.msra.mxu0 0
      %2903 = vmatprep.subr.bf16.mxu0 0
      %2904 = vmatpush1.bf16.msra.mxu0 0
      %2905 = vmatprep.subr.bf16.mxu0 0
      %2906 = vmatpush1.bf16.msra.mxu0 0
      %2907 = vmatprep.subr.bf16.mxu0 0
      %2908 = vmatpush1.bf16.msra.mxu0 0
      %2909 = vmatprep.subr.bf16.mxu0 0
      %2910 = vmatpush1.bf16.msra.mxu0 0
      %2911 = vmatprep.subr.bf16.mxu0 0
      %2912 = vmatpush1.bf16.msra.mxu0 0
      %2913 = vmatprep.subr.bf16.mxu0 0
      %2914 = vmatpush1.bf16.msra.mxu0 0
      %2915 = vmatprep.subr.bf16.mxu0 0
      %2916 = vmatpush1.bf16.msra.mxu0 %v2899
      %2917 = vmatprep.subr.bf16.mxu0 0
      %2918 = vmatpush2.bf16.msra.mxu0 0
      %2919 = vmatprep.subr.bf16.mxu0 0
      %2920 = vmatpush2.bf16.msra.mxu0 0
      %2921 = vmatprep.subr.bf16.mxu0 0
      %2922 = vmatpush2.bf16.msra.mxu0 0
      %2923 = vmatprep.subr.bf16.mxu0 0
      %2924 = vmatpush2.bf16.msra.mxu0 0
      %2925 = vmatprep.subr.bf16.mxu0 0
      %2926 = vmatpush2.bf16.msra.mxu0 0
      %2927 = vmatprep.subr.bf16.mxu0 0
      %2928 = vmatpush2.bf16.msra.mxu0 0
      %2929 = vmatprep.subr.bf16.mxu0 0
      %2930 = vmatpush2.bf16.msra.mxu0 0
      %2931 = vmatprep.subr.bf16.mxu0 0
      %2932 = vmatpush2.bf16.msra.mxu0 0
      %2933 = vmatprep.mubr.bf16.mxu0 0
      %2934 = vmatmul.mubr.bf16.gmra.mxu0 %v2851
      %v2935 = vpop.f32.mrf.mxu0
      %v2936 = vadd.f32 0.0, %v2935
      %v2937 = vpop.f32.mrf.mxu0
      %v2938 = vpop.f32.mrf.mxu0
      %v2939 = vadd.f32 0.0, %v2938
      %v2940 = vpop.f32.mrf.mxu0
      %2941 = vmatprep.mubr.bf16.mxu0 0
      %2942 = vmatmul.mubr.bf16.gmra.mxu0 %v2854
      %v2943 = vpop.f32.mrf.mxu0
      %v2944 = vadd.f32 0.0, %v2943
      %v2945 = vpop.f32.mrf.mxu0
      %v2946 = vpop.f32.mrf.mxu0
      %v2947 = vadd.f32 0.0, %v2946
      %v2948 = vpop.f32.mrf.mxu0
      %2949 = vmatprep.mubr.bf16.mxu0 0
      %2950 = vmatmul.mubr.bf16.gmra.mxu0 %v2857
      %v2951 = vpop.f32.mrf.mxu0
      %v2952 = vadd.f32 0.0, %v2951
      %v2953 = vpop.f32.mrf.mxu0
      %v2954 = vpop.f32.mrf.mxu0
      %v2955 = vadd.f32 0.0, %v2954
      %v2956 = vpop.f32.mrf.mxu0
      %2957 = vmatprep.mubr.bf16.mxu0 0
      %2958 = vmatmul.mubr.bf16.gmra.mxu0 %v2860
      %v2959 = vpop.f32.mrf.mxu0
      %v2960 = vadd.f32 0.0, %v2959
      %v2961 = vpop.f32.mrf.mxu0
      %v2962 = vpop.f32.mrf.mxu0
      %v2963 = vadd.f32 0.0, %v2962
      %v2964 = vpop.f32.mrf.mxu0
      %2965 = vmatprep.mubr.bf16.mxu0 0
      %2966 = vmatmul.mubr.bf16.gmra.mxu0 %v2863
      %v2967 = vpop.f32.mrf.mxu0
      %v2968 = vadd.f32 0.0, %v2967
      %v2969 = vpop.f32.mrf.mxu0
      %v2970 = vpop.f32.mrf.mxu0
      %v2971 = vadd.f32 0.0, %v2970
      %v2972 = vpop.f32.mrf.mxu0
      %2973 = vmatprep.mubr.bf16.mxu0 0
      %2974 = vmatmul.mubr.bf16.gmra.mxu0 %v2866
      %v2975 = vpop.f32.mrf.mxu0
      %v2976 = vadd.f32 0.0, %v2975
      %v2977 = vpop.f32.mrf.mxu0
      %v2978 = vpop.f32.mrf.mxu0
      %v2979 = vadd.f32 0.0, %v2978
      %v2980 = vpop.f32.mrf.mxu0
      %2981 = vmatprep.mubr.bf16.mxu0 0
      %2982 = vmatmul.mubr.bf16.gmra.mxu0 %v2869
      %v2983 = vpop.f32.mrf.mxu0
      %v2984 = vadd.f32 0.0, %v2983
      %v2985 = vpop.f32.mrf.mxu0
      %v2986 = vpop.f32.mrf.mxu0
      %v2987 = vadd.f32 0.0, %v2986
      %v2988 = vpop.f32.mrf.mxu0
      %2989 = vmatprep.mubr.bf16.mxu0 0
      %2990 = vmatmul.mubr.bf16.gmra.mxu0 %v2872
      %v2991 = vpop.f32.mrf.mxu0
      %v2992 = vadd.f32 0.0, %v2991
      %v2993 = vpop.f32.mrf.mxu0
      %v2994 = vpop.f32.mrf.mxu0
      %v2995 = vadd.f32 0.0, %v2994
      %v2996 = vpop.f32.mrf.mxu0
      %2997 = vmatprep.mubr.bf16.mxu0 0
      %2998 = vmatmul.mubr.bf16.gmra.mxu0 %v2875
      %v2999 = vpop.f32.mrf.mxu0
      %v3000 = vadd.f32 0.0, %v2999
      %v3001 = vpop.f32.mrf.mxu0
      %v3002 = vpop.f32.mrf.mxu0
      %v3003 = vadd.f32 0.0, %v3002
      %v3004 = vpop.f32.mrf.mxu0
      %3005 = vmatprep.mubr.bf16.mxu0 0
      %3006 = vmatmul.mubr.bf16.gmra.mxu0 %v2878
      %v3007 = vpop.f32.mrf.mxu0
      %v3008 = vadd.f32 0.0, %v3007
      %v3009 = vpop.f32.mrf.mxu0
      %v3010 = vpop.f32.mrf.mxu0
      %v3011 = vadd.f32 0.0, %v3010
      %v3012 = vpop.f32.mrf.mxu0
      %3013 = vmatprep.mubr.bf16.mxu0 0
      %3014 = vmatmul.mubr.bf16.gmra.mxu0 %v2881
      %v3015 = vpop.f32.mrf.mxu0
      %v3016 = vadd.f32 0.0, %v3015
      %v3017 = vpop.f32.mrf.mxu0
      %v3018 = vpop.f32.mrf.mxu0
      %v3019 = vadd.f32 0.0, %v3018
      %v3020 = vpop.f32.mrf.mxu0
      %3021 = vmatprep.mubr.bf16.mxu0 0
      %3022 = vmatmul.mubr.bf16.gmra.mxu0 %v2884
      %v3023 = vpop.f32.mrf.mxu0
      %v3024 = vadd.f32 0.0, %v3023
      %v3025 = vpop.f32.mrf.mxu0
      %v3026 = vpop.f32.mrf.mxu0
      %v3027 = vadd.f32 0.0, %v3026
      %v3028 = vpop.f32.mrf.mxu0
      %3029 = vmatprep.mubr.bf16.mxu0 0
      %3030 = vmatmul.mubr.bf16.gmra.mxu0 %v2887
      %v3031 = vpop.f32.mrf.mxu0
      %v3032 = vadd.f32 0.0, %v3031
      %v3033 = vpop.f32.mrf.mxu0
      %v3034 = vpop.f32.mrf.mxu0
      %v3035 = vadd.f32 0.0, %v3034
      %v3036 = vpop.f32.mrf.mxu0
      %3037 = vmatprep.mubr.bf16.mxu0 0
      %3038 = vmatmul.mubr.bf16.gmra.mxu0 %v2890
      %v3039 = vpop.f32.mrf.mxu0
      %v3040 = vadd.f32 0.0, %v3039
      %v3041 = vpop.f32.mrf.mxu0
      %v3042 = vpop.f32.mrf.mxu0
      %v3043 = vadd.f32 0.0, %v3042
      %v3044 = vpop.f32.mrf.mxu0
      %3045 = vmatprep.mubr.bf16.mxu0 0
      %3046 = vmatmul.mubr.bf16.gmra.mxu0 %v2893
      %v3047 = vpop.f32.mrf.mxu0
      %v3048 = vadd.f32 0.0, %v3047
      %v3049 = vpop.f32.mrf.mxu0
      %v3050 = vpop.f32.mrf.mxu0
      %v3051 = vadd.f32 0.0, %v3050
      %v3052 = vpop.f32.mrf.mxu0
      %3053 = vmatprep.mubr.bf16.mxu0 0
      %3054 = vmatmul.mubr.bf16.gmra.mxu0 %v2896
      %v3055 = vpop.f32.mrf.mxu0
      %v3056 = vadd.f32 0.0, %v3055
      %v3057 = vpop.f32.mrf.mxu0
      %v3058 = vpop.f32.mrf.mxu0
      %v3059 = vadd.f32 0.0, %v3058
      %v3060 = vpop.f32.mrf.mxu0
      %3061 = vdwg.mxu0
      %v3062 = vadd.f32 %v2640, %v2936
      %v3063 = vadd.f32 %v2641, %v2939
      %v3064 = vadd.f32 %v2642, %v2944
      %v3065 = vadd.f32 %v2643, %v2947
      %v3066 = vadd.f32 %v2644, %v2952
      %v3067 = vadd.f32 %v2645, %v2955
      %v3068 = vadd.f32 %v2646, %v2960
      %v3069 = vadd.f32 %v2647, %v2963
      %v3070 = vadd.f32 %v2648, %v2968
      %v3071 = vadd.f32 %v2649, %v2971
      %v3072 = vadd.f32 %v2650, %v2976
      %v3073 = vadd.f32 %v2651, %v2979
      %v3074 = vadd.f32 %v2652, %v2984
      %v3075 = vadd.f32 %v2653, %v2987
      %v3076 = vadd.f32 %v2654, %v2992
      %v3077 = vadd.f32 %v2655, %v2995
      %v3078 = vadd.f32 %v2656, %v3000
      %v3079 = vadd.f32 %v2657, %v3003
      %v3080 = vadd.f32 %v2658, %v3008
      %v3081 = vadd.f32 %v2659, %v3011
      %v3082 = vadd.f32 %v2660, %v3016
      %v3083 = vadd.f32 %v2661, %v3019
      %v3084 = vadd.f32 %v2662, %v3024
      %v3085 = vadd.f32 %v2663, %v3027
      %v3086 = vadd.f32 %v2664, %v3032
      %v3087 = vadd.f32 %v2665, %v3035
      %v3088 = vadd.f32 %v2666, %v3040
      %v3089 = vadd.f32 %v2667, %v3043
      %v3090 = vadd.f32 %v2668, %v3048
      %v3091 = vadd.f32 %v2669, %v3051
      %v3092 = vadd.f32 %v2670, %v3056
      %v3093 = vadd.f32 %v2671, %v3059
      %s3094 = sadd.s32 %s195, 2
      %s3095 = smul.u32 %s3094, 3
      %s3096 = smul.addr %s3095, 4
      %s3097 = scalar_lea.vmem %s183, %s3096
      %v3098 = vld [vmem:[%s3097] sm:$0xf]
      %v3099 = vld [vmem:[%s3097 + $0x4] sm:$0xf]
      %v3100 = vld [vmem:[%s3097 + $0x8] sm:$0x1]
      %v3101 = vld [vmem:[%s3097 + $0xc] sm:$0xf]
      %v3102 = vld [vmem:[%s3097 + $0x10] sm:$0xf]
      %v3103 = vld [vmem:[%s3097 + $0x14] sm:$0x1]
      %v3104 = vld [vmem:[%s3097 + $0x18] sm:$0xf]
      %v3105 = vld [vmem:[%s3097 + $0x1c] sm:$0xf]
      %v3106 = vld [vmem:[%s3097 + $0x20] sm:$0x1]
      %v3107 = vld [vmem:[%s3097 + $0x24] sm:$0xf]
      %v3108 = vld [vmem:[%s3097 + $0x28] sm:$0xf]
      %v3109 = vld [vmem:[%s3097 + $0x2c] sm:$0x1]
      %v3110 = vld [vmem:[%s3097 + $0x30] sm:$0xf]
      %v3111 = vld [vmem:[%s3097 + $0x34] sm:$0xf]
      %v3112 = vld [vmem:[%s3097 + $0x38] sm:$0x1]
      %v3113 = vld [vmem:[%s3097 + $0x3c] sm:$0xf]
      %v3114 = vld [vmem:[%s3097 + $0x40] sm:$0xf]
      %v3115 = vld [vmem:[%s3097 + $0x44] sm:$0x1]
      %v3116 = vld [vmem:[%s3097 + $0x48] sm:$0xf]
      %v3117 = vld [vmem:[%s3097 + $0x4c] sm:$0xf]
      %v3118 = vld [vmem:[%s3097 + $0x50] sm:$0x1]
      %v3119 = vld [vmem:[%s3097 + $0x54] sm:$0xf]
      %v3120 = vld [vmem:[%s3097 + $0x58] sm:$0xf]
      %v3121 = vld [vmem:[%s3097 + $0x5c] sm:$0x1]
      %v3122 = vld [vmem:[%s3097 + $0x60] sm:$0xf]
      %v3123 = vld [vmem:[%s3097 + $0x64] sm:$0xf]
      %v3124 = vld [vmem:[%s3097 + $0x68] sm:$0x1]
      %v3125 = vld [vmem:[%s3097 + $0x6c] sm:$0xf]
      %v3126 = vld [vmem:[%s3097 + $0x70] sm:$0xf]
      %v3127 = vld [vmem:[%s3097 + $0x74] sm:$0x1]
      %v3128 = vld [vmem:[%s3097 + $0x78] sm:$0xf]
      %v3129 = vld [vmem:[%s3097 + $0x7c] sm:$0xf]
      %v3130 = vld [vmem:[%s3097 + $0x80] sm:$0x1]
      %v3131 = vld [vmem:[%s3097 + $0x84] sm:$0xf]
      %v3132 = vld [vmem:[%s3097 + $0x88] sm:$0xf]
      %v3133 = vld [vmem:[%s3097 + $0x8c] sm:$0x1]
      %v3134 = vld [vmem:[%s3097 + $0x90] sm:$0xf]
      %v3135 = vld [vmem:[%s3097 + $0x94] sm:$0xf]
      %v3136 = vld [vmem:[%s3097 + $0x98] sm:$0x1]
      %v3137 = vld [vmem:[%s3097 + $0x9c] sm:$0xf]
      %v3138 = vld [vmem:[%s3097 + $0xa0] sm:$0xf]
      %v3139 = vld [vmem:[%s3097 + $0xa4] sm:$0x1]
      %v3140 = vld [vmem:[%s3097 + $0xa8] sm:$0xf]
      %v3141 = vld [vmem:[%s3097 + $0xac] sm:$0xf]
      %v3142 = vld [vmem:[%s3097 + $0xb0] sm:$0x1]
      %v3143 = vld [vmem:[%s3097 + $0xb4] sm:$0xf]
      %v3144 = vld [vmem:[%s3097 + $0xb8] sm:$0xf]
      %v3145 = vld [vmem:[%s3097 + $0xbc] sm:$0x1]
      %s3146 = scalar_lea.vmem %s1, 12
      %v3147 = vld [vmem:[%s3146] sm:$0x3]
      %v3180 = vunpack.c.l.b16 %v3098
      %v3181 = vunpack.c.l.b16 %v3099
      %v3182 = vunpack.c.l.b16 %v3101
      %v3183 = vunpack.c.l.b16 %v3102
      %v3184 = vunpack.c.l.b16 %v3104
      %v3185 = vunpack.c.l.b16 %v3105
      %v3186 = vunpack.c.l.b16 %v3107
      %v3187 = vunpack.c.l.b16 %v3108
      %v3188 = vunpack.c.l.b16 %v3110
      %v3189 = vunpack.c.l.b16 %v3111
      %v3190 = vunpack.c.l.b16 %v3113
      %v3191 = vunpack.c.l.b16 %v3114
      %v3192 = vunpack.c.l.b16 %v3116
      %v3193 = vunpack.c.l.b16 %v3117
      %v3194 = vunpack.c.l.b16 %v3119
      %v3195 = vunpack.c.l.b16 %v3120
      %v3196 = vunpack.c.l.b16 %v3122
      %v3197 = vunpack.c.l.b16 %v3123
      %v3198 = vunpack.c.l.b16 %v3125
      %v3199 = vunpack.c.l.b16 %v3126
      %v3200 = vunpack.c.l.b16 %v3128
      %v3201 = vunpack.c.l.b16 %v3129
      %v3202 = vunpack.c.l.b16 %v3131
      %v3203 = vunpack.c.l.b16 %v3132
      %v3204 = vunpack.c.l.b16 %v3134
      %v3205 = vunpack.c.l.b16 %v3135
      %v3206 = vunpack.c.l.b16 %v3137
      %v3207 = vunpack.c.l.b16 %v3138
      %v3208 = vunpack.c.l.b16 %v3140
      %v3209 = vunpack.c.l.b16 %v3141
      %v3210 = vunpack.c.l.b16 %v3143
      %v3211 = vunpack.c.l.b16 %v3144
      %v3212 = vpack.c.b16 %v3181, %v3180
      %v3213 = vpack.c.b16 %v3183, %v3182
      %v3214 = vpack.c.b16 %v3185, %v3184
      %v3215 = vpack.c.b16 %v3187, %v3186
      %v3216 = vpack.c.b16 %v3189, %v3188
      %v3217 = vpack.c.b16 %v3191, %v3190
      %v3218 = vpack.c.b16 %v3193, %v3192
      %v3219 = vpack.c.b16 %v3195, %v3194
      %v3220 = vpack.c.b16 %v3197, %v3196
      %v3221 = vpack.c.b16 %v3199, %v3198
      %v3222 = vpack.c.b16 %v3201, %v3200
      %v3223 = vpack.c.b16 %v3203, %v3202
      %v3224 = vpack.c.b16 %v3205, %v3204
      %v3225 = vpack.c.b16 %v3207, %v3206
      %v3226 = vpack.c.b16 %v3209, %v3208
      %v3227 = vpack.c.b16 %v3211, %v3210
      %v3229 = vsel %vm685, %v3212, 0
      %v3232 = vsel %vm685, %v3213, 0
      %v3235 = vsel %vm685, %v3214, 0
      %v3238 = vsel %vm685, %v3215, 0
      %v3241 = vsel %vm685, %v3216, 0
      %v3244 = vsel %vm685, %v3217, 0
      %v3247 = vsel %vm685, %v3218, 0
      %v3250 = vsel %vm685, %v3219, 0
      %v3253 = vsel %vm685, %v3220, 0
      %v3256 = vsel %vm685, %v3221, 0
      %v3259 = vsel %vm685, %v3222, 0
      %v3262 = vsel %vm685, %v3223, 0
      %v3265 = vsel %vm685, %v3224, 0
      %v3268 = vsel %vm685, %v3225, 0
      %v3271 = vsel %vm685, %v3226, 0
      %v3274 = vsel %vm685, %v3227, 0
      %v3277 = vsel %vm734, %v3147, 0
      %3279 = vmatprep.subr.bf16.mxu0 0
      %3280 = vmatpush1.bf16.msra.mxu0 0
      %3281 = vmatprep.subr.bf16.mxu0 0
      %3282 = vmatpush1.bf16.msra.mxu0 0
      %3283 = vmatprep.subr.bf16.mxu0 0
      %3284 = vmatpush1.bf16.msra.mxu0 0
      %3285 = vmatprep.subr.bf16.mxu0 0
      %3286 = vmatpush1.bf16.msra.mxu0 0
      %3287 = vmatprep.subr.bf16.mxu0 0
      %3288 = vmatpush1.bf16.msra.mxu0 0
      %3289 = vmatprep.subr.bf16.mxu0 0
      %3290 = vmatpush1.bf16.msra.mxu0 0
      %3291 = vmatprep.subr.bf16.mxu0 0
      %3292 = vmatpush1.bf16.msra.mxu0 0
      %3293 = vmatprep.subr.bf16.mxu0 0
      %3294 = vmatpush1.bf16.msra.mxu0 %v3277
      %3295 = vmatprep.subr.bf16.mxu0 0
      %3296 = vmatpush2.bf16.msra.mxu0 0
      %3297 = vmatprep.subr.bf16.mxu0 0
      %3298 = vmatpush2.bf16.msra.mxu0 0
      %3299 = vmatprep.subr.bf16.mxu0 0
      %3300 = vmatpush2.bf16.msra.mxu0 0
      %3301 = vmatprep.subr.bf16.mxu0 0
      %3302 = vmatpush2.bf16.msra.mxu0 0
      %3303 = vmatprep.subr.bf16.mxu0 0
      %3304 = vmatpush2.bf16.msra.mxu0 0
      %3305 = vmatprep.subr.bf16.mxu0 0
      %3306 = vmatpush2.bf16.msra.mxu0 0
      %3307 = vmatprep.subr.bf16.mxu0 0
      %3308 = vmatpush2.bf16.msra.mxu0 0
      %3309 = vmatprep.subr.bf16.mxu0 0
      %3310 = vmatpush2.bf16.msra.mxu0 0
      %3311 = vmatprep.mubr.bf16.mxu0 0
      %3312 = vmatmul.mubr.bf16.gmra.mxu0 %v3229
      %v3313 = vpop.f32.mrf.mxu0
      %v3314 = vadd.f32 0.0, %v3313
      %v3315 = vpop.f32.mrf.mxu0
      %v3316 = vpop.f32.mrf.mxu0
      %v3317 = vadd.f32 0.0, %v3316
      %v3318 = vpop.f32.mrf.mxu0
      %3319 = vmatprep.mubr.bf16.mxu0 0
      %3320 = vmatmul.mubr.bf16.gmra.mxu0 %v3232
      %v3321 = vpop.f32.mrf.mxu0
      %v3322 = vadd.f32 0.0, %v3321
      %v3323 = vpop.f32.mrf.mxu0
      %v3324 = vpop.f32.mrf.mxu0
      %v3325 = vadd.f32 0.0, %v3324
      %v3326 = vpop.f32.mrf.mxu0
      %3327 = vmatprep.mubr.bf16.mxu0 0
      %3328 = vmatmul.mubr.bf16.gmra.mxu0 %v3235
      %v3329 = vpop.f32.mrf.mxu0
      %v3330 = vadd.f32 0.0, %v3329
      %v3331 = vpop.f32.mrf.mxu0
      %v3332 = vpop.f32.mrf.mxu0
      %v3333 = vadd.f32 0.0, %v3332
      %v3334 = vpop.f32.mrf.mxu0
      %3335 = vmatprep.mubr.bf16.mxu0 0
      %3336 = vmatmul.mubr.bf16.gmra.mxu0 %v3238
      %v3337 = vpop.f32.mrf.mxu0
      %v3338 = vadd.f32 0.0, %v3337
      %v3339 = vpop.f32.mrf.mxu0
      %v3340 = vpop.f32.mrf.mxu0
      %v3341 = vadd.f32 0.0, %v3340
      %v3342 = vpop.f32.mrf.mxu0
      %3343 = vmatprep.mubr.bf16.mxu0 0
      %3344 = vmatmul.mubr.bf16.gmra.mxu0 %v3241
      %v3345 = vpop.f32.mrf.mxu0
      %v3346 = vadd.f32 0.0, %v3345
      %v3347 = vpop.f32.mrf.mxu0
      %v3348 = vpop.f32.mrf.mxu0
      %v3349 = vadd.f32 0.0, %v3348
      %v3350 = vpop.f32.mrf.mxu0
      %3351 = vmatprep.mubr.bf16.mxu0 0
      %3352 = vmatmul.mubr.bf16.gmra.mxu0 %v3244
      %v3353 = vpop.f32.mrf.mxu0
      %v3354 = vadd.f32 0.0, %v3353
      %v3355 = vpop.f32.mrf.mxu0
      %v3356 = vpop.f32.mrf.mxu0
      %v3357 = vadd.f32 0.0, %v3356
      %v3358 = vpop.f32.mrf.mxu0
      %3359 = vmatprep.mubr.bf16.mxu0 0
      %3360 = vmatmul.mubr.bf16.gmra.mxu0 %v3247
      %v3361 = vpop.f32.mrf.mxu0
      %v3362 = vadd.f32 0.0, %v3361
      %v3363 = vpop.f32.mrf.mxu0
      %v3364 = vpop.f32.mrf.mxu0
      %v3365 = vadd.f32 0.0, %v3364
      %v3366 = vpop.f32.mrf.mxu0
      %3367 = vmatprep.mubr.bf16.mxu0 0
      %3368 = vmatmul.mubr.bf16.gmra.mxu0 %v3250
      %v3369 = vpop.f32.mrf.mxu0
      %v3370 = vadd.f32 0.0, %v3369
      %v3371 = vpop.f32.mrf.mxu0
      %v3372 = vpop.f32.mrf.mxu0
      %v3373 = vadd.f32 0.0, %v3372
      %v3374 = vpop.f32.mrf.mxu0
      %3375 = vmatprep.mubr.bf16.mxu0 0
      %3376 = vmatmul.mubr.bf16.gmra.mxu0 %v3253
      %v3377 = vpop.f32.mrf.mxu0
      %v3378 = vadd.f32 0.0, %v3377
      %v3379 = vpop.f32.mrf.mxu0
      %v3380 = vpop.f32.mrf.mxu0
      %v3381 = vadd.f32 0.0, %v3380
      %v3382 = vpop.f32.mrf.mxu0
      %3383 = vmatprep.mubr.bf16.mxu0 0
      %3384 = vmatmul.mubr.bf16.gmra.mxu0 %v3256
      %v3385 = vpop.f32.mrf.mxu0
      %v3386 = vadd.f32 0.0, %v3385
      %v3387 = vpop.f32.mrf.mxu0
      %v3388 = vpop.f32.mrf.mxu0
      %v3389 = vadd.f32 0.0, %v3388
      %v3390 = vpop.f32.mrf.mxu0
      %3391 = vmatprep.mubr.bf16.mxu0 0
      %3392 = vmatmul.mubr.bf16.gmra.mxu0 %v3259
      %v3393 = vpop.f32.mrf.mxu0
      %v3394 = vadd.f32 0.0, %v3393
      %v3395 = vpop.f32.mrf.mxu0
      %v3396 = vpop.f32.mrf.mxu0
      %v3397 = vadd.f32 0.0, %v3396
      %v3398 = vpop.f32.mrf.mxu0
      %3399 = vmatprep.mubr.bf16.mxu0 0
      %3400 = vmatmul.mubr.bf16.gmra.mxu0 %v3262
      %v3401 = vpop.f32.mrf.mxu0
      %v3402 = vadd.f32 0.0, %v3401
      %v3403 = vpop.f32.mrf.mxu0
      %v3404 = vpop.f32.mrf.mxu0
      %v3405 = vadd.f32 0.0, %v3404
      %v3406 = vpop.f32.mrf.mxu0
      %3407 = vmatprep.mubr.bf16.mxu0 0
      %3408 = vmatmul.mubr.bf16.gmra.mxu0 %v3265
      %v3409 = vpop.f32.mrf.mxu0
      %v3410 = vadd.f32 0.0, %v3409
      %v3411 = vpop.f32.mrf.mxu0
      %v3412 = vpop.f32.mrf.mxu0
      %v3413 = vadd.f32 0.0, %v3412
      %v3414 = vpop.f32.mrf.mxu0
      %3415 = vmatprep.mubr.bf16.mxu0 0
      %3416 = vmatmul.mubr.bf16.gmra.mxu0 %v3268
      %v3417 = vpop.f32.mrf.mxu0
      %v3418 = vadd.f32 0.0, %v3417
      %v3419 = vpop.f32.mrf.mxu0
      %v3420 = vpop.f32.mrf.mxu0
      %v3421 = vadd.f32 0.0, %v3420
      %v3422 = vpop.f32.mrf.mxu0
      %3423 = vmatprep.mubr.bf16.mxu0 0
      %3424 = vmatmul.mubr.bf16.gmra.mxu0 %v3271
      %v3425 = vpop.f32.mrf.mxu0
      %v3426 = vadd.f32 0.0, %v3425
      %v3427 = vpop.f32.mrf.mxu0
      %v3428 = vpop.f32.mrf.mxu0
      %v3429 = vadd.f32 0.0, %v3428
      %v3430 = vpop.f32.mrf.mxu0
      %3431 = vmatprep.mubr.bf16.mxu0 0
      %3432 = vmatmul.mubr.bf16.gmra.mxu0 %v3274
      %v3433 = vpop.f32.mrf.mxu0
      %v3434 = vadd.f32 0.0, %v3433
      %v3435 = vpop.f32.mrf.mxu0
      %v3436 = vpop.f32.mrf.mxu0
      %v3437 = vadd.f32 0.0, %v3436
      %v3438 = vpop.f32.mrf.mxu0
      %3439 = vdwg.mxu0
      %v3440 = vadd.f32 %v3062, %v3314
      %v3441 = vadd.f32 %v3063, %v3317
      %v3442 = vadd.f32 %v3064, %v3322
      %v3443 = vadd.f32 %v3065, %v3325
      %v3444 = vadd.f32 %v3066, %v3330
      %v3445 = vadd.f32 %v3067, %v3333
      %v3446 = vadd.f32 %v3068, %v3338
      %v3447 = vadd.f32 %v3069, %v3341
      %v3448 = vadd.f32 %v3070, %v3346
      %v3449 = vadd.f32 %v3071, %v3349
      %v3450 = vadd.f32 %v3072, %v3354
      %v3451 = vadd.f32 %v3073, %v3357
      %v3452 = vadd.f32 %v3074, %v3362
      %v3453 = vadd.f32 %v3075, %v3365
      %v3454 = vadd.f32 %v3076, %v3370
      %v3455 = vadd.f32 %v3077, %v3373
      %v3456 = vadd.f32 %v3078, %v3378
      %v3457 = vadd.f32 %v3079, %v3381
      %v3458 = vadd.f32 %v3080, %v3386
      %v3459 = vadd.f32 %v3081, %v3389
      %v3460 = vadd.f32 %v3082, %v3394
      %v3461 = vadd.f32 %v3083, %v3397
      %v3462 = vadd.f32 %v3084, %v3402
      %v3463 = vadd.f32 %v3085, %v3405
      %v3464 = vadd.f32 %v3086, %v3410
      %v3465 = vadd.f32 %v3087, %v3413
      %v3466 = vadd.f32 %v3088, %v3418
      %v3467 = vadd.f32 %v3089, %v3421
      %v3468 = vadd.f32 %v3090, %v3426
      %v3469 = vadd.f32 %v3091, %v3429
      %v3470 = vadd.f32 %v3092, %v3434
      %v3471 = vadd.f32 %v3093, %v3437
      %v3473 = vshrl.u32 %v3098, 16
      %v3475 = vrot.slane %v3473, 4
      %v3476 = vshll.u32 %v3098, 16
      %v3478 = vrot.slane %v3476, 5
      %v3479 = vor.u32 %v3475, %v3478
      %v3480 = vrot.slane %v3479, 4
      %v3482 = vshll.u32 %v3099, 16
      %v3484 = vrot.slane %v3482, 5
      %v3485 = vsel %vm250, %v3480, %v3484
      %v3486 = vshrl.u32 %v3099, 16
      %v3488 = vrot.slane %v3486, 4
      %v3489 = vor.u32 %v3488, %v3484
      %v3490 = vrot.slane %v3489, 4
      %v3492 = vshll.u32 %v3100, 16
      %v3494 = vrot.slane %v3492, 5
      %v3495 = vsel %vm250, %v3490, %v3494
      %v3497 = vshrl.u32 %v3101, 16
      %v3499 = vrot.slane %v3497, 4
      %v3500 = vshll.u32 %v3101, 16
      %v3502 = vrot.slane %v3500, 5
      %v3503 = vor.u32 %v3499, %v3502
      %v3504 = vrot.slane %v3503, 4
      %v3506 = vshll.u32 %v3102, 16
      %v3508 = vrot.slane %v3506, 5
      %v3509 = vsel %vm250, %v3504, %v3508
      %v3510 = vshrl.u32 %v3102, 16
      %v3512 = vrot.slane %v3510, 4
      %v3513 = vor.u32 %v3512, %v3508
      %v3514 = vrot.slane %v3513, 4
      %v3516 = vshll.u32 %v3103, 16
      %v3518 = vrot.slane %v3516, 5
      %v3519 = vsel %vm250, %v3514, %v3518
      %v3521 = vshrl.u32 %v3104, 16
      %v3523 = vrot.slane %v3521, 4
      %v3524 = vshll.u32 %v3104, 16
      %v3526 = vrot.slane %v3524, 5
      %v3527 = vor.u32 %v3523, %v3526
      %v3528 = vrot.slane %v3527, 4
      %v3530 = vshll.u32 %v3105, 16
      %v3532 = vrot.slane %v3530, 5
      %v3533 = vsel %vm250, %v3528, %v3532
      %v3534 = vshrl.u32 %v3105, 16
      %v3536 = vrot.slane %v3534, 4
      %v3537 = vor.u32 %v3536, %v3532
      %v3538 = vrot.slane %v3537, 4
      %v3540 = vshll.u32 %v3106, 16
      %v3542 = vrot.slane %v3540, 5
      %v3543 = vsel %vm250, %v3538, %v3542
      %v3545 = vshrl.u32 %v3107, 16
      %v3547 = vrot.slane %v3545, 4
      %v3548 = vshll.u32 %v3107, 16
      %v3550 = vrot.slane %v3548, 5
      %v3551 = vor.u32 %v3547, %v3550
      %v3552 = vrot.slane %v3551, 4
      %v3554 = vshll.u32 %v3108, 16
      %v3556 = vrot.slane %v3554, 5
      %v3557 = vsel %vm250, %v3552, %v3556
      %v3558 = vshrl.u32 %v3108, 16
      %v3560 = vrot.slane %v3558, 4
      %v3561 = vor.u32 %v3560, %v3556
      %v3562 = vrot.slane %v3561, 4
      %v3564 = vshll.u32 %v3109, 16
      %v3566 = vrot.slane %v3564, 5
      %v3567 = vsel %vm250, %v3562, %v3566
      %v3569 = vshrl.u32 %v3110, 16
      %v3571 = vrot.slane %v3569, 4
      %v3572 = vshll.u32 %v3110, 16
      %v3574 = vrot.slane %v3572, 5
      %v3575 = vor.u32 %v3571, %v3574
      %v3576 = vrot.slane %v3575, 4
      %v3578 = vshll.u32 %v3111, 16
      %v3580 = vrot.slane %v3578, 5
      %v3581 = vsel %vm250, %v3576, %v3580
      %v3582 = vshrl.u32 %v3111, 16
      %v3584 = vrot.slane %v3582, 4
      %v3585 = vor.u32 %v3584, %v3580
      %v3586 = vrot.slane %v3585, 4
      %v3588 = vshll.u32 %v3112, 16
      %v3590 = vrot.slane %v3588, 5
      %v3591 = vsel %vm250, %v3586, %v3590
      %v3593 = vshrl.u32 %v3113, 16
      %v3595 = vrot.slane %v3593, 4
      %v3596 = vshll.u32 %v3113, 16
      %v3598 = vrot.slane %v3596, 5
      %v3599 = vor.u32 %v3595, %v3598
      %v3600 = vrot.slane %v3599, 4
      %v3602 = vshll.u32 %v3114, 16
      %v3604 = vrot.slane %v3602, 5
      %v3605 = vsel %vm250, %v3600, %v3604
      %v3606 = vshrl.u32 %v3114, 16
      %v3608 = vrot.slane %v3606, 4
      %v3609 = vor.u32 %v3608, %v3604
      %v3610 = vrot.slane %v3609, 4
      %v3612 = vshll.u32 %v3115, 16
      %v3614 = vrot.slane %v3612, 5
      %v3615 = vsel %vm250, %v3610, %v3614
      %v3617 = vshrl.u32 %v3116, 16
      %v3619 = vrot.slane %v3617, 4
      %v3620 = vshll.u32 %v3116, 16
      %v3622 = vrot.slane %v3620, 5
      %v3623 = vor.u32 %v3619, %v3622
      %v3624 = vrot.slane %v3623, 4
      %v3626 = vshll.u32 %v3117, 16
      %v3628 = vrot.slane %v3626, 5
      %v3629 = vsel %vm250, %v3624, %v3628
      %v3630 = vshrl.u32 %v3117, 16
      %v3632 = vrot.slane %v3630, 4
      %v3633 = vor.u32 %v3632, %v3628
      %v3634 = vrot.slane %v3633, 4
      %v3636 = vshll.u32 %v3118, 16
      %v3638 = vrot.slane %v3636, 5
      %v3639 = vsel %vm250, %v3634, %v3638
      %v3641 = vshrl.u32 %v3119, 16
      %v3643 = vrot.slane %v3641, 4
      %v3644 = vshll.u32 %v3119, 16
      %v3646 = vrot.slane %v3644, 5
      %v3647 = vor.u32 %v3643, %v3646
      %v3648 = vrot.slane %v3647, 4
      %v3650 = vshll.u32 %v3120, 16
      %v3652 = vrot.slane %v3650, 5
      %v3653 = vsel %vm250, %v3648, %v3652
      %v3654 = vshrl.u32 %v3120, 16
      %v3656 = vrot.slane %v3654, 4
      %v3657 = vor.u32 %v3656, %v3652
      %v3658 = vrot.slane %v3657, 4
      %v3660 = vshll.u32 %v3121, 16
      %v3662 = vrot.slane %v3660, 5
      %v3663 = vsel %vm250, %v3658, %v3662
      %v3665 = vshrl.u32 %v3122, 16
      %v3667 = vrot.slane %v3665, 4
      %v3668 = vshll.u32 %v3122, 16
      %v3670 = vrot.slane %v3668, 5
      %v3671 = vor.u32 %v3667, %v3670
      %v3672 = vrot.slane %v3671, 4
      %v3674 = vshll.u32 %v3123, 16
      %v3676 = vrot.slane %v3674, 5
      %v3677 = vsel %vm250, %v3672, %v3676
      %v3678 = vshrl.u32 %v3123, 16
      %v3680 = vrot.slane %v3678, 4
      %v3681 = vor.u32 %v3680, %v3676
      %v3682 = vrot.slane %v3681, 4
      %v3684 = vshll.u32 %v3124, 16
      %v3686 = vrot.slane %v3684, 5
      %v3687 = vsel %vm250, %v3682, %v3686
      %v3689 = vshrl.u32 %v3125, 16
      %v3691 = vrot.slane %v3689, 4
      %v3692 = vshll.u32 %v3125, 16
      %v3694 = vrot.slane %v3692, 5
      %v3695 = vor.u32 %v3691, %v3694
      %v3696 = vrot.slane %v3695, 4
      %v3698 = vshll.u32 %v3126, 16
      %v3700 = vrot.slane %v3698, 5
      %v3701 = vsel %vm250, %v3696, %v3700
      %v3702 = vshrl.u32 %v3126, 16
      %v3704 = vrot.slane %v3702, 4
      %v3705 = vor.u32 %v3704, %v3700
      %v3706 = vrot.slane %v3705, 4
      %v3708 = vshll.u32 %v3127, 16
      %v3710 = vrot.slane %v3708, 5
      %v3711 = vsel %vm250, %v3706, %v3710
      %v3713 = vshrl.u32 %v3128, 16
      %v3715 = vrot.slane %v3713, 4
      %v3716 = vshll.u32 %v3128, 16
      %v3718 = vrot.slane %v3716, 5
      %v3719 = vor.u32 %v3715, %v3718
      %v3720 = vrot.slane %v3719, 4
      %v3722 = vshll.u32 %v3129, 16
      %v3724 = vrot.slane %v3722, 5
      %v3725 = vsel %vm250, %v3720, %v3724
      %v3726 = vshrl.u32 %v3129, 16
      %v3728 = vrot.slane %v3726, 4
      %v3729 = vor.u32 %v3728, %v3724
      %v3730 = vrot.slane %v3729, 4
      %v3732 = vshll.u32 %v3130, 16
      %v3734 = vrot.slane %v3732, 5
      %v3735 = vsel %vm250, %v3730, %v3734
      %v3737 = vshrl.u32 %v3131, 16
      %v3739 = vrot.slane %v3737, 4
      %v3740 = vshll.u32 %v3131, 16
      %v3742 = vrot.slane %v3740, 5
      %v3743 = vor.u32 %v3739, %v3742
      %v3744 = vrot.slane %v3743, 4
      %v3746 = vshll.u32 %v3132, 16
      %v3748 = vrot.slane %v3746, 5
      %v3749 = vsel %vm250, %v3744, %v3748
      %v3750 = vshrl.u32 %v3132, 16
      %v3752 = vrot.slane %v3750, 4
      %v3753 = vor.u32 %v3752, %v3748
      %v3754 = vrot.slane %v3753, 4
      %v3756 = vshll.u32 %v3133, 16
      %v3758 = vrot.slane %v3756, 5
      %v3759 = vsel %vm250, %v3754, %v3758
      %v3761 = vshrl.u32 %v3134, 16
      %v3763 = vrot.slane %v3761, 4
      %v3764 = vshll.u32 %v3134, 16
      %v3766 = vrot.slane %v3764, 5
      %v3767 = vor.u32 %v3763, %v3766
      %v3768 = vrot.slane %v3767, 4
      %v3770 = vshll.u32 %v3135, 16
      %v3772 = vrot.slane %v3770, 5
      %v3773 = vsel %vm250, %v3768, %v3772
      %v3774 = vshrl.u32 %v3135, 16
      %v3776 = vrot.slane %v3774, 4
      %v3777 = vor.u32 %v3776, %v3772
      %v3778 = vrot.slane %v3777, 4
      %v3780 = vshll.u32 %v3136, 16
      %v3782 = vrot.slane %v3780, 5
      %v3783 = vsel %vm250, %v3778, %v3782
      %v3785 = vshrl.u32 %v3137, 16
      %v3787 = vrot.slane %v3785, 4
      %v3788 = vshll.u32 %v3137, 16
      %v3790 = vrot.slane %v3788, 5
      %v3791 = vor.u32 %v3787, %v3790
      %v3792 = vrot.slane %v3791, 4
      %v3794 = vshll.u32 %v3138, 16
      %v3796 = vrot.slane %v3794, 5
      %v3797 = vsel %vm250, %v3792, %v3796
      %v3798 = vshrl.u32 %v3138, 16
      %v3800 = vrot.slane %v3798, 4
      %v3801 = vor.u32 %v3800, %v3796
      %v3802 = vrot.slane %v3801, 4
      %v3804 = vshll.u32 %v3139, 16
      %v3806 = vrot.slane %v3804, 5
      %v3807 = vsel %vm250, %v3802, %v3806
      %v3809 = vshrl.u32 %v3140, 16
      %v3811 = vrot.slane %v3809, 4
      %v3812 = vshll.u32 %v3140, 16
      %v3814 = vrot.slane %v3812, 5
      %v3815 = vor.u32 %v3811, %v3814
      %v3816 = vrot.slane %v3815, 4
      %v3818 = vshll.u32 %v3141, 16
      %v3820 = vrot.slane %v3818, 5
      %v3821 = vsel %vm250, %v3816, %v3820
      %v3822 = vshrl.u32 %v3141, 16
      %v3824 = vrot.slane %v3822, 4
      %v3825 = vor.u32 %v3824, %v3820
      %v3826 = vrot.slane %v3825, 4
      %v3828 = vshll.u32 %v3142, 16
      %v3830 = vrot.slane %v3828, 5
      %v3831 = vsel %vm250, %v3826, %v3830
      %v3833 = vshrl.u32 %v3143, 16
      %v3835 = vrot.slane %v3833, 4
      %v3836 = vshll.u32 %v3143, 16
      %v3838 = vrot.slane %v3836, 5
      %v3839 = vor.u32 %v3835, %v3838
      %v3840 = vrot.slane %v3839, 4
      %v3842 = vshll.u32 %v3144, 16
      %v3844 = vrot.slane %v3842, 5
      %v3845 = vsel %vm250, %v3840, %v3844
      %v3846 = vshrl.u32 %v3144, 16
      %v3848 = vrot.slane %v3846, 4
      %v3849 = vor.u32 %v3848, %v3844
      %v3850 = vrot.slane %v3849, 4
      %v3852 = vshll.u32 %v3145, 16
      %v3854 = vrot.slane %v3852, 5
      %v3855 = vsel %vm250, %v3850, %v3854
      %s3856 = scalar_lea.vmem %s1, 14
      %v3857 = vld [vmem:[%s3856] sm:$0x3]
      %v3858 = vunpack.c.l.b16 %v3485
      %v3859 = vunpack.c.l.b16 %v3495
      %v3860 = vunpack.c.l.b16 %v3509
      %v3861 = vunpack.c.l.b16 %v3519
      %v3862 = vunpack.c.l.b16 %v3533
      %v3863 = vunpack.c.l.b16 %v3543
      %v3864 = vunpack.c.l.b16 %v3557
      %v3865 = vunpack.c.l.b16 %v3567
      %v3866 = vunpack.c.l.b16 %v3581
      %v3867 = vunpack.c.l.b16 %v3591
      %v3868 = vunpack.c.l.b16 %v3605
      %v3869 = vunpack.c.l.b16 %v3615
      %v3870 = vunpack.c.l.b16 %v3629
      %v3871 = vunpack.c.l.b16 %v3639
      %v3872 = vunpack.c.l.b16 %v3653
      %v3873 = vunpack.c.l.b16 %v3663
      %v3874 = vunpack.c.l.b16 %v3677
      %v3875 = vunpack.c.l.b16 %v3687
      %v3876 = vunpack.c.l.b16 %v3701
      %v3877 = vunpack.c.l.b16 %v3711
      %v3878 = vunpack.c.l.b16 %v3725
      %v3879 = vunpack.c.l.b16 %v3735
      %v3880 = vunpack.c.l.b16 %v3749
      %v3881 = vunpack.c.l.b16 %v3759
      %v3882 = vunpack.c.l.b16 %v3773
      %v3883 = vunpack.c.l.b16 %v3783
      %v3884 = vunpack.c.l.b16 %v3797
      %v3885 = vunpack.c.l.b16 %v3807
      %v3886 = vunpack.c.l.b16 %v3821
      %v3887 = vunpack.c.l.b16 %v3831
      %v3888 = vunpack.c.l.b16 %v3845
      %v3889 = vunpack.c.l.b16 %v3855
      %v3890 = vpack.c.b16 %v3859, %v3858
      %v3891 = vpack.c.b16 %v3861, %v3860
      %v3892 = vpack.c.b16 %v3863, %v3862
      %v3893 = vpack.c.b16 %v3865, %v3864
      %v3894 = vpack.c.b16 %v3867, %v3866
      %v3895 = vpack.c.b16 %v3869, %v3868
      %v3896 = vpack.c.b16 %v3871, %v3870
      %v3897 = vpack.c.b16 %v3873, %v3872
      %v3898 = vpack.c.b16 %v3875, %v3874
      %v3899 = vpack.c.b16 %v3877, %v3876
      %v3900 = vpack.c.b16 %v3879, %v3878
      %v3901 = vpack.c.b16 %v3881, %v3880
      %v3902 = vpack.c.b16 %v3883, %v3882
      %v3903 = vpack.c.b16 %v3885, %v3884
      %v3904 = vpack.c.b16 %v3887, %v3886
      %v3905 = vpack.c.b16 %v3889, %v3888
      %v3907 = vsel %vm685, %v3890, 0
      %v3910 = vsel %vm685, %v3891, 0
      %v3913 = vsel %vm685, %v3892, 0
      %v3916 = vsel %vm685, %v3893, 0
      %v3919 = vsel %vm685, %v3894, 0
      %v3922 = vsel %vm685, %v3895, 0
      %v3925 = vsel %vm685, %v3896, 0
      %v3928 = vsel %vm685, %v3897, 0
      %v3931 = vsel %vm685, %v3898, 0
      %v3934 = vsel %vm685, %v3899, 0
      %v3937 = vsel %vm685, %v3900, 0
      %v3940 = vsel %vm685, %v3901, 0
      %v3943 = vsel %vm685, %v3902, 0
      %v3946 = vsel %vm685, %v3903, 0
      %v3949 = vsel %vm685, %v3904, 0
      %v3952 = vsel %vm685, %v3905, 0
      %v3955 = vsel %vm734, %v3857, 0
      %3957 = vmatprep.subr.bf16.mxu0 0
      %3958 = vmatpush1.bf16.msra.mxu0 0
      %3959 = vmatprep.subr.bf16.mxu0 0
      %3960 = vmatpush1.bf16.msra.mxu0 0
      %3961 = vmatprep.subr.bf16.mxu0 0
      %3962 = vmatpush1.bf16.msra.mxu0 0
      %3963 = vmatprep.subr.bf16.mxu0 0
      %3964 = vmatpush1.bf16.msra.mxu0 0
      %3965 = vmatprep.subr.bf16.mxu0 0
      %3966 = vmatpush1.bf16.msra.mxu0 0
      %3967 = vmatprep.subr.bf16.mxu0 0
      %3968 = vmatpush1.bf16.msra.mxu0 0
      %3969 = vmatprep.subr.bf16.mxu0 0
      %3970 = vmatpush1.bf16.msra.mxu0 0
      %3971 = vmatprep.subr.bf16.mxu0 0
      %3972 = vmatpush1.bf16.msra.mxu0 %v3955
      %3973 = vmatprep.subr.bf16.mxu0 0
      %3974 = vmatpush2.bf16.msra.mxu0 0
      %3975 = vmatprep.subr.bf16.mxu0 0
      %3976 = vmatpush2.bf16.msra.mxu0 0
      %3977 = vmatprep.subr.bf16.mxu0 0
      %3978 = vmatpush2.bf16.msra.mxu0 0
      %3979 = vmatprep.subr.bf16.mxu0 0
      %3980 = vmatpush2.bf16.msra.mxu0 0
      %3981 = vmatprep.subr.bf16.mxu0 0
      %3982 = vmatpush2.bf16.msra.mxu0 0
      %3983 = vmatprep.subr.bf16.mxu0 0
      %3984 = vmatpush2.bf16.msra.mxu0 0
      %3985 = vmatprep.subr.bf16.mxu0 0
      %3986 = vmatpush2.bf16.msra.mxu0 0
      %3987 = vmatprep.subr.bf16.mxu0 0
      %3988 = vmatpush2.bf16.msra.mxu0 0
      %3989 = vmatprep.mubr.bf16.mxu0 0
      %3990 = vmatmul.mubr.bf16.gmra.mxu0 %v3907
      %v3991 = vpop.f32.mrf.mxu0
      %v3992 = vadd.f32 0.0, %v3991
      %v3993 = vpop.f32.mrf.mxu0
      %v3994 = vpop.f32.mrf.mxu0
      %v3995 = vadd.f32 0.0, %v3994
      %v3996 = vpop.f32.mrf.mxu0
      %3997 = vmatprep.mubr.bf16.mxu0 0
      %3998 = vmatmul.mubr.bf16.gmra.mxu0 %v3910
      %v3999 = vpop.f32.mrf.mxu0
      %v4000 = vadd.f32 0.0, %v3999
      %v4001 = vpop.f32.mrf.mxu0
      %v4002 = vpop.f32.mrf.mxu0
      %v4003 = vadd.f32 0.0, %v4002
      %v4004 = vpop.f32.mrf.mxu0
      %4005 = vmatprep.mubr.bf16.mxu0 0
      %4006 = vmatmul.mubr.bf16.gmra.mxu0 %v3913
      %v4007 = vpop.f32.mrf.mxu0
      %v4008 = vadd.f32 0.0, %v4007
      %v4009 = vpop.f32.mrf.mxu0
      %v4010 = vpop.f32.mrf.mxu0
      %v4011 = vadd.f32 0.0, %v4010
      %v4012 = vpop.f32.mrf.mxu0
      %4013 = vmatprep.mubr.bf16.mxu0 0
      %4014 = vmatmul.mubr.bf16.gmra.mxu0 %v3916
      %v4015 = vpop.f32.mrf.mxu0
      %v4016 = vadd.f32 0.0, %v4015
      %v4017 = vpop.f32.mrf.mxu0
      %v4018 = vpop.f32.mrf.mxu0
      %v4019 = vadd.f32 0.0, %v4018
      %v4020 = vpop.f32.mrf.mxu0
      %4021 = vmatprep.mubr.bf16.mxu0 0
      %4022 = vmatmul.mubr.bf16.gmra.mxu0 %v3919
      %v4023 = vpop.f32.mrf.mxu0
      %v4024 = vadd.f32 0.0, %v4023
      %v4025 = vpop.f32.mrf.mxu0
      %v4026 = vpop.f32.mrf.mxu0
      %v4027 = vadd.f32 0.0, %v4026
      %v4028 = vpop.f32.mrf.mxu0
      %4029 = vmatprep.mubr.bf16.mxu0 0
      %4030 = vmatmul.mubr.bf16.gmra.mxu0 %v3922
      %v4031 = vpop.f32.mrf.mxu0
      %v4032 = vadd.f32 0.0, %v4031
      %v4033 = vpop.f32.mrf.mxu0
      %v4034 = vpop.f32.mrf.mxu0
      %v4035 = vadd.f32 0.0, %v4034
      %v4036 = vpop.f32.mrf.mxu0
      %4037 = vmatprep.mubr.bf16.mxu0 0
      %4038 = vmatmul.mubr.bf16.gmra.mxu0 %v3925
      %v4039 = vpop.f32.mrf.mxu0
      %v4040 = vadd.f32 0.0, %v4039
      %v4041 = vpop.f32.mrf.mxu0
      %v4042 = vpop.f32.mrf.mxu0
      %v4043 = vadd.f32 0.0, %v4042
      %v4044 = vpop.f32.mrf.mxu0
      %4045 = vmatprep.mubr.bf16.mxu0 0
      %4046 = vmatmul.mubr.bf16.gmra.mxu0 %v3928
      %v4047 = vpop.f32.mrf.mxu0
      %v4048 = vadd.f32 0.0, %v4047
      %v4049 = vpop.f32.mrf.mxu0
      %v4050 = vpop.f32.mrf.mxu0
      %v4051 = vadd.f32 0.0, %v4050
      %v4052 = vpop.f32.mrf.mxu0
      %4053 = vmatprep.mubr.bf16.mxu0 0
      %4054 = vmatmul.mubr.bf16.gmra.mxu0 %v3931
      %v4055 = vpop.f32.mrf.mxu0
      %v4056 = vadd.f32 0.0, %v4055
      %v4057 = vpop.f32.mrf.mxu0
      %v4058 = vpop.f32.mrf.mxu0
      %v4059 = vadd.f32 0.0, %v4058
      %v4060 = vpop.f32.mrf.mxu0
      %4061 = vmatprep.mubr.bf16.mxu0 0
      %4062 = vmatmul.mubr.bf16.gmra.mxu0 %v3934
      %v4063 = vpop.f32.mrf.mxu0
      %v4064 = vadd.f32 0.0, %v4063
      %v4065 = vpop.f32.mrf.mxu0
      %v4066 = vpop.f32.mrf.mxu0
      %v4067 = vadd.f32 0.0, %v4066
      %v4068 = vpop.f32.mrf.mxu0
      %4069 = vmatprep.mubr.bf16.mxu0 0
      %4070 = vmatmul.mubr.bf16.gmra.mxu0 %v3937
      %v4071 = vpop.f32.mrf.mxu0
      %v4072 = vadd.f32 0.0, %v4071
      %v4073 = vpop.f32.mrf.mxu0
      %v4074 = vpop.f32.mrf.mxu0
      %v4075 = vadd.f32 0.0, %v4074
      %v4076 = vpop.f32.mrf.mxu0
      %4077 = vmatprep.mubr.bf16.mxu0 0
      %4078 = vmatmul.mubr.bf16.gmra.mxu0 %v3940
      %v4079 = vpop.f32.mrf.mxu0
      %v4080 = vadd.f32 0.0, %v4079
      %v4081 = vpop.f32.mrf.mxu0
      %v4082 = vpop.f32.mrf.mxu0
      %v4083 = vadd.f32 0.0, %v4082
      %v4084 = vpop.f32.mrf.mxu0
      %4085 = vmatprep.mubr.bf16.mxu0 0
      %4086 = vmatmul.mubr.bf16.gmra.mxu0 %v3943
      %v4087 = vpop.f32.mrf.mxu0
      %v4088 = vadd.f32 0.0, %v4087
      %v4089 = vpop.f32.mrf.mxu0
      %v4090 = vpop.f32.mrf.mxu0
      %v4091 = vadd.f32 0.0, %v4090
      %v4092 = vpop.f32.mrf.mxu0
      %4093 = vmatprep.mubr.bf16.mxu0 0
      %4094 = vmatmul.mubr.bf16.gmra.mxu0 %v3946
      %v4095 = vpop.f32.mrf.mxu0
      %v4096 = vadd.f32 0.0, %v4095
      %v4097 = vpop.f32.mrf.mxu0
      %v4098 = vpop.f32.mrf.mxu0
      %v4099 = vadd.f32 0.0, %v4098
      %v4100 = vpop.f32.mrf.mxu0
      %4101 = vmatprep.mubr.bf16.mxu0 0
      %4102 = vmatmul.mubr.bf16.gmra.mxu0 %v3949
      %v4103 = vpop.f32.mrf.mxu0
      %v4104 = vadd.f32 0.0, %v4103
      %v4105 = vpop.f32.mrf.mxu0
      %v4106 = vpop.f32.mrf.mxu0
      %v4107 = vadd.f32 0.0, %v4106
      %v4108 = vpop.f32.mrf.mxu0
      %4109 = vmatprep.mubr.bf16.mxu0 0
      %4110 = vmatmul.mubr.bf16.gmra.mxu0 %v3952
      %v4111 = vpop.f32.mrf.mxu0
      %v4112 = vadd.f32 0.0, %v4111
      %v4113 = vpop.f32.mrf.mxu0
      %v4114 = vpop.f32.mrf.mxu0
      %v4115 = vadd.f32 0.0, %v4114
      %v4116 = vpop.f32.mrf.mxu0
      %4117 = vdwg.mxu0
      %v4118 = vadd.f32 %v3440, %v3992
      %v4119 = vadd.f32 %v3441, %v3995
      %v4120 = vadd.f32 %v3442, %v4000
      %v4121 = vadd.f32 %v3443, %v4003
      %v4122 = vadd.f32 %v3444, %v4008
      %v4123 = vadd.f32 %v3445, %v4011
      %v4124 = vadd.f32 %v3446, %v4016
      %v4125 = vadd.f32 %v3447, %v4019
      %v4126 = vadd.f32 %v3448, %v4024
      %v4127 = vadd.f32 %v3449, %v4027
      %v4128 = vadd.f32 %v3450, %v4032
      %v4129 = vadd.f32 %v3451, %v4035
      %v4130 = vadd.f32 %v3452, %v4040
      %v4131 = vadd.f32 %v3453, %v4043
      %v4132 = vadd.f32 %v3454, %v4048
      %v4133 = vadd.f32 %v3455, %v4051
      %v4134 = vadd.f32 %v3456, %v4056
      %v4135 = vadd.f32 %v3457, %v4059
      %v4136 = vadd.f32 %v3458, %v4064
      %v4137 = vadd.f32 %v3459, %v4067
      %v4138 = vadd.f32 %v3460, %v4072
      %v4139 = vadd.f32 %v3461, %v4075
      %v4140 = vadd.f32 %v3462, %v4080
      %v4141 = vadd.f32 %v3463, %v4083
      %v4142 = vadd.f32 %v3464, %v4088
      %v4143 = vadd.f32 %v3465, %v4091
      %v4144 = vadd.f32 %v3466, %v4096
      %v4145 = vadd.f32 %v3467, %v4099
      %v4146 = vadd.f32 %v3468, %v4104
      %v4147 = vadd.f32 %v3469, %v4107
      %v4148 = vadd.f32 %v3470, %v4112
      %v4149 = vadd.f32 %v3471, %v4115
      %v4166 = vrot.slane %v3098, 5
      %v4167 = vrot.slane %v4166, 4
      %v4168 = vrot.slane %v3099, 5
      %v4169 = vsel %vm1209, %v4167, %v4168
      %v4170 = vrot.slane %v4168, 4
      %v4171 = vrot.slane %v3100, 5
      %v4172 = vsel %vm1209, %v4170, %v4171
      %v4173 = vrot.slane %v3101, 5
      %v4174 = vrot.slane %v4173, 4
      %v4175 = vrot.slane %v3102, 5
      %v4176 = vsel %vm1209, %v4174, %v4175
      %v4177 = vrot.slane %v4175, 4
      %v4178 = vrot.slane %v3103, 5
      %v4179 = vsel %vm1209, %v4177, %v4178
      %v4180 = vrot.slane %v3104, 5
      %v4181 = vrot.slane %v4180, 4
      %v4182 = vrot.slane %v3105, 5
      %v4183 = vsel %vm1209, %v4181, %v4182
      %v4184 = vrot.slane %v4182, 4
      %v4185 = vrot.slane %v3106, 5
      %v4186 = vsel %vm1209, %v4184, %v4185
      %v4187 = vrot.slane %v3107, 5
      %v4188 = vrot.slane %v4187, 4
      %v4189 = vrot.slane %v3108, 5
      %v4190 = vsel %vm1209, %v4188, %v4189
      %v4191 = vrot.slane %v4189, 4
      %v4192 = vrot.slane %v3109, 5
      %v4193 = vsel %vm1209, %v4191, %v4192
      %v4194 = vrot.slane %v3110, 5
      %v4195 = vrot.slane %v4194, 4
      %v4196 = vrot.slane %v3111, 5
      %v4197 = vsel %vm1209, %v4195, %v4196
      %v4198 = vrot.slane %v4196, 4
      %v4199 = vrot.slane %v3112, 5
      %v4200 = vsel %vm1209, %v4198, %v4199
      %v4201 = vrot.slane %v3113, 5
      %v4202 = vrot.slane %v4201, 4
      %v4203 = vrot.slane %v3114, 5
      %v4204 = vsel %vm1209, %v4202, %v4203
      %v4205 = vrot.slane %v4203, 4
      %v4206 = vrot.slane %v3115, 5
      %v4207 = vsel %vm1209, %v4205, %v4206
      %v4208 = vrot.slane %v3116, 5
      %v4209 = vrot.slane %v4208, 4
      %v4210 = vrot.slane %v3117, 5
      %v4211 = vsel %vm1209, %v4209, %v4210
      %v4212 = vrot.slane %v4210, 4
      %v4213 = vrot.slane %v3118, 5
      %v4214 = vsel %vm1209, %v4212, %v4213
      %v4215 = vrot.slane %v3119, 5
      %v4216 = vrot.slane %v4215, 4
      %v4217 = vrot.slane %v3120, 5
      %v4218 = vsel %vm1209, %v4216, %v4217
      %v4219 = vrot.slane %v4217, 4
      %v4220 = vrot.slane %v3121, 5
      %v4221 = vsel %vm1209, %v4219, %v4220
      %v4222 = vrot.slane %v3122, 5
      %v4223 = vrot.slane %v4222, 4
      %v4224 = vrot.slane %v3123, 5
      %v4225 = vsel %vm1209, %v4223, %v4224
      %v4226 = vrot.slane %v4224, 4
      %v4227 = vrot.slane %v3124, 5
      %v4228 = vsel %vm1209, %v4226, %v4227
      %v4229 = vrot.slane %v3125, 5
      %v4230 = vrot.slane %v4229, 4
      %v4231 = vrot.slane %v3126, 5
      %v4232 = vsel %vm1209, %v4230, %v4231
      %v4233 = vrot.slane %v4231, 4
      %v4234 = vrot.slane %v3127, 5
      %v4235 = vsel %vm1209, %v4233, %v4234
      %v4236 = vrot.slane %v3128, 5
      %v4237 = vrot.slane %v4236, 4
      %v4238 = vrot.slane %v3129, 5
      %v4239 = vsel %vm1209, %v4237, %v4238
      %v4240 = vrot.slane %v4238, 4
      %v4241 = vrot.slane %v3130, 5
      %v4242 = vsel %vm1209, %v4240, %v4241
      %v4243 = vrot.slane %v3131, 5
      %v4244 = vrot.slane %v4243, 4
      %v4245 = vrot.slane %v3132, 5
      %v4246 = vsel %vm1209, %v4244, %v4245
      %v4247 = vrot.slane %v4245, 4
      %v4248 = vrot.slane %v3133, 5
      %v4249 = vsel %vm1209, %v4247, %v4248
      %v4250 = vrot.slane %v3134, 5
      %v4251 = vrot.slane %v4250, 4
      %v4252 = vrot.slane %v3135, 5
      %v4253 = vsel %vm1209, %v4251, %v4252
      %v4254 = vrot.slane %v4252, 4
      %v4255 = vrot.slane %v3136, 5
      %v4256 = vsel %vm1209, %v4254, %v4255
      %v4257 = vrot.slane %v3137, 5
      %v4258 = vrot.slane %v4257, 4
      %v4259 = vrot.slane %v3138, 5
      %v4260 = vsel %vm1209, %v4258, %v4259
      %v4261 = vrot.slane %v4259, 4
      %v4262 = vrot.slane %v3139, 5
      %v4263 = vsel %vm1209, %v4261, %v4262
      %v4264 = vrot.slane %v3140, 5
      %v4265 = vrot.slane %v4264, 4
      %v4266 = vrot.slane %v3141, 5
      %v4267 = vsel %vm1209, %v4265, %v4266
      %v4268 = vrot.slane %v4266, 4
      %v4269 = vrot.slane %v3142, 5
      %v4270 = vsel %vm1209, %v4268, %v4269
      %v4271 = vrot.slane %v3143, 5
      %v4272 = vrot.slane %v4271, 4
      %v4273 = vrot.slane %v3144, 5
      %v4274 = vsel %vm1209, %v4272, %v4273
      %v4275 = vrot.slane %v4273, 4
      %v4276 = vrot.slane %v3145, 5
      %v4277 = vsel %vm1209, %v4275, %v4276
      %s4278 = scalar_lea.vmem %s1, 16
      %v4279 = vld [vmem:[%s4278] sm:$0x3]
      %v4280 = vunpack.c.l.b16 %v4169
      %v4281 = vunpack.c.l.b16 %v4172
      %v4282 = vunpack.c.l.b16 %v4176
      %v4283 = vunpack.c.l.b16 %v4179
      %v4284 = vunpack.c.l.b16 %v4183
      %v4285 = vunpack.c.l.b16 %v4186
      %v4286 = vunpack.c.l.b16 %v4190
      %v4287 = vunpack.c.l.b16 %v4193
      %v4288 = vunpack.c.l.b16 %v4197
      %v4289 = vunpack.c.l.b16 %v4200
      %v4290 = vunpack.c.l.b16 %v4204
      %v4291 = vunpack.c.l.b16 %v4207
      %v4292 = vunpack.c.l.b16 %v4211
      %v4293 = vunpack.c.l.b16 %v4214
      %v4294 = vunpack.c.l.b16 %v4218
      %v4295 = vunpack.c.l.b16 %v4221
      %v4296 = vunpack.c.l.b16 %v4225
      %v4297 = vunpack.c.l.b16 %v4228
      %v4298 = vunpack.c.l.b16 %v4232
      %v4299 = vunpack.c.l.b16 %v4235
      %v4300 = vunpack.c.l.b16 %v4239
      %v4301 = vunpack.c.l.b16 %v4242
      %v4302 = vunpack.c.l.b16 %v4246
      %v4303 = vunpack.c.l.b16 %v4249
      %v4304 = vunpack.c.l.b16 %v4253
      %v4305 = vunpack.c.l.b16 %v4256
      %v4306 = vunpack.c.l.b16 %v4260
      %v4307 = vunpack.c.l.b16 %v4263
      %v4308 = vunpack.c.l.b16 %v4267
      %v4309 = vunpack.c.l.b16 %v4270
      %v4310 = vunpack.c.l.b16 %v4274
      %v4311 = vunpack.c.l.b16 %v4277
      %v4312 = vpack.c.b16 %v4281, %v4280
      %v4313 = vpack.c.b16 %v4283, %v4282
      %v4314 = vpack.c.b16 %v4285, %v4284
      %v4315 = vpack.c.b16 %v4287, %v4286
      %v4316 = vpack.c.b16 %v4289, %v4288
      %v4317 = vpack.c.b16 %v4291, %v4290
      %v4318 = vpack.c.b16 %v4293, %v4292
      %v4319 = vpack.c.b16 %v4295, %v4294
      %v4320 = vpack.c.b16 %v4297, %v4296
      %v4321 = vpack.c.b16 %v4299, %v4298
      %v4322 = vpack.c.b16 %v4301, %v4300
      %v4323 = vpack.c.b16 %v4303, %v4302
      %v4324 = vpack.c.b16 %v4305, %v4304
      %v4325 = vpack.c.b16 %v4307, %v4306
      %v4326 = vpack.c.b16 %v4309, %v4308
      %v4327 = vpack.c.b16 %v4311, %v4310
      %v4329 = vsel %vm685, %v4312, 0
      %v4332 = vsel %vm685, %v4313, 0
      %v4335 = vsel %vm685, %v4314, 0
      %v4338 = vsel %vm685, %v4315, 0
      %v4341 = vsel %vm685, %v4316, 0
      %v4344 = vsel %vm685, %v4317, 0
      %v4347 = vsel %vm685, %v4318, 0
      %v4350 = vsel %vm685, %v4319, 0
      %v4353 = vsel %vm685, %v4320, 0
      %v4356 = vsel %vm685, %v4321, 0
      %v4359 = vsel %vm685, %v4322, 0
      %v4362 = vsel %vm685, %v4323, 0
      %v4365 = vsel %vm685, %v4324, 0
      %v4368 = vsel %vm685, %v4325, 0
      %v4371 = vsel %vm685, %v4326, 0
      %v4374 = vsel %vm685, %v4327, 0
      %v4377 = vsel %vm734, %v4279, 0
      %4379 = vmatprep.subr.bf16.mxu0 0
      %4380 = vmatpush1.bf16.msra.mxu0 0
      %4381 = vmatprep.subr.bf16.mxu0 0
      %4382 = vmatpush1.bf16.msra.mxu0 0
      %4383 = vmatprep.subr.bf16.mxu0 0
      %4384 = vmatpush1.bf16.msra.mxu0 0
      %4385 = vmatprep.subr.bf16.mxu0 0
      %4386 = vmatpush1.bf16.msra.mxu0 0
      %4387 = vmatprep.subr.bf16.mxu0 0
      %4388 = vmatpush1.bf16.msra.mxu0 0
      %4389 = vmatprep.subr.bf16.mxu0 0
      %4390 = vmatpush1.bf16.msra.mxu0 0
      %4391 = vmatprep.subr.bf16.mxu0 0
      %4392 = vmatpush1.bf16.msra.mxu0 0
      %4393 = vmatprep.subr.bf16.mxu0 0
      %4394 = vmatpush1.bf16.msra.mxu0 %v4377
      %4395 = vmatprep.subr.bf16.mxu0 0
      %4396 = vmatpush2.bf16.msra.mxu0 0
      %4397 = vmatprep.subr.bf16.mxu0 0
      %4398 = vmatpush2.bf16.msra.mxu0 0
      %4399 = vmatprep.subr.bf16.mxu0 0
      %4400 = vmatpush2.bf16.msra.mxu0 0
      %4401 = vmatprep.subr.bf16.mxu0 0
      %4402 = vmatpush2.bf16.msra.mxu0 0
      %4403 = vmatprep.subr.bf16.mxu0 0
      %4404 = vmatpush2.bf16.msra.mxu0 0
      %4405 = vmatprep.subr.bf16.mxu0 0
      %4406 = vmatpush2.bf16.msra.mxu0 0
      %4407 = vmatprep.subr.bf16.mxu0 0
      %4408 = vmatpush2.bf16.msra.mxu0 0
      %4409 = vmatprep.subr.bf16.mxu0 0
      %4410 = vmatpush2.bf16.msra.mxu0 0
      %4411 = vmatprep.mubr.bf16.mxu0 0
      %4412 = vmatmul.mubr.bf16.gmra.mxu0 %v4329
      %v4413 = vpop.f32.mrf.mxu0
      %v4414 = vadd.f32 0.0, %v4413
      %v4415 = vpop.f32.mrf.mxu0
      %v4416 = vpop.f32.mrf.mxu0
      %v4417 = vadd.f32 0.0, %v4416
      %v4418 = vpop.f32.mrf.mxu0
      %4419 = vmatprep.mubr.bf16.mxu0 0
      %4420 = vmatmul.mubr.bf16.gmra.mxu0 %v4332
      %v4421 = vpop.f32.mrf.mxu0
      %v4422 = vadd.f32 0.0, %v4421
      %v4423 = vpop.f32.mrf.mxu0
      %v4424 = vpop.f32.mrf.mxu0
      %v4425 = vadd.f32 0.0, %v4424
      %v4426 = vpop.f32.mrf.mxu0
      %4427 = vmatprep.mubr.bf16.mxu0 0
      %4428 = vmatmul.mubr.bf16.gmra.mxu0 %v4335
      %v4429 = vpop.f32.mrf.mxu0
      %v4430 = vadd.f32 0.0, %v4429
      %v4431 = vpop.f32.mrf.mxu0
      %v4432 = vpop.f32.mrf.mxu0
      %v4433 = vadd.f32 0.0, %v4432
      %v4434 = vpop.f32.mrf.mxu0
      %4435 = vmatprep.mubr.bf16.mxu0 0
      %4436 = vmatmul.mubr.bf16.gmra.mxu0 %v4338
      %v4437 = vpop.f32.mrf.mxu0
      %v4438 = vadd.f32 0.0, %v4437
      %v4439 = vpop.f32.mrf.mxu0
      %v4440 = vpop.f32.mrf.mxu0
      %v4441 = vadd.f32 0.0, %v4440
      %v4442 = vpop.f32.mrf.mxu0
      %4443 = vmatprep.mubr.bf16.mxu0 0
      %4444 = vmatmul.mubr.bf16.gmra.mxu0 %v4341
      %v4445 = vpop.f32.mrf.mxu0
      %v4446 = vadd.f32 0.0, %v4445
      %v4447 = vpop.f32.mrf.mxu0
      %v4448 = vpop.f32.mrf.mxu0
      %v4449 = vadd.f32 0.0, %v4448
      %v4450 = vpop.f32.mrf.mxu0
      %4451 = vmatprep.mubr.bf16.mxu0 0
      %4452 = vmatmul.mubr.bf16.gmra.mxu0 %v4344
      %v4453 = vpop.f32.mrf.mxu0
      %v4454 = vadd.f32 0.0, %v4453
      %v4455 = vpop.f32.mrf.mxu0
      %v4456 = vpop.f32.mrf.mxu0
      %v4457 = vadd.f32 0.0, %v4456
      %v4458 = vpop.f32.mrf.mxu0
      %4459 = vmatprep.mubr.bf16.mxu0 0
      %4460 = vmatmul.mubr.bf16.gmra.mxu0 %v4347
      %v4461 = vpop.f32.mrf.mxu0
      %v4462 = vadd.f32 0.0, %v4461
      %v4463 = vpop.f32.mrf.mxu0
      %v4464 = vpop.f32.mrf.mxu0
      %v4465 = vadd.f32 0.0, %v4464
      %v4466 = vpop.f32.mrf.mxu0
      %4467 = vmatprep.mubr.bf16.mxu0 0
      %4468 = vmatmul.mubr.bf16.gmra.mxu0 %v4350
      %v4469 = vpop.f32.mrf.mxu0
      %v4470 = vadd.f32 0.0, %v4469
      %v4471 = vpop.f32.mrf.mxu0
      %v4472 = vpop.f32.mrf.mxu0
      %v4473 = vadd.f32 0.0, %v4472
      %v4474 = vpop.f32.mrf.mxu0
      %4475 = vmatprep.mubr.bf16.mxu0 0
      %4476 = vmatmul.mubr.bf16.gmra.mxu0 %v4353
      %v4477 = vpop.f32.mrf.mxu0
      %v4478 = vadd.f32 0.0, %v4477
      %v4479 = vpop.f32.mrf.mxu0
      %v4480 = vpop.f32.mrf.mxu0
      %v4481 = vadd.f32 0.0, %v4480
      %v4482 = vpop.f32.mrf.mxu0
      %4483 = vmatprep.mubr.bf16.mxu0 0
      %4484 = vmatmul.mubr.bf16.gmra.mxu0 %v4356
      %v4485 = vpop.f32.mrf.mxu0
      %v4486 = vadd.f32 0.0, %v4485
      %v4487 = vpop.f32.mrf.mxu0
      %v4488 = vpop.f32.mrf.mxu0
      %v4489 = vadd.f32 0.0, %v4488
      %v4490 = vpop.f32.mrf.mxu0
      %4491 = vmatprep.mubr.bf16.mxu0 0
      %4492 = vmatmul.mubr.bf16.gmra.mxu0 %v4359
      %v4493 = vpop.f32.mrf.mxu0
      %v4494 = vadd.f32 0.0, %v4493
      %v4495 = vpop.f32.mrf.mxu0
      %v4496 = vpop.f32.mrf.mxu0
      %v4497 = vadd.f32 0.0, %v4496
      %v4498 = vpop.f32.mrf.mxu0
      %4499 = vmatprep.mubr.bf16.mxu0 0
      %4500 = vmatmul.mubr.bf16.gmra.mxu0 %v4362
      %v4501 = vpop.f32.mrf.mxu0
      %v4502 = vadd.f32 0.0, %v4501
      %v4503 = vpop.f32.mrf.mxu0
      %v4504 = vpop.f32.mrf.mxu0
      %v4505 = vadd.f32 0.0, %v4504
      %v4506 = vpop.f32.mrf.mxu0
      %4507 = vmatprep.mubr.bf16.mxu0 0
      %4508 = vmatmul.mubr.bf16.gmra.mxu0 %v4365
      %v4509 = vpop.f32.mrf.mxu0
      %v4510 = vadd.f32 0.0, %v4509
      %v4511 = vpop.f32.mrf.mxu0
      %v4512 = vpop.f32.mrf.mxu0
      %v4513 = vadd.f32 0.0, %v4512
      %v4514 = vpop.f32.mrf.mxu0
      %4515 = vmatprep.mubr.bf16.mxu0 0
      %4516 = vmatmul.mubr.bf16.gmra.mxu0 %v4368
      %v4517 = vpop.f32.mrf.mxu0
      %v4518 = vadd.f32 0.0, %v4517
      %v4519 = vpop.f32.mrf.mxu0
      %v4520 = vpop.f32.mrf.mxu0
      %v4521 = vadd.f32 0.0, %v4520
      %v4522 = vpop.f32.mrf.mxu0
      %4523 = vmatprep.mubr.bf16.mxu0 0
      %4524 = vmatmul.mubr.bf16.gmra.mxu0 %v4371
      %v4525 = vpop.f32.mrf.mxu0
      %v4526 = vadd.f32 0.0, %v4525
      %v4527 = vpop.f32.mrf.mxu0
      %v4528 = vpop.f32.mrf.mxu0
      %v4529 = vadd.f32 0.0, %v4528
      %v4530 = vpop.f32.mrf.mxu0
      %4531 = vmatprep.mubr.bf16.mxu0 0
      %4532 = vmatmul.mubr.bf16.gmra.mxu0 %v4374
      %v4533 = vpop.f32.mrf.mxu0
      %v4534 = vadd.f32 0.0, %v4533
      %v4535 = vpop.f32.mrf.mxu0
      %v4536 = vpop.f32.mrf.mxu0
      %v4537 = vadd.f32 0.0, %v4536
      %v4538 = vpop.f32.mrf.mxu0
      %4539 = vdwg.mxu0
      %v4540 = vadd.f32 %v4118, %v4414
      %v4541 = vadd.f32 %v4119, %v4417
      %v4542 = vadd.f32 %v4120, %v4422
      %v4543 = vadd.f32 %v4121, %v4425
      %v4544 = vadd.f32 %v4122, %v4430
      %v4545 = vadd.f32 %v4123, %v4433
      %v4546 = vadd.f32 %v4124, %v4438
      %v4547 = vadd.f32 %v4125, %v4441
      %v4548 = vadd.f32 %v4126, %v4446
      %v4549 = vadd.f32 %v4127, %v4449
      %v4550 = vadd.f32 %v4128, %v4454
      %v4551 = vadd.f32 %v4129, %v4457
      %v4552 = vadd.f32 %v4130, %v4462
      %v4553 = vadd.f32 %v4131, %v4465
      %v4554 = vadd.f32 %v4132, %v4470
      %v4555 = vadd.f32 %v4133, %v4473
      %v4556 = vadd.f32 %v4134, %v4478
      %v4557 = vadd.f32 %v4135, %v4481
      %v4558 = vadd.f32 %v4136, %v4486
      %v4559 = vadd.f32 %v4137, %v4489
      %v4560 = vadd.f32 %v4138, %v4494
      %v4561 = vadd.f32 %v4139, %v4497
      %v4562 = vadd.f32 %v4140, %v4502
      %v4563 = vadd.f32 %v4141, %v4505
      %v4564 = vadd.f32 %v4142, %v4510
      %v4565 = vadd.f32 %v4143, %v4513
      %v4566 = vadd.f32 %v4144, %v4518
      %v4567 = vadd.f32 %v4145, %v4521
      %v4568 = vadd.f32 %v4146, %v4526
      %v4569 = vadd.f32 %v4147, %v4529
      %v4570 = vadd.f32 %v4148, %v4534
      %v4571 = vadd.f32 %v4149, %v4537
      %v4572 = vld [vmem:[%s2] sm:$0x1]
      %v4574 = vlaneseq
      %v4575 = vshrl.u32 %v4574, 7
      %v4576 = vsub.s32 0, %v4575
      %v4577 = vrot.slane %v4572, %v4576
      %v4579 = vadd.f32 %v4540, %v4577
      %v4580 = vadd.f32 %v4541, %v4577
      %v4581 = vadd.f32 %v4542, %v4577
      %v4582 = vadd.f32 %v4543, %v4577
      %v4583 = vadd.f32 %v4544, %v4577
      %v4584 = vadd.f32 %v4545, %v4577
      %v4585 = vadd.f32 %v4546, %v4577
      %v4586 = vadd.f32 %v4547, %v4577
      %v4587 = vadd.f32 %v4548, %v4577
      %v4588 = vadd.f32 %v4549, %v4577
      %v4589 = vadd.f32 %v4550, %v4577
      %v4590 = vadd.f32 %v4551, %v4577
      %v4591 = vadd.f32 %v4552, %v4577
      %v4592 = vadd.f32 %v4553, %v4577
      %v4593 = vadd.f32 %v4554, %v4577
      %v4594 = vadd.f32 %v4555, %v4577
      %v4595 = vadd.f32 %v4556, %v4577
      %v4596 = vadd.f32 %v4557, %v4577
      %v4597 = vadd.f32 %v4558, %v4577
      %v4598 = vadd.f32 %v4559, %v4577
      %v4599 = vadd.f32 %v4560, %v4577
      %v4600 = vadd.f32 %v4561, %v4577
      %v4601 = vadd.f32 %v4562, %v4577
      %v4602 = vadd.f32 %v4563, %v4577
      %v4603 = vadd.f32 %v4564, %v4577
      %v4604 = vadd.f32 %v4565, %v4577
      %v4605 = vadd.f32 %v4566, %v4577
      %v4606 = vadd.f32 %v4567, %v4577
      %v4607 = vadd.f32 %v4568, %v4577
      %v4608 = vadd.f32 %v4569, %v4577
      %v4609 = vadd.f32 %v4570, %v4577
      %v4610 = vadd.f32 %v4571, %v4577
      %v4611 = vpack.c.bf16 %v4580, %v4579
      %v4612 = vpack.c.bf16 %v4582, %v4581
      %v4613 = vpack.c.bf16 %v4584, %v4583
      %v4614 = vpack.c.bf16 %v4586, %v4585
      %v4615 = vpack.c.bf16 %v4588, %v4587
      %v4616 = vpack.c.bf16 %v4590, %v4589
      %v4617 = vpack.c.bf16 %v4592, %v4591
      %v4618 = vpack.c.bf16 %v4594, %v4593
      %v4619 = vpack.c.bf16 %v4596, %v4595
      %v4620 = vpack.c.bf16 %v4598, %v4597
      %v4621 = vpack.c.bf16 %v4600, %v4599
      %v4622 = vpack.c.bf16 %v4602, %v4601
      %v4623 = vpack.c.bf16 %v4604, %v4603
      %v4624 = vpack.c.bf16 %v4606, %v4605
      %v4625 = vpack.c.bf16 %v4608, %v4607
      %v4626 = vpack.c.bf16 %v4610, %v4609
      %v4643 = vunpack.c.l.b16 %v4611
      %v4644 = vunpack.c.h.b16 %v4611
      %v4645 = vunpack.c.l.b16 %v4612
      %v4646 = vunpack.c.h.b16 %v4612
      %v4647 = vunpack.c.l.b16 %v4613
      %v4648 = vunpack.c.h.b16 %v4613
      %v4649 = vunpack.c.l.b16 %v4614
      %v4650 = vunpack.c.h.b16 %v4614
      %v4651 = vunpack.c.l.b16 %v4615
      %v4652 = vunpack.c.h.b16 %v4615
      %v4653 = vunpack.c.l.b16 %v4616
      %v4654 = vunpack.c.h.b16 %v4616
      %v4655 = vunpack.c.l.b16 %v4617
      %v4656 = vunpack.c.h.b16 %v4617
      %v4657 = vunpack.c.l.b16 %v4618
      %v4658 = vunpack.c.h.b16 %v4618
      %v4659 = vunpack.c.l.b16 %v4619
      %v4660 = vunpack.c.h.b16 %v4619
      %v4661 = vunpack.c.l.b16 %v4620
      %v4662 = vunpack.c.h.b16 %v4620
      %v4663 = vunpack.c.l.b16 %v4621
      %v4664 = vunpack.c.h.b16 %v4621
      %v4665 = vunpack.c.l.b16 %v4622
      %v4666 = vunpack.c.h.b16 %v4622
      %v4667 = vunpack.c.l.b16 %v4623
      %v4668 = vunpack.c.h.b16 %v4623
      %v4669 = vunpack.c.l.b16 %v4624
      %v4670 = vunpack.c.h.b16 %v4624
      %v4671 = vunpack.c.l.b16 %v4625
      %v4672 = vunpack.c.h.b16 %v4625
      %v4673 = vunpack.c.l.b16 %v4626
      %v4674 = vunpack.c.h.b16 %v4626
      %v4675 = vpack.c.b16 %v4643, %v4643
      %v4676 = vpack.c.b16 %v4644, %v4644
      %v4677 = vpack.c.b16 %v4645, %v4645
      %v4678 = vpack.c.b16 %v4646, %v4646
      %v4679 = vpack.c.b16 %v4647, %v4647
      %v4680 = vpack.c.b16 %v4648, %v4648
      %v4681 = vpack.c.b16 %v4649, %v4649
      %v4682 = vpack.c.b16 %v4650, %v4650
      %v4683 = vpack.c.b16 %v4651, %v4651
      %v4684 = vpack.c.b16 %v4652, %v4652
      %v4685 = vpack.c.b16 %v4653, %v4653
      %v4686 = vpack.c.b16 %v4654, %v4654
      %v4687 = vpack.c.b16 %v4655, %v4655
      %v4688 = vpack.c.b16 %v4656, %v4656
      %v4689 = vpack.c.b16 %v4657, %v4657
      %v4690 = vpack.c.b16 %v4658, %v4658
      %v4691 = vpack.c.b16 %v4659, %v4659
      %v4692 = vpack.c.b16 %v4660, %v4660
      %v4693 = vpack.c.b16 %v4661, %v4661
      %v4694 = vpack.c.b16 %v4662, %v4662
      %v4695 = vpack.c.b16 %v4663, %v4663
      %v4696 = vpack.c.b16 %v4664, %v4664
      %v4697 = vpack.c.b16 %v4665, %v4665
      %v4698 = vpack.c.b16 %v4666, %v4666
      %v4699 = vpack.c.b16 %v4667, %v4667
      %v4700 = vpack.c.b16 %v4668, %v4668
      %v4701 = vpack.c.b16 %v4669, %v4669
      %v4702 = vpack.c.b16 %v4670, %v4670
      %v4703 = vpack.c.b16 %v4671, %v4671
      %v4704 = vpack.c.b16 %v4672, %v4672
      %v4705 = vpack.c.b16 %v4673, %v4673
      %v4706 = vpack.c.b16 %v4674, %v4674
      %vm4739 = vcmask 125952
      %4740 = vst.msk [vmem:[%s192] sm:$0xf] %vm4739, %v4675
      %4741 = vst.msk [vmem:[%s192 + $0x4] sm:$0xf] %vm4739, %v4676
      %4742 = vst.msk [vmem:[%s192 + $0x8] sm:$0xf] %vm4739, %v4677
      %4743 = vst.msk [vmem:[%s192 + $0xc] sm:$0xf] %vm4739, %v4678
      %4744 = vst.msk [vmem:[%s192 + $0x10] sm:$0xf] %vm4739, %v4679
      %4745 = vst.msk [vmem:[%s192 + $0x14] sm:$0xf] %vm4739, %v4680
      %4746 = vst.msk [vmem:[%s192 + $0x18] sm:$0xf] %vm4739, %v4681
      %4747 = vst.msk [vmem:[%s192 + $0x1c] sm:$0xf] %vm4739, %v4682
      %4748 = vst.msk [vmem:[%s192 + $0x20] sm:$0xf] %vm4739, %v4683
      %4749 = vst.msk [vmem:[%s192 + $0x24] sm:$0xf] %vm4739, %v4684
      %4750 = vst.msk [vmem:[%s192 + $0x28] sm:$0xf] %vm4739, %v4685
      %4751 = vst.msk [vmem:[%s192 + $0x2c] sm:$0xf] %vm4739, %v4686
      %4752 = vst.msk [vmem:[%s192 + $0x30] sm:$0xf] %vm4739, %v4687
      %4753 = vst.msk [vmem:[%s192 + $0x34] sm:$0xf] %vm4739, %v4688
      %4754 = vst.msk [vmem:[%s192 + $0x38] sm:$0xf] %vm4739, %v4689
      %4755 = vst.msk [vmem:[%s192 + $0x3c] sm:$0xf] %vm4739, %v4690
      %4756 = vst.msk [vmem:[%s192 + $0x40] sm:$0xf] %vm4739, %v4691
      %4757 = vst.msk [vmem:[%s192 + $0x44] sm:$0xf] %vm4739, %v4692
      %4758 = vst.msk [vmem:[%s192 + $0x48] sm:$0xf] %vm4739, %v4693
      %4759 = vst.msk [vmem:[%s192 + $0x4c] sm:$0xf] %vm4739, %v4694
      %4760 = vst.msk [vmem:[%s192 + $0x50] sm:$0xf] %vm4739, %v4695
      %4761 = vst.msk [vmem:[%s192 + $0x54] sm:$0xf] %vm4739, %v4696
      %4762 = vst.msk [vmem:[%s192 + $0x58] sm:$0xf] %vm4739, %v4697
      %4763 = vst.msk [vmem:[%s192 + $0x5c] sm:$0xf] %vm4739, %v4698
      %4764 = vst.msk [vmem:[%s192 + $0x60] sm:$0xf] %vm4739, %v4699
      %4765 = vst.msk [vmem:[%s192 + $0x64] sm:$0xf] %vm4739, %v4700
      %4766 = vst.msk [vmem:[%s192 + $0x68] sm:$0xf] %vm4739, %v4701
      %4767 = vst.msk [vmem:[%s192 + $0x6c] sm:$0xf] %vm4739, %v4702
      %4768 = vst.msk [vmem:[%s192 + $0x70] sm:$0xf] %vm4739, %v4703
      %4769 = vst.msk [vmem:[%s192 + $0x74] sm:$0xf] %vm4739, %v4704
      %4770 = vst.msk [vmem:[%s192 + $0x78] sm:$0xf] %vm4739, %v4705
      %4771 = vst.msk [vmem:[%s192 + $0x7c] sm:$0xf] %vm4739, %v4706
      %s4772 = smul.u32 32, %s19
      %p4773 = scmp.lt.s32.totalorder %s18, 1
      %s4774 = scalar_select %p4773, %s18, 1
      %p4775 = scmp.lt.s32.totalorder %s4772, 31
      %s4776 = scalar_select %p4775, %s4772, 31
      %s4777 = smul.addr %s4774, 32
      %s4778 = sadd.s32 %s4776, %s4777
      %s4779 = smul.addr %s4778, 4
      %s4780 = scalar_lea.vmem %s3, %s4779
      // Predicated region
      $region33: #{upsample_forward.1} parent=31 // pred_check
        %p4781 = pneg %p114
      $region34: #{upsample_forward.1} parent=31 // pred_check_branch
        %4783 = sbr.rel (%p4781) target = $region36
      $region35: #{upsample_forward.1} parent=31 // pred_region
        %s4784 = smul.u32 32, %s19
      $region36: #{upsample_forward.1} parent=31 // pred_fallthru
        _
    $region32: #{upsample_forward.1} parent=5 // pred_fallthru
      _
    %p4785 = scmp.le.s32.totalorder 2, %s9
    // Predicated region
    $region37: #{upsample_forward.1} parent=5 // pred_check
      %p4786 = pneg %p4785
    $region38: #{upsample_forward.1} parent=5 // pred_check_branch
      %4788 = sbr.rel (%p4786) target = $region40
    $region39: #{upsample_forward.1} parent=5 // pred_region
      %s4789 = ssub.s32 %s9, 2
      // Predicated region
      $region41: #{upsample_forward.1} parent=39 // pred_check
        %p4790 = pneg %p120
      $region42: #{upsample_forward.1} parent=39 // pred_check_branch
        %4792 = sbr.rel (%p4790) target = $region44
      $region43: #{upsample_forward.1} parent=39 // pred_region
        %s4793 = smul.u32 32, %s21
        %p4794 = scmp.lt.s32.totalorder %s20, 1
        %s4795 = scalar_select %p4794, %s20, 1
        %p4796 = scmp.lt.s32.totalorder %s4793, 31
        %s4797 = scalar_select %p4796, %s4793, 31
        %s4798 = smul.addr %s4795, 32
        %s4799 = sadd.s32 %s4797, %s4798
        %s4800 = smul.addr %s4799, 4
        %s4801 = scalar_lea.vmem %s3, %s4800
      $region44: #{upsample_forward.1} parent=39 // pred_fallthru
        _
    $region40: #{upsample_forward.1} parent=5 // pred_fallthru
      _
  $region6: #{upsample_forward.1} parent=0 // loop_footer
    %s13 = sadd.s32 1, %s9
  $region7: #{upsample_forward.1} parent=0 // loop_footer_branch
    %8 = sbr.rel target = $region3
  $region8: #{upsample_forward.1} parent=0 // loop_exit
    _

</llo_original>
